<compile_context>
chip_gen: v6e
topology: v6e:2x2x1
jax: 0.10.0
libtpu: 0.0.40
codegen_flags: <defaults>
</compile_context>

<pallas_src>
import functools

import jax
import jax.numpy as jnp
from jax.experimental import pallas as pl
from jax.experimental.pallas import tpu as pltpu

QBITS = 8
QMAX = float(2 ** (QBITS - 1) - 1)   # 127
EPS = 1e-8
LANE = 128


# ------------------------------ small helpers ------------------------------ #

def _round_up(x, m):
    return ((x + m - 1) // m) * m


def _pick_tile(n, target):
    """Largest divisor of n that is <= target (falls back to 1)."""
    t = min(n, target)
    while n % t:
        t -= 1
    return t


def _pick_row_tile(m, target=1024):
    """Divisor of m, multiple of 8, <= target; else the whole extent."""
    for cand in range(min(m, target), 7, -1):
        if m % cand == 0 and cand % 8 == 0:
            return cand
    return m


# ----------------------------- Pallas kernels ------------------------------ #

def _make_conv_kernel(kh, kw, th, wo, cin, coutp):
    """Fused: input fake-quant -> direct conv (tap loop on MXU, bf16 codes,
    f32 accum) -> per-channel rescale + bias -> ReLU -> tile max."""
    hb = th + kh - 1  # input rows needed for th output rows (stride 1)

    def kernel(s_ref, x_ref, w_ref, scale_ref, bias_ref, y_ref, mx_ref):
        inv_s = s_ref[0]                                   # 1 / act_scale (SMEM)
        row0 = pl.multiple_of(pl.program_id(1) * th, th)
        xb = x_ref[0, pl.ds(row0, hb), :, :]               # (hb, Wp, cin) f32
        # Input QuantAct: integer codes (exact in bf16 since |q| <= 127).
        q = jnp.clip(jnp.round(xb * inv_s), -QMAX, QMAX)
        acc = jnp.zeros((th * wo, coutp), jnp.float32)
        for i in range(kh):
            for j in range(kw):
                win = q[i:i + th, j:j + wo, :].reshape(th * wo, cin)
                acc = acc + jnp.dot(win.astype(jnp.bfloat16),
                                    w_ref[i * kw + j],
                                    preferred_element_type=jnp.float32)
        # Dequant (act_scale * per-channel w_sf), bias, ReLU.
        y = jnp.maximum(acc * scale_ref[...] + bias_ref[...], 0.0)
        y_ref[...] = y.reshape(1, th, wo, coutp)
        # Fused post-ReLU max (per-lane partial, reduced to a scalar in JAX).
        mx_ref[...] = jnp.broadcast_to(jnp.max(y, axis=0), (1, 1, 8, coutp))

    return kernel


def conv_bn_relu_max(x_nhwc, act_scale, w_codes, ch_scale, bias, kh, kw, pad,
                     cout_p):
    """One Q_InceptConv layer (QuantAct-on-input + QuantBnConv2d + ReLU).

    x_nhwc:   (N, H, W, Cin) f32, un-quantized activation.
    act_scale: scalar f32, QuantAct scale for this layer's input.
    w_codes:  (kh*kw, Cin, cout_p) bf16 integer weight codes.
    ch_scale: (cout_p,) f32 = act_scale * per-channel weight scale.
    bias:     (cout_p,) f32 folded BN bias.
    Returns (y, y_max): y is (N, Ho, Wo, cout_p) f32 post-ReLU (un-quantized).
    """
    N, H, W, Cin = x_nhwc.shape
    ph, pw = pad
    if ph or pw:
        x_nhwc = jnp.pad(x_nhwc, ((0, 0), (ph, ph), (pw, pw), (0, 0)))
    Hp, Wp = H + 2 * ph, W + 2 * pw
    Ho, Wo = Hp - kh + 1, Wp - kw + 1

    th = _pick_tile(Ho, 32)
    n_t = Ho // th
    inv_s = (1.0 / act_scale).reshape(1).astype(jnp.float32)

    flops = 2 * N * Ho * Wo * kh * kw * Cin * cout_p
    bytes_acc = 4 * (N * Hp * Wp * Cin + N * Ho * Wo * cout_p) + 2 * w_codes.size

    kernel = _make_conv_kernel(kh, kw, th, Wo, Cin, cout_p)
    y, mx = pl.pallas_call(
        kernel,
        out_shape=(jax.ShapeDtypeStruct((N, Ho, Wo, cout_p), jnp.float32),
                   jax.ShapeDtypeStruct((N, n_t, 8, cout_p), jnp.float32)),
        grid=(N, n_t),
        in_specs=[
            pl.BlockSpec(memory_space=pltpu.MemorySpace.SMEM),       # 1/act_scale
            pl.BlockSpec((1, Hp, Wp, Cin), lambda n, t: (n, 0, 0, 0)),  # resident per n
            pl.BlockSpec((kh * kw, Cin, cout_p), lambda n, t: (0, 0, 0)),
            pl.BlockSpec((1, cout_p), lambda n, t: (0, 0)),
            pl.BlockSpec((1, cout_p), lambda n, t: (0, 0)),
        ],
        out_specs=(
            pl.BlockSpec((1, th, Wo, cout_p), lambda n, t: (n, t, 0, 0)),
            pl.BlockSpec((1, 1, 8, cout_p), lambda n, t: (n, t, 0, 0)),
        ),
        compiler_params=pltpu.CompilerParams(
            dimension_semantics=("parallel", "parallel")),
        cost_estimate=pl.CostEstimate(flops=int(flops), transcendentals=0,
                                      bytes_accessed=int(bytes_acc)),
    )(inv_s, x_nhwc, w_codes, ch_scale.reshape(1, cout_p).astype(jnp.float32),
      bias.reshape(1, cout_p).astype(jnp.float32))
    return y, jnp.max(mx)


def _quant_kernel(s_ref, x_ref, o_ref):
    # s_ref: (2,) SMEM = [scale, 1/scale]; x_ref/o_ref: (TB, C) lane-dense.
    q = jnp.clip(jnp.round(x_ref[...] * s_ref[1]), -QMAX, QMAX)
    o_ref[...] = q * s_ref[0]


def fake_quant_lane_dense(x2d, scale):
    """Symmetric 8-bit fake quantization of a lane-dense (M, C) tensor."""
    M, C = x2d.shape
    tb = _pick_row_tile(M, 1024)
    sv = jnp.stack([scale, 1.0 / scale]).astype(jnp.float32)
    return pl.pallas_call(
        _quant_kernel,
        out_shape=jax.ShapeDtypeStruct((M, C), jnp.float32),
        grid=(M // tb,),
        in_specs=[pl.BlockSpec(memory_space=pltpu.MemorySpace.SMEM),
                  pl.BlockSpec((tb, C), lambda i: (i, 0))],
        out_specs=pl.BlockSpec((tb, C), lambda i: (i, 0)),
        compiler_params=pltpu.CompilerParams(
            dimension_semantics=("parallel",)),
    )(sv, x2d)


# ------------------------------- glue (JAX) -------------------------------- #

def fold_bn(w, gamma, beta, mean, var, eps=1e-5):
    """Fold BatchNorm into conv weights. w: (Cout, Cin, kh, kw)."""
    s = gamma / jnp.sqrt(var + eps)
    return w * s[:, None, None, None], beta - mean * s


def prep_layer(layer, cin_carried):
    """Fold BN, per-out-channel quantize to integer codes, lane-pad channels.

    Returns (w_codes (kh*kw, cin_carried, cout_pad) bf16, w_sf (cout_pad,),
             bias (cout_pad,), cout, cout_pad, kh, kw).
    """
    w_fold, b_fold = fold_bn(layer["w"], layer["gamma"], layer["beta"],
                             layer["mean"], layer["var"])
    cout, cin, kh, kw = w_fold.shape
    mx = jnp.max(jnp.abs(w_fold.reshape(cout, -1)), axis=1)
    w_sf = jnp.maximum(mx / QMAX, EPS)                       # (cout,)
    codes = jnp.clip(jnp.round(w_fold / w_sf[:, None, None, None]), -QMAX, QMAX)
    # (Cout, Cin, kh, kw) -> (kh, kw, Cin, Cout) -> (kh*kw, Cin, Cout)
    codes = jnp.transpose(codes, (2, 3, 1, 0)).reshape(kh * kw, cin, cout)
    cout_pad = _round_up(cout, LANE)
    codes = jnp.pad(codes, ((0, 0), (0, cin_carried - cin), (0, cout_pad - cout)))
    w_sf_p = jnp.pad(w_sf, (0, cout_pad - cout))
    bias_p = jnp.pad(b_fold, (0, cout_pad - cout))
    return (codes.astype(jnp.bfloat16), w_sf_p.astype(jnp.float32),
            bias_p.astype(jnp.float32), cout, cout_pad, kh, kw)


def init_params(key, in_channels, out_channels_list, kernel_size_list):
    """Deterministic synthetic parameters (conv weight + BN stats per layer)."""
    params = []
    cin = in_channels
    for cout, ks in zip(out_channels_list, kernel_size_list):
        kh, kw = (ks, ks) if isinstance(ks, int) else ks
        key, k_w, k_g, k_b, k_m = jax.random.split(key, 5)
        params.append(dict(
            w=0.1 * jax.random.normal(k_w, (cout, cin, kh, kw), jnp.float32),
            gamma=1.0 + 0.05 * jax.random.normal(k_g, (cout,), jnp.float32),
            beta=0.05 * jax.random.normal(k_b, (cout,), jnp.float32),
            mean=0.05 * jax.random.normal(k_m, (cout,), jnp.float32),
            var=jnp.ones((cout,), jnp.float32),
        ))
        cin = cout
    return params


def q_conv_seq_branch(x_nchw, params, strides_list, padding_list):
    """Forward of Q_ConvSeqBranch. Returns (y_nchw, a_sf)."""
    x = jnp.transpose(x_nchw, (0, 2, 3, 1)).astype(jnp.float32)   # NHWC

    # q_input_act scale (tiny scalar reduction stays in plain JAX).
    a_sf = jnp.maximum(jnp.max(jnp.abs(x)) / QMAX, EPS)

    cur_c = x.shape[-1]        # channels carried (includes lane padding later)
    cout = cur_c
    for layer, stride, pad in zip(params, strides_list, padding_list):
        sh, sw = stride
        # TODO(synk): strided (>1) convolutions are not implemented in the
        # fused direct-conv Pallas kernel (not used by this branch config).
        assert sh == 1 and sw == 1, "only stride 1 supported in Pallas path"
        codes, w_sf_p, bias_p, cout, cout_pad, kh, kw = prep_layer(layer, cur_c)
        ch_scale = a_sf * w_sf_p                      # fold act scale into epilogue
        y, y_max = conv_bn_relu_max(x, a_sf, codes, ch_scale, bias_p,
                                    kh, kw, pad, cout_pad)
        a_sf = jnp.maximum(y_max / QMAX, EPS)         # next QuantAct scale
        x = y                                         # f32, lane-padded channels
        cur_c = cout_pad

    # Final QuantAct: one lane-dense fake-quant pass over the last activation.
    N, Ho, Wo, Cp = x.shape
    xq = fake_quant_lane_dense(x.reshape(N * Ho * Wo, Cp), a_sf)
    xq = xq.reshape(N, Ho, Wo, Cp)[..., :cout]        # drop channel padding
    return jnp.transpose(xq, (0, 3, 1, 2)), a_sf


# ---------------------------------- main ----------------------------------- #

if __name__ == "__main__":
    # Branch config analogous to an InceptionV3 ConvSeqBranch:
    # two convs: 1x1 (pad 0) then 3x3 (pad 1), stride 1.
    out_channels_list = (8, 12)
    kernel_size_list = (1, 3)
    strides_list = ((1, 1), (1, 1))
    padding_list = ((0, 0), (1, 1))

    N, Cin, H, W = 2, 4, 16, 16
    x = jax.random.normal(jax.random.PRNGKey(0), (N, Cin, H, W), jnp.float32)
    params = init_params(jax.random.PRNGKey(1), Cin,
                         out_channels_list, kernel_size_list)

    fwd = jax.jit(functools.partial(q_conv_seq_branch,
                                    strides_list=strides_list,
                                    padding_list=padding_list))
    y, a_sf = fwd(x, params)
    jax.block_until_ready(y)
    jax.block_until_ready(a_sf)

    assert y.shape == (N, out_channels_list[-1], H, W), y.shape
    print("KERNEL_OK")
</pallas_src>

<mosaic_0001>
module attributes {stable_mosaic.version = 11 : i64} {
  func.func @kernel(%arg0: i32, %arg1: i32, %arg2: memref<1xf32, #tpu.memory_space<smem>>, %arg3: memref<1x16x16x4xf32, #tpu.memory_space<vmem>>, %arg4: memref<1x4x128xbf16, #tpu.memory_space<vmem>>, %arg5: memref<1x128xf32, #tpu.memory_space<vmem>>, %arg6: memref<1x128xf32, #tpu.memory_space<vmem>>, %arg7: memref<1x16x16x128xf32, #tpu.memory_space<vmem>>, %arg8: memref<1x1x8x128xf32, #tpu.memory_space<vmem>>) attributes {dimension_semantics = [#tpu.dimension_semantics<parallel>, #tpu.dimension_semantics<parallel>], iteration_bounds = array<i64: 2, 1>, scalar_prefetch = 0 : i64, scratch_operands = 0 : i64, tpu.core_type = #tpu.core_type<tc>, window_params = [{transform_indices = @transform_0, window_bounds = array<i64: 1>}, {transform_indices = @transform_1, window_bounds = array<i64: 1, 16, 16, 4>}, {pipeline_mode = #tpu.pipeline_mode<synchronous>, transform_indices = @transform_2, window_bounds = array<i64: 1, 4, 128>}, {pipeline_mode = #tpu.pipeline_mode<synchronous>, transform_indices = @transform_3, window_bounds = array<i64: 1, 128>}, {pipeline_mode = #tpu.pipeline_mode<synchronous>, transform_indices = @transform_4, window_bounds = array<i64: 1, 128>}, {transform_indices = @transform_5, window_bounds = array<i64: 1, 16, 16, 128>}, {transform_indices = @transform_6, window_bounds = array<i64: 1, 1, 8, 128>}]} {
    %c0 = arith.constant 0 : index
    %0 = memref.load %arg2[%c0] : memref<1xf32, #tpu.memory_space<smem>>
    %c16_i32 = arith.constant 16 : i32
    %1 = arith.muli %arg1, %c16_i32 : i32
    %2 = tpu.assume_multiple %1, 16 : i32
    %c0_0 = arith.constant 0 : index
    %3 = arith.index_cast %2 : i32 to index
    %c0_1 = arith.constant 0 : index
    %c0_2 = arith.constant 0 : index
    %4 = vector.load %arg3[%c0_0, %3, %c0_1, %c0_2] : memref<1x16x16x4xf32, #tpu.memory_space<vmem>>, vector<1x16x16x4xf32>
    %5 = vector.shape_cast %4 : vector<1x16x16x4xf32> to vector<16x16x4xf32>
    %6 = vector.broadcast %0 : f32 to vector<16x16x4xf32>
    %7 = arith.mulf %5, %6 : vector<16x16x4xf32>
    %8 = math.roundeven %7 : vector<16x16x4xf32>
    %cst = arith.constant -1.270000e+02 : f32
    %cst_3 = arith.constant 1.270000e+02 : f32
    %9 = vector.broadcast %cst : f32 to vector<16x16x4xf32>
    %10 = arith.maximumf %9, %8 : vector<16x16x4xf32>
    %11 = vector.broadcast %cst_3 : f32 to vector<16x16x4xf32>
    %12 = arith.minimumf %11, %10 : vector<16x16x4xf32>
    %cst_4 = arith.constant 0.000000e+00 : f32
    %13 = vector.broadcast %cst_4 : f32 to vector<256x128xf32>
    %14 = vector.shape_cast %12 : vector<16x16x4xf32> to vector<256x4xf32>
    %15 = arith.truncf %14 : vector<256x4xf32> to vector<256x4xbf16>
    %c0_5 = arith.constant 0 : index
    %c0_6 = arith.constant 0 : index
    %c0_7 = arith.constant 0 : index
    %16 = vector.load %arg4[%c0_5, %c0_6, %c0_7] : memref<1x4x128xbf16, #tpu.memory_space<vmem>>, vector<1x4x128xbf16>
    %17 = vector.shape_cast %16 : vector<1x4x128xbf16> to vector<4x128xbf16>
    %cst_8 = arith.constant dense<0.000000e+00> : vector<256x128xf32>
    %18 = tpu.matmul %15, %17, %cst_8 {dimension_numbers = #tpu.dot_dimension_numbers<[1], [0], [0], [1], [0, 0, 1, 1], [], []>} : vector<256x4xbf16>, vector<4x128xbf16>, vector<256x128xf32> -> vector<256x128xf32>
    %19 = arith.addf %13, %18 : vector<256x128xf32>
    %c0_9 = arith.constant 0 : index
    %c0_10 = arith.constant 0 : index
    %20 = vector.load %arg5[%c0_9, %c0_10] : memref<1x128xf32, #tpu.memory_space<vmem>>, vector<1x128xf32>
    %21 = vector.broadcast %20 : vector<1x128xf32> to vector<256x128xf32>
    %22 = arith.mulf %19, %21 : vector<256x128xf32>
    %c0_11 = arith.constant 0 : index
    %c0_12 = arith.constant 0 : index
    %23 = vector.load %arg6[%c0_11, %c0_12] : memref<1x128xf32, #tpu.memory_space<vmem>>, vector<1x128xf32>
    %24 = vector.broadcast %23 : vector<1x128xf32> to vector<256x128xf32>
    %25 = arith.addf %22, %24 : vector<256x128xf32>
    %cst_13 = arith.constant 0.000000e+00 : f32
    %26 = vector.broadcast %cst_13 : f32 to vector<256x128xf32>
    %27 = arith.maximumf %25, %26 : vector<256x128xf32>
    %28 = vector.shape_cast %27 : vector<256x128xf32> to vector<1x16x16x128xf32>
    %c0_14 = arith.constant 0 : index
    %c0_15 = arith.constant 0 : index
    %c0_16 = arith.constant 0 : index
    %c0_17 = arith.constant 0 : index
    %29 = vector.load %arg7[%c0_14, %c0_15, %c0_16, %c0_17] : memref<1x16x16x128xf32, #tpu.memory_space<vmem>>, vector<1x16x16x128xf32>
    tpu.vector_store %arg7[%c0_14, %c0_15, %c0_16, %c0_17], %28 {strides = array<i32>} : memref<1x16x16x128xf32, #tpu.memory_space<vmem>>, vector<1x16x16x128xf32>,
    %cst_18 = arith.constant dense<0xFF800000> : vector<128xf32>
    %30 = vector.multi_reduction <maximumf>, %27, %cst_18 [0] : vector<256x128xf32> to vector<128xf32>
    %31 = vector.shape_cast %30 : vector<128xf32> to vector<1x1x1x128xf32>
    %32 = vector.broadcast %31 : vector<1x1x1x128xf32> to vector<1x1x8x128xf32>
    %c0_19 = arith.constant 0 : index
    %c0_20 = arith.constant 0 : index
    %c0_21 = arith.constant 0 : index
    %c0_22 = arith.constant 0 : index
    %33 = vector.load %arg8[%c0_19, %c0_20, %c0_21, %c0_22] : memref<1x1x8x128xf32, #tpu.memory_space<vmem>>, vector<1x1x8x128xf32>
    tpu.vector_store %arg8[%c0_19, %c0_20, %c0_21, %c0_22], %32 {strides = array<i32>} : memref<1x1x8x128xf32, #tpu.memory_space<vmem>>, vector<1x1x8x128xf32>,
    return
  }
  func.func @transform_0(%arg0: i32, %arg1: i32) -> i32 {
    %c0_i32 = arith.constant 0 : i32
    %c0_i32_0 = arith.constant 0 : i32
    return %c0_i32 : i32
  }
  func.func @transform_1(%arg0: i32, %arg1: i32) -> (i32, i32, i32, i32) {
    %c0_i32 = arith.constant 0 : i32
    %c0_i32_0 = arith.constant 0 : i32
    %c0_i32_1 = arith.constant 0 : i32
    %c0_i32_2 = arith.constant 0 : i32
    return %arg0, %c0_i32, %c0_i32_0, %c0_i32_1 : i32, i32, i32, i32
  }
  func.func @transform_2(%arg0: i32, %arg1: i32) -> (i32, i32, i32) {
    %c0_i32 = arith.constant 0 : i32
    %c0_i32_0 = arith.constant 0 : i32
    %c0_i32_1 = arith.constant 0 : i32
    %c0_i32_2 = arith.constant 0 : i32
    return %c0_i32, %c0_i32_0, %c0_i32_1 : i32, i32, i32
  }
  func.func @transform_3(%arg0: i32, %arg1: i32) -> (i32, i32) {
    %c0_i32 = arith.constant 0 : i32
    %c0_i32_0 = arith.constant 0 : i32
    %c0_i32_1 = arith.constant 0 : i32
    return %c0_i32, %c0_i32_0 : i32, i32
  }
  func.func @transform_4(%arg0: i32, %arg1: i32) -> (i32, i32) {
    %c0_i32 = arith.constant 0 : i32
    %c0_i32_0 = arith.constant 0 : i32
    %c0_i32_1 = arith.constant 0 : i32
    return %c0_i32, %c0_i32_0 : i32, i32
  }
  func.func @transform_5(%arg0: i32, %arg1: i32) -> (i32, i32, i32, i32) {
    %c0_i32 = arith.constant 0 : i32
    %c0_i32_0 = arith.constant 0 : i32
    %c0_i32_1 = arith.constant 0 : i32
    return %arg0, %arg1, %c0_i32, %c0_i32_0 : i32, i32, i32, i32
  }
  func.func @transform_6(%arg0: i32, %arg1: i32) -> (i32, i32, i32, i32) {
    %c0_i32 = arith.constant 0 : i32
    %c0_i32_0 = arith.constant 0 : i32
    %c0_i32_1 = arith.constant 0 : i32
    return %arg0, %arg1, %c0_i32, %c0_i32_0 : i32, i32, i32, i32
  }
}

module attributes {stable_mosaic.version = 11 : i64} {
  func.func @kernel(%arg0: i32, %arg1: i32, %arg2: memref<1xf32, #tpu.memory_space<smem>>, %arg3: memref<1x18x18x128xf32, #tpu.memory_space<vmem>>, %arg4: memref<9x128x128xbf16, #tpu.memory_space<vmem>>, %arg5: memref<1x128xf32, #tpu.memory_space<vmem>>, %arg6: memref<1x128xf32, #tpu.memory_space<vmem>>, %arg7: memref<1x16x16x128xf32, #tpu.memory_space<vmem>>, %arg8: memref<1x1x8x128xf32, #tpu.memory_space<vmem>>) attributes {dimension_semantics = [#tpu.dimension_semantics<parallel>, #tpu.dimension_semantics<parallel>], iteration_bounds = array<i64: 2, 1>, scalar_prefetch = 0 : i64, scratch_operands = 0 : i64, tpu.core_type = #tpu.core_type<tc>, window_params = [{transform_indices = @transform_0, window_bounds = array<i64: 1>}, {transform_indices = @transform_1, window_bounds = array<i64: 1, 18, 18, 128>}, {pipeline_mode = #tpu.pipeline_mode<synchronous>, transform_indices = @transform_2, window_bounds = array<i64: 9, 128, 128>}, {pipeline_mode = #tpu.pipeline_mode<synchronous>, transform_indices = @transform_3, window_bounds = array<i64: 1, 128>}, {pipeline_mode = #tpu.pipeline_mode<synchronous>, transform_indices = @transform_4, window_bounds = array<i64: 1, 128>}, {transform_indices = @transform_5, window_bounds = array<i64: 1, 16, 16, 128>}, {transform_indices = @transform_6, window_bounds = array<i64: 1, 1, 8, 128>}]} {
    %c0 = arith.constant 0 : index
    %0 = memref.load %arg2[%c0] : memref<1xf32, #tpu.memory_space<smem>>
    %c16_i32 = arith.constant 16 : i32
    %1 = arith.muli %arg1, %c16_i32 : i32
    %2 = tpu.assume_multiple %1, 16 : i32
    %c0_0 = arith.constant 0 : index
    %3 = arith.index_cast %2 : i32 to index
    %c0_1 = arith.constant 0 : index
    %c0_2 = arith.constant 0 : index
    %4 = vector.load %arg3[%c0_0, %3, %c0_1, %c0_2] : memref<1x18x18x128xf32, #tpu.memory_space<vmem>>, vector<1x18x18x128xf32>
    %5 = vector.shape_cast %4 : vector<1x18x18x128xf32> to vector<18x18x128xf32>
    %6 = vector.broadcast %0 : f32 to vector<18x18x128xf32>
    %7 = arith.mulf %5, %6 : vector<18x18x128xf32>
    %8 = math.roundeven %7 : vector<18x18x128xf32>
    %cst = arith.constant -1.270000e+02 : f32
    %cst_3 = arith.constant 1.270000e+02 : f32
    %9 = vector.broadcast %cst : f32 to vector<18x18x128xf32>
    %10 = arith.maximumf %9, %8 : vector<18x18x128xf32>
    %11 = vector.broadcast %cst_3 : f32 to vector<18x18x128xf32>
    %12 = arith.minimumf %11, %10 : vector<18x18x128xf32>
    %cst_4 = arith.constant 0.000000e+00 : f32
    %13 = vector.broadcast %cst_4 : f32 to vector<256x128xf32>
    %14 = vector.extract_strided_slice %12 {offsets = [0, 0, 0], sizes = [16, 16, 128], strides = [1, 1, 1]} : vector<18x18x128xf32> to vector<16x16x128xf32>
    %15 = vector.shape_cast %14 : vector<16x16x128xf32> to vector<256x128xf32>
    %16 = arith.truncf %15 : vector<256x128xf32> to vector<256x128xbf16>
    %c0_5 = arith.constant 0 : index
    %c0_6 = arith.constant 0 : index
    %c0_7 = arith.constant 0 : index
    %17 = vector.load %arg4[%c0_5, %c0_6, %c0_7] : memref<9x128x128xbf16, #tpu.memory_space<vmem>>, vector<1x128x128xbf16>
    %18 = vector.shape_cast %17 : vector<1x128x128xbf16> to vector<128x128xbf16>
    %cst_8 = arith.constant dense<0.000000e+00> : vector<256x128xf32>
    %19 = tpu.matmul %16, %18, %cst_8 {dimension_numbers = #tpu.dot_dimension_numbers<[1], [0], [0], [1], [0, 0, 1, 1], [], []>} : vector<256x128xbf16>, vector<128x128xbf16>, vector<256x128xf32> -> vector<256x128xf32>
    %20 = arith.addf %13, %19 : vector<256x128xf32>
    %21 = vector.extract_strided_slice %12 {offsets = [0, 1, 0], sizes = [16, 16, 128], strides = [1, 1, 1]} : vector<18x18x128xf32> to vector<16x16x128xf32>
    %22 = vector.shape_cast %21 : vector<16x16x128xf32> to vector<256x128xf32>
    %23 = arith.truncf %22 : vector<256x128xf32> to vector<256x128xbf16>
    %c1 = arith.constant 1 : index
    %c0_9 = arith.constant 0 : index
    %c0_10 = arith.constant 0 : index
    %24 = vector.load %arg4[%c1, %c0_9, %c0_10] : memref<9x128x128xbf16, #tpu.memory_space<vmem>>, vector<1x128x128xbf16>
    %25 = vector.shape_cast %24 : vector<1x128x128xbf16> to vector<128x128xbf16>
    %cst_11 = arith.constant dense<0.000000e+00> : vector<256x128xf32>
    %26 = tpu.matmul %23, %25, %cst_11 {dimension_numbers = #tpu.dot_dimension_numbers<[1], [0], [0], [1], [0, 0, 1, 1], [], []>} : vector<256x128xbf16>, vector<128x128xbf16>, vector<256x128xf32> -> vector<256x128xf32>
    %27 = arith.addf %20, %26 : vector<256x128xf32>
    %28 = vector.extract_strided_slice %12 {offsets = [0, 2, 0], sizes = [16, 16, 128], strides = [1, 1, 1]} : vector<18x18x128xf32> to vector<16x16x128xf32>
    %29 = vector.shape_cast %28 : vector<16x16x128xf32> to vector<256x128xf32>
    %30 = arith.truncf %29 : vector<256x128xf32> to vector<256x128xbf16>
    %c2 = arith.constant 2 : index
    %c0_12 = arith.constant 0 : index
    %c0_13 = arith.constant 0 : index
    %31 = vector.load %arg4[%c2, %c0_12, %c0_13] : memref<9x128x128xbf16, #tpu.memory_space<vmem>>, vector<1x128x128xbf16>
    %32 = vector.shape_cast %31 : vector<1x128x128xbf16> to vector<128x128xbf16>
    %cst_14 = arith.constant dense<0.000000e+00> : vector<256x128xf32>
    %33 = tpu.matmul %30, %32, %cst_14 {dimension_numbers = #tpu.dot_dimension_numbers<[1], [0], [0], [1], [0, 0, 1, 1], [], []>} : vector<256x128xbf16>, vector<128x128xbf16>, vector<256x128xf32> -> vector<256x128xf32>
    %34 = arith.addf %27, %33 : vector<256x128xf32>
    %35 = vector.extract_strided_slice %12 {offsets = [1, 0, 0], sizes = [16, 16, 128], strides = [1, 1, 1]} : vector<18x18x128xf32> to vector<16x16x128xf32>
    %36 = vector.shape_cast %35 : vector<16x16x128xf32> to vector<256x128xf32>
    %37 = arith.truncf %36 : vector<256x128xf32> to vector<256x128xbf16>
    %c3 = arith.constant 3 : index
    %c0_15 = arith.constant 0 : index
    %c0_16 = arith.constant 0 : index
    %38 = vector.load %arg4[%c3, %c0_15, %c0_16] : memref<9x128x128xbf16, #tpu.memory_space<vmem>>, vector<1x128x128xbf16>
    %39 = vector.shape_cast %38 : vector<1x128x128xbf16> to vector<128x128xbf16>
    %cst_17 = arith.constant dense<0.000000e+00> : vector<256x128xf32>
    %40 = tpu.matmul %37, %39, %cst_17 {dimension_numbers = #tpu.dot_dimension_numbers<[1], [0], [0], [1], [0, 0, 1, 1], [], []>} : vector<256x128xbf16>, vector<128x128xbf16>, vector<256x128xf32> -> vector<256x128xf32>
    %41 = arith.addf %34, %40 : vector<256x128xf32>
    %42 = vector.extract_strided_slice %12 {offsets = [1, 1, 0], sizes = [16, 16, 128], strides = [1, 1, 1]} : vector<18x18x128xf32> to vector<16x16x128xf32>
    %43 = vector.shape_cast %42 : vector<16x16x128xf32> to vector<256x128xf32>
    %44 = arith.truncf %43 : vector<256x128xf32> to vector<256x128xbf16>
    %c4 = arith.constant 4 : index
    %c0_18 = arith.constant 0 : index
    %c0_19 = arith.constant 0 : index
    %45 = vector.load %arg4[%c4, %c0_18, %c0_19] : memref<9x128x128xbf16, #tpu.memory_space<vmem>>, vector<1x128x128xbf16>
    %46 = vector.shape_cast %45 : vector<1x128x128xbf16> to vector<128x128xbf16>
    %cst_20 = arith.constant dense<0.000000e+00> : vector<256x128xf32>
    %47 = tpu.matmul %44, %46, %cst_20 {dimension_numbers = #tpu.dot_dimension_numbers<[1], [0], [0], [1], [0, 0, 1, 1], [], []>} : vector<256x128xbf16>, vector<128x128xbf16>, vector<256x128xf32> -> vector<256x128xf32>
    %48 = arith.addf %41, %47 : vector<256x128xf32>
    %49 = vector.extract_strided_slice %12 {offsets = [1, 2, 0], sizes = [16, 16, 128], strides = [1, 1, 1]} : vector<18x18x128xf32> to vector<16x16x128xf32>
    %50 = vector.shape_cast %49 : vector<16x16x128xf32> to vector<256x128xf32>
    %51 = arith.truncf %50 : vector<256x128xf32> to vector<256x128xbf16>
    %c5 = arith.constant 5 : index
    %c0_21 = arith.constant 0 : index
    %c0_22 = arith.constant 0 : index
    %52 = vector.load %arg4[%c5, %c0_21, %c0_22] : memref<9x128x128xbf16, #tpu.memory_space<vmem>>, vector<1x128x128xbf16>
    %53 = vector.shape_cast %52 : vector<1x128x128xbf16> to vector<128x128xbf16>
    %cst_23 = arith.constant dense<0.000000e+00> : vector<256x128xf32>
    %54 = tpu.matmul %51, %53, %cst_23 {dimension_numbers = #tpu.dot_dimension_numbers<[1], [0], [0], [1], [0, 0, 1, 1], [], []>} : vector<256x128xbf16>, vector<128x128xbf16>, vector<256x128xf32> -> vector<256x128xf32>
    %55 = arith.addf %48, %54 : vector<256x128xf32>
    %56 = vector.extract_strided_slice %12 {offsets = [2, 0, 0], sizes = [16, 16, 128], strides = [1, 1, 1]} : vector<18x18x128xf32> to vector<16x16x128xf32>
    %57 = vector.shape_cast %56 : vector<16x16x128xf32> to vector<256x128xf32>
    %58 = arith.truncf %57 : vector<256x128xf32> to vector<256x128xbf16>
    %c6 = arith.constant 6 : index
    %c0_24 = arith.constant 0 : index
    %c0_25 = arith.constant 0 : index
    %59 = vector.load %arg4[%c6, %c0_24, %c0_25] : memref<9x128x128xbf16, #tpu.memory_space<vmem>>, vector<1x128x128xbf16>
    %60 = vector.shape_cast %59 : vector<1x128x128xbf16> to vector<128x128xbf16>
    %cst_26 = arith.constant dense<0.000000e+00> : vector<256x128xf32>
    %61 = tpu.matmul %58, %60, %cst_26 {dimension_numbers = #tpu.dot_dimension_numbers<[1], [0], [0], [1], [0, 0, 1, 1], [], []>} : vector<256x128xbf16>, vector<128x128xbf16>, vector<256x128xf32> -> vector<256x128xf32>
    %62 = arith.addf %55, %61 : vector<256x128xf32>
    %63 = vector.extract_strided_slice %12 {offsets = [2, 1, 0], sizes = [16, 16, 128], strides = [1, 1, 1]} : vector<18x18x128xf32> to vector<16x16x128xf32>
    %64 = vector.shape_cast %63 : vector<16x16x128xf32> to vector<256x128xf32>
    %65 = arith.truncf %64 : vector<256x128xf32> to vector<256x128xbf16>
    %c7 = arith.constant 7 : index
    %c0_27 = arith.constant 0 : index
    %c0_28 = arith.constant 0 : index
    %66 = vector.load %arg4[%c7, %c0_27, %c0_28] : memref<9x128x128xbf16, #tpu.memory_space<vmem>>, vector<1x128x128xbf16>
    %67 = vector.shape_cast %66 : vector<1x128x128xbf16> to vector<128x128xbf16>
    %cst_29 = arith.constant dense<0.000000e+00> : vector<256x128xf32>
    %68 = tpu.matmul %65, %67, %cst_29 {dimension_numbers = #tpu.dot_dimension_numbers<[1], [0], [0], [1], [0, 0, 1, 1], [], []>} : vector<256x128xbf16>, vector<128x128xbf16>, vector<256x128xf32> -> vector<256x128xf32>
    %69 = arith.addf %62, %68 : vector<256x128xf32>
    %70 = vector.extract_strided_slice %12 {offsets = [2, 2, 0], sizes = [16, 16, 128], strides = [1, 1, 1]} : vector<18x18x128xf32> to vector<16x16x128xf32>
    %71 = vector.shape_cast %70 : vector<16x16x128xf32> to vector<256x128xf32>
    %72 = arith.truncf %71 : vector<256x128xf32> to vector<256x128xbf16>
    %c8 = arith.constant 8 : index
    %c0_30 = arith.constant 0 : index
    %c0_31 = arith.constant 0 : index
    %73 = vector.load %arg4[%c8, %c0_30, %c0_31] : memref<9x128x128xbf16, #tpu.memory_space<vmem>>, vector<1x128x128xbf16>
    %74 = vector.shape_cast %73 : vector<1x128x128xbf16> to vector<128x128xbf16>
    %cst_32 = arith.constant dense<0.000000e+00> : vector<256x128xf32>
    %75 = tpu.matmul %72, %74, %cst_32 {dimension_numbers = #tpu.dot_dimension_numbers<[1], [0], [0], [1], [0, 0, 1, 1], [], []>} : vector<256x128xbf16>, vector<128x128xbf16>, vector<256x128xf32> -> vector<256x128xf32>
    %76 = arith.addf %69, %75 : vector<256x128xf32>
    %c0_33 = arith.constant 0 : index
    %c0_34 = arith.constant 0 : index
    %77 = vector.load %arg5[%c0_33, %c0_34] : memref<1x128xf32, #tpu.memory_space<vmem>>, vector<1x128xf32>
    %78 = vector.broadcast %77 : vector<1x128xf32> to vector<256x128xf32>
    %79 = arith.mulf %76, %78 : vector<256x128xf32>
    %c0_35 = arith.constant 0 : index
    %c0_36 = arith.constant 0 : index
    %80 = vector.load %arg6[%c0_35, %c0_36] : memref<1x128xf32, #tpu.memory_space<vmem>>, vector<1x128xf32>
    %81 = vector.broadcast %80 : vector<1x128xf32> to vector<256x128xf32>
    %82 = arith.addf %79, %81 : vector<256x128xf32>
    %cst_37 = arith.constant 0.000000e+00 : f32
    %83 = vector.broadcast %cst_37 : f32 to vector<256x128xf32>
    %84 = arith.maximumf %82, %83 : vector<256x128xf32>
    %85 = vector.shape_cast %84 : vector<256x128xf32> to vector<1x16x16x128xf32>
    %c0_38 = arith.constant 0 : index
    %c0_39 = arith.constant 0 : index
    %c0_40 = arith.constant 0 : index
    %c0_41 = arith.constant 0 : index
    %86 = vector.load %arg7[%c0_38, %c0_39, %c0_40, %c0_41] : memref<1x16x16x128xf32, #tpu.memory_space<vmem>>, vector<1x16x16x128xf32>
    tpu.vector_store %arg7[%c0_38, %c0_39, %c0_40, %c0_41], %85 {strides = array<i32>} : memref<1x16x16x128xf32, #tpu.memory_space<vmem>>, vector<1x16x16x128xf32>,
    %cst_42 = arith.constant dense<0xFF800000> : vector<128xf32>
    %87 = vector.multi_reduction <maximumf>, %84, %cst_42 [0] : vector<256x128xf32> to vector<128xf32>
    %88 = vector.shape_cast %87 : vector<128xf32> to vector<1x1x1x128xf32>
    %89 = vector.broadcast %88 : vector<1x1x1x128xf32> to vector<1x1x8x128xf32>
    %c0_43 = arith.constant 0 : index
    %c0_44 = arith.constant 0 : index
    %c0_45 = arith.constant 0 : index
    %c0_46 = arith.constant 0 : index
    %90 = vector.load %arg8[%c0_43, %c0_44, %c0_45, %c0_46] : memref<1x1x8x128xf32, #tpu.memory_space<vmem>>, vector<1x1x8x128xf32>
    tpu.vector_store %arg8[%c0_43, %c0_44, %c0_45, %c0_46], %89 {strides = array<i32>} : memref<1x1x8x128xf32, #tpu.memory_space<vmem>>, vector<1x1x8x128xf32>,
    return
  }
  func.func @transform_0(%arg0: i32, %arg1: i32) -> i32 {
    %c0_i32 = arith.constant 0 : i32
    %c0_i32_0 = arith.constant 0 : i32
    return %c0_i32 : i32
  }
  func.func @transform_1(%arg0: i32, %arg1: i32) -> (i32, i32, i32, i32) {
    %c0_i32 = arith.constant 0 : i32
    %c0_i32_0 = arith.constant 0 : i32
    %c0_i32_1 = arith.constant 0 : i32
    %c0_i32_2 = arith.constant 0 : i32
    return %arg0, %c0_i32, %c0_i32_0, %c0_i32_1 : i32, i32, i32, i32
  }
  func.func @transform_2(%arg0: i32, %arg1: i32) -> (i32, i32, i32) {
    %c0_i32 = arith.constant 0 : i32
    %c0_i32_0 = arith.constant 0 : i32
    %c0_i32_1 = arith.constant 0 : i32
    %c0_i32_2 = arith.constant 0 : i32
    return %c0_i32, %c0_i32_0, %c0_i32_1 : i32, i32, i32
  }
  func.func @transform_3(%arg0: i32, %arg1: i32) -> (i32, i32) {
    %c0_i32 = arith.constant 0 : i32
    %c0_i32_0 = arith.constant 0 : i32
    %c0_i32_1 = arith.constant 0 : i32
    return %c0_i32, %c0_i32_0 : i32, i32
  }
  func.func @transform_4(%arg0: i32, %arg1: i32) -> (i32, i32) {
    %c0_i32 = arith.constant 0 : i32
    %c0_i32_0 = arith.constant 0 : i32
    %c0_i32_1 = arith.constant 0 : i32
    return %c0_i32, %c0_i32_0 : i32, i32
  }
  func.func @transform_5(%arg0: i32, %arg1: i32) -> (i32, i32, i32, i32) {
    %c0_i32 = arith.constant 0 : i32
    %c0_i32_0 = arith.constant 0 : i32
    %c0_i32_1 = arith.constant 0 : i32
    return %arg0, %arg1, %c0_i32, %c0_i32_0 : i32, i32, i32, i32
  }
  func.func @transform_6(%arg0: i32, %arg1: i32) -> (i32, i32, i32, i32) {
    %c0_i32 = arith.constant 0 : i32
    %c0_i32_0 = arith.constant 0 : i32
    %c0_i32_1 = arith.constant 0 : i32
    return %arg0, %arg1, %c0_i32, %c0_i32_0 : i32, i32, i32, i32
  }
}

module attributes {stable_mosaic.version = 11 : i64} {
  func.func @_quant_kernel(%arg0: i32, %arg1: memref<2xf32, #tpu.memory_space<smem>>, %arg2: memref<512x128xf32, #tpu.memory_space<vmem>>, %arg3: memref<512x128xf32, #tpu.memory_space<vmem>>) attributes {dimension_semantics = [#tpu.dimension_semantics<parallel>], iteration_bounds = array<i64: 1>, scalar_prefetch = 0 : i64, scratch_operands = 0 : i64, tpu.core_type = #tpu.core_type<tc>, window_params = [{transform_indices = @transform_0, window_bounds = array<i64: 2>}, {transform_indices = @transform_1, window_bounds = array<i64: 512, 128>}, {transform_indices = @transform_2, window_bounds = array<i64: 512, 128>}]} {
    %c0 = arith.constant 0 : index
    %c0_0 = arith.constant 0 : index
    %0 = vector.load %arg2[%c0, %c0_0] : memref<512x128xf32, #tpu.memory_space<vmem>>, vector<512x128xf32>
    %c1 = arith.constant 1 : index
    %1 = memref.load %arg1[%c1] : memref<2xf32, #tpu.memory_space<smem>>
    %2 = vector.broadcast %1 : f32 to vector<512x128xf32>
    %3 = arith.mulf %0, %2 : vector<512x128xf32>
    %4 = math.roundeven %3 : vector<512x128xf32>
    %cst = arith.constant -1.270000e+02 : f32
    %cst_1 = arith.constant 1.270000e+02 : f32
    %5 = vector.broadcast %cst : f32 to vector<512x128xf32>
    %6 = arith.maximumf %5, %4 : vector<512x128xf32>
    %7 = vector.broadcast %cst_1 : f32 to vector<512x128xf32>
    %8 = arith.minimumf %7, %6 : vector<512x128xf32>
    %c0_2 = arith.constant 0 : index
    %9 = memref.load %arg1[%c0_2] : memref<2xf32, #tpu.memory_space<smem>>
    %10 = vector.broadcast %9 : f32 to vector<512x128xf32>
    %11 = arith.mulf %8, %10 : vector<512x128xf32>
    %c0_3 = arith.constant 0 : index
    %c0_4 = arith.constant 0 : index
    %12 = vector.load %arg3[%c0_3, %c0_4] : memref<512x128xf32, #tpu.memory_space<vmem>>, vector<512x128xf32>
    tpu.vector_store %arg3[%c0_3, %c0_4], %11 {strides = array<i32>} : memref<512x128xf32, #tpu.memory_space<vmem>>, vector<512x128xf32>,
    return
  }
  func.func @transform_0(%arg0: i32) -> i32 {
    %c0_i32 = arith.constant 0 : i32
    %c0_i32_0 = arith.constant 0 : i32
    return %c0_i32 : i32
  }
  func.func @transform_1(%arg0: i32) -> (i32, i32) {
    %c0_i32 = arith.constant 0 : i32
    %c0_i32_0 = arith.constant 0 : i32
    return %arg0, %c0_i32 : i32, i32
  }
  func.func @transform_2(%arg0: i32) -> (i32, i32) {
    %c0_i32 = arith.constant 0 : i32
    %c0_i32_0 = arith.constant 0 : i32
    return %arg0, %c0_i32 : i32, i32
  }
}

</mosaic_0001>

<llo_original>
// kernel: q_conv_seq_branch.5
$region0: #{q_conv_seq_branch.5}
  #allocation0 [shape = 'u32[]', space=smem, size = 0x4, offset = 0x4, fixed_abs, tag = 'smem constant byte address 0x4 - core index']
  #allocation1 [shape = 'u32[144,128]{1,0:T(1,128)}', space=vmem, size = 0x12000, scoped, tag = 'internal scratch']
  %s0 = inlined_call_operand.vmem [shape: f32[2], index: 0, kind: input, shape index: {}]
  %s1 = inlined_call_operand.vmem [shape: f32[512,128], index: 1, kind: input, shape index: {}]
  %s2 = inlined_call_operand.vmem [shape: f32[512,128], index: 2, kind: output, shape index: {}]
  %s3 = sld [smem:[#allocation0]]
  $region22: #{q_conv_seq_branch.5} parent=0
    _
  %s5 = ssub.s32 1, %s3
  %s6 = scalar_select 0, %s5, %s3
  $region1: #{q_conv_seq_branch.5} parent=0
    #allocation2 [shape = 'u8[512]{0}', space=smem, size = 0x200, scoped, tag = 'input window, operand 0, single buffered']
    #allocation3 [shape = 's32[1]{0}', space=sflag, size = 0x4, scoped, tag = 'scoped memory for q_conv_seq_branch.5']
    %7 = vsyncpa [#allocation3], 0
    // Predicated region
    $region2: #{q_conv_seq_branch.5} parent=1 // pred_check
      _
    $region3: #{q_conv_seq_branch.5} parent=1 // pred_check_branch
      %9 = sbr.rel (0) target = $region5
    $region4: #{q_conv_seq_branch.5} parent=1 // pred_region
      %s11 = ssub.s32 16, 16
      %12 = vsyncadd [#allocation3], %s11
      %s14 = sshll.u32 %s0, 4
      %s15 = int_to_ptr.vmem [resolvable:$true] %s14
      %17 = dma.vmem_to_smem %s15, 16, [#allocation2], [#allocation3]
    $region5: #{q_conv_seq_branch.5} parent=1 // pred_fallthru
      _
    // Predicated region
    $region6: #{q_conv_seq_branch.5} parent=1 // pred_check
      _
    $region7: #{q_conv_seq_branch.5} parent=1 // pred_check_branch
      %19 = sbr.rel (0) target = $region9
    $region8: #{q_conv_seq_branch.5} parent=1 // pred_region
      _
    $region9: #{q_conv_seq_branch.5} parent=1 // pred_fallthru
      _
    // Predicated region
    $region10: #{q_conv_seq_branch.5} parent=1 // pred_check
      _
    $region11: #{q_conv_seq_branch.5} parent=1 // pred_check_branch
      %21 = sbr.rel (0) target = $region13
    $region12: #{q_conv_seq_branch.5} parent=1 // pred_region
      %22 = dma.done [#allocation3], 16
    $region13: #{q_conv_seq_branch.5} parent=1 // pred_fallthru
      _
    %23 = sfence
    %v24 = vld [vmem:[%s1] sm:$0xff]
    %v25 = vld [vmem:[%s1 + $0x8] sm:$0xff]
    %v26 = vld [vmem:[%s1 + $0x10] sm:$0xff]
    %v27 = vld [vmem:[%s1 + $0x18] sm:$0xff]
    %v28 = vld [vmem:[%s1 + $0x20] sm:$0xff]
    %v29 = vld [vmem:[%s1 + $0x28] sm:$0xff]
    %v30 = vld [vmem:[%s1 + $0x30] sm:$0xff]
    %v31 = vld [vmem:[%s1 + $0x38] sm:$0xff]
    %v32 = vld [vmem:[%s1 + $0x40] sm:$0xff]
    %v33 = vld [vmem:[%s1 + $0x48] sm:$0xff]
    %v34 = vld [vmem:[%s1 + $0x50] sm:$0xff]
    %v35 = vld [vmem:[%s1 + $0x58] sm:$0xff]
    %v36 = vld [vmem:[%s1 + $0x60] sm:$0xff]
    %v37 = vld [vmem:[%s1 + $0x68] sm:$0xff]
    %v38 = vld [vmem:[%s1 + $0x70] sm:$0xff]
    %v39 = vld [vmem:[%s1 + $0x78] sm:$0xff]
    %v40 = vld [vmem:[%s1 + $0x80] sm:$0xff]
    %v41 = vld [vmem:[%s1 + $0x88] sm:$0xff]
    %v42 = vld [vmem:[%s1 + $0x90] sm:$0xff]
    %v43 = vld [vmem:[%s1 + $0x98] sm:$0xff]
    %v44 = vld [vmem:[%s1 + $0xa0] sm:$0xff]
    %v45 = vld [vmem:[%s1 + $0xa8] sm:$0xff]
    %v46 = vld [vmem:[%s1 + $0xb0] sm:$0xff]
    %v47 = vld [vmem:[%s1 + $0xb8] sm:$0xff]
    %v48 = vld [vmem:[%s1 + $0xc0] sm:$0xff]
    %v49 = vld [vmem:[%s1 + $0xc8] sm:$0xff]
    %v50 = vld [vmem:[%s1 + $0xd0] sm:$0xff]
    %v51 = vld [vmem:[%s1 + $0xd8] sm:$0xff]
    %v52 = vld [vmem:[%s1 + $0xe0] sm:$0xff]
    %v53 = vld [vmem:[%s1 + $0xe8] sm:$0xff]
    %v54 = vld [vmem:[%s1 + $0xf0] sm:$0xff]
    %v55 = vld [vmem:[%s1 + $0xf8] sm:$0xff]
    %v56 = vld [vmem:[%s1 + $0x100] sm:$0xff]
    %v57 = vld [vmem:[%s1 + $0x108] sm:$0xff]
    %v58 = vld [vmem:[%s1 + $0x110] sm:$0xff]
    %v59 = vld [vmem:[%s1 + $0x118] sm:$0xff]
    %v60 = vld [vmem:[%s1 + $0x120] sm:$0xff]
    %v61 = vld [vmem:[%s1 + $0x128] sm:$0xff]
    %v62 = vld [vmem:[%s1 + $0x130] sm:$0xff]
    %v63 = vld [vmem:[%s1 + $0x138] sm:$0xff]
    %v64 = vld [vmem:[%s1 + $0x140] sm:$0xff]
    %v65 = vld [vmem:[%s1 + $0x148] sm:$0xff]
    %v66 = vld [vmem:[%s1 + $0x150] sm:$0xff]
    %v67 = vld [vmem:[%s1 + $0x158] sm:$0xff]
    %v68 = vld [vmem:[%s1 + $0x160] sm:$0xff]
    %v69 = vld [vmem:[%s1 + $0x168] sm:$0xff]
    %v70 = vld [vmem:[%s1 + $0x170] sm:$0xff]
    %v71 = vld [vmem:[%s1 + $0x178] sm:$0xff]
    %v72 = vld [vmem:[%s1 + $0x180] sm:$0xff]
    %v73 = vld [vmem:[%s1 + $0x188] sm:$0xff]
    %v74 = vld [vmem:[%s1 + $0x190] sm:$0xff]
    %v75 = vld [vmem:[%s1 + $0x198] sm:$0xff]
    %v76 = vld [vmem:[%s1 + $0x1a0] sm:$0xff]
    %v77 = vld [vmem:[%s1 + $0x1a8] sm:$0xff]
    %v78 = vld [vmem:[%s1 + $0x1b0] sm:$0xff]
    %v79 = vld [vmem:[%s1 + $0x1b8] sm:$0xff]
    %v80 = vld [vmem:[%s1 + $0x1c0] sm:$0xff]
    %v81 = vld [vmem:[%s1 + $0x1c8] sm:$0xff]
    %v82 = vld [vmem:[%s1 + $0x1d0] sm:$0xff]
    %v83 = vld [vmem:[%s1 + $0x1d8] sm:$0xff]
    %v84 = vld [vmem:[%s1 + $0x1e0] sm:$0xff]
    %v85 = vld [vmem:[%s1 + $0x1e8] sm:$0xff]
    %v86 = vld [vmem:[%s1 + $0x1f0] sm:$0xff]
    %v87 = vld [vmem:[%s1 + $0x1f8] sm:$0xff]
    %s88 = sld [smem:[#allocation2 + $0x1]]
    %v89 = vstv %s88
    %v90 = vmul.f32 %v24, %v89
    %v91 = vmul.f32 %v25, %v89
    %v92 = vmul.f32 %v26, %v89
    %v93 = vmul.f32 %v27, %v89
    %v94 = vmul.f32 %v28, %v89
    %v95 = vmul.f32 %v29, %v89
    %v96 = vmul.f32 %v30, %v89
    %v97 = vmul.f32 %v31, %v89
    %v98 = vmul.f32 %v32, %v89
    %v99 = vmul.f32 %v33, %v89
    %v100 = vmul.f32 %v34, %v89
    %v101 = vmul.f32 %v35, %v89
    %v102 = vmul.f32 %v36, %v89
    %v103 = vmul.f32 %v37, %v89
    %v104 = vmul.f32 %v38, %v89
    %v105 = vmul.f32 %v39, %v89
    %v106 = vmul.f32 %v40, %v89
    %v107 = vmul.f32 %v41, %v89
    %v108 = vmul.f32 %v42, %v89
    %v109 = vmul.f32 %v43, %v89
    %v110 = vmul.f32 %v44, %v89
    %v111 = vmul.f32 %v45, %v89
    %v112 = vmul.f32 %v46, %v89
    %v113 = vmul.f32 %v47, %v89
    %v114 = vmul.f32 %v48, %v89
    %v115 = vmul.f32 %v49, %v89
    %v116 = vmul.f32 %v50, %v89
    %v117 = vmul.f32 %v51, %v89
    %v118 = vmul.f32 %v52, %v89
    %v119 = vmul.f32 %v53, %v89
    %v120 = vmul.f32 %v54, %v89
    %v121 = vmul.f32 %v55, %v89
    %v122 = vmul.f32 %v56, %v89
    %v123 = vmul.f32 %v57, %v89
    %v124 = vmul.f32 %v58, %v89
    %v125 = vmul.f32 %v59, %v89
    %v126 = vmul.f32 %v60, %v89
    %v127 = vmul.f32 %v61, %v89
    %v128 = vmul.f32 %v62, %v89
    %v129 = vmul.f32 %v63, %v89
    %v130 = vmul.f32 %v64, %v89
    %v131 = vmul.f32 %v65, %v89
    %v132 = vmul.f32 %v66, %v89
    %v133 = vmul.f32 %v67, %v89
    %v134 = vmul.f32 %v68, %v89
    %v135 = vmul.f32 %v69, %v89
    %v136 = vmul.f32 %v70, %v89
    %v137 = vmul.f32 %v71, %v89
    %v138 = vmul.f32 %v72, %v89
    %v139 = vmul.f32 %v73, %v89
    %v140 = vmul.f32 %v74, %v89
    %v141 = vmul.f32 %v75, %v89
    %v142 = vmul.f32 %v76, %v89
    %v143 = vmul.f32 %v77, %v89
    %v144 = vmul.f32 %v78, %v89
    %v145 = vmul.f32 %v79, %v89
    %v146 = vmul.f32 %v80, %v89
    %v147 = vmul.f32 %v81, %v89
    %v148 = vmul.f32 %v82, %v89
    %v149 = vmul.f32 %v83, %v89
    %v150 = vmul.f32 %v84, %v89
    %v151 = vmul.f32 %v85, %v89
    %v152 = vmul.f32 %v86, %v89
    %v153 = vmul.f32 %v87, %v89
    %v154 = vround.ne.pseudo %v90
    %v155 = vround.ne.pseudo %v91
    %v156 = vround.ne.pseudo %v92
    %v157 = vround.ne.pseudo %v93
    %v158 = vround.ne.pseudo %v94
    %v159 = vround.ne.pseudo %v95
    %v160 = vround.ne.pseudo %v96
    %v161 = vround.ne.pseudo %v97
    %v162 = vround.ne.pseudo %v98
    %v163 = vround.ne.pseudo %v99
    %v164 = vround.ne.pseudo %v100
    %v165 = vround.ne.pseudo %v101
    %v166 = vround.ne.pseudo %v102
    %v167 = vround.ne.pseudo %v103
    %v168 = vround.ne.pseudo %v104
    %v169 = vround.ne.pseudo %v105
    %v170 = vround.ne.pseudo %v106
    %v171 = vround.ne.pseudo %v107
    %v172 = vround.ne.pseudo %v108
    %v173 = vround.ne.pseudo %v109
    %v174 = vround.ne.pseudo %v110
    %v175 = vround.ne.pseudo %v111
    %v176 = vround.ne.pseudo %v112
    %v177 = vround.ne.pseudo %v113
    %v178 = vround.ne.pseudo %v114
    %v179 = vround.ne.pseudo %v115
    %v180 = vround.ne.pseudo %v116
    %v181 = vround.ne.pseudo %v117
    %v182 = vround.ne.pseudo %v118
    %v183 = vround.ne.pseudo %v119
    %v184 = vround.ne.pseudo %v120
    %v185 = vround.ne.pseudo %v121
    %v186 = vround.ne.pseudo %v122
    %v187 = vround.ne.pseudo %v123
    %v188 = vround.ne.pseudo %v124
    %v189 = vround.ne.pseudo %v125
    %v190 = vround.ne.pseudo %v126
    %v191 = vround.ne.pseudo %v127
    %v192 = vround.ne.pseudo %v128
    %v193 = vround.ne.pseudo %v129
    %v194 = vround.ne.pseudo %v130
    %v195 = vround.ne.pseudo %v131
    %v196 = vround.ne.pseudo %v132
    %v197 = vround.ne.pseudo %v133
    %v198 = vround.ne.pseudo %v134
    %v199 = vround.ne.pseudo %v135
    %v200 = vround.ne.pseudo %v136
    %v201 = vround.ne.pseudo %v137
    %v202 = vround.ne.pseudo %v138
    %v203 = vround.ne.pseudo %v139
    %v204 = vround.ne.pseudo %v140
    %v205 = vround.ne.pseudo %v141
    %v206 = vround.ne.pseudo %v142
    %v207 = vround.ne.pseudo %v143
    %v208 = vround.ne.pseudo %v144
    %v209 = vround.ne.pseudo %v145
    %v210 = vround.ne.pseudo %v146
    %v211 = vround.ne.pseudo %v147
    %v212 = vround.ne.pseudo %v148
    %v213 = vround.ne.pseudo %v149
    %v214 = vround.ne.pseudo %v150
    %v215 = vround.ne.pseudo %v151
    %v216 = vround.ne.pseudo %v152
    %v217 = vround.ne.pseudo %v153
    %v218 = vmax.f32 %v154, -127.0
    %v219 = vmax.f32 %v155, -127.0
    %v220 = vmax.f32 %v156, -127.0
    %v221 = vmax.f32 %v157, -127.0
    %v222 = vmax.f32 %v158, -127.0
    %v223 = vmax.f32 %v159, -127.0
    %v224 = vmax.f32 %v160, -127.0
    %v225 = vmax.f32 %v161, -127.0
    %v226 = vmax.f32 %v162, -127.0
    %v227 = vmax.f32 %v163, -127.0
    %v228 = vmax.f32 %v164, -127.0
    %v229 = vmax.f32 %v165, -127.0
    %v230 = vmax.f32 %v166, -127.0
    %v231 = vmax.f32 %v167, -127.0
    %v232 = vmax.f32 %v168, -127.0
    %v233 = vmax.f32 %v169, -127.0
    %v234 = vmax.f32 %v170, -127.0
    %v235 = vmax.f32 %v171, -127.0
    %v236 = vmax.f32 %v172, -127.0
    %v237 = vmax.f32 %v173, -127.0
    %v238 = vmax.f32 %v174, -127.0
    %v239 = vmax.f32 %v175, -127.0
    %v240 = vmax.f32 %v176, -127.0
    %v241 = vmax.f32 %v177, -127.0
    %v242 = vmax.f32 %v178, -127.0
    %v243 = vmax.f32 %v179, -127.0
    %v244 = vmax.f32 %v180, -127.0
    %v245 = vmax.f32 %v181, -127.0
    %v246 = vmax.f32 %v182, -127.0
    %v247 = vmax.f32 %v183, -127.0
    %v248 = vmax.f32 %v184, -127.0
    %v249 = vmax.f32 %v185, -127.0
    %v250 = vmax.f32 %v186, -127.0
    %v251 = vmax.f32 %v187, -127.0
    %v252 = vmax.f32 %v188, -127.0
    %v253 = vmax.f32 %v189, -127.0
    %v254 = vmax.f32 %v190, -127.0
    %v255 = vmax.f32 %v191, -127.0
    %v256 = vmax.f32 %v192, -127.0
    %v257 = vmax.f32 %v193, -127.0
    %v258 = vmax.f32 %v194, -127.0
    %v259 = vmax.f32 %v195, -127.0
    %v260 = vmax.f32 %v196, -127.0
    %v261 = vmax.f32 %v197, -127.0
    %v262 = vmax.f32 %v198, -127.0
    %v263 = vmax.f32 %v199, -127.0
    %v264 = vmax.f32 %v200, -127.0
    %v265 = vmax.f32 %v201, -127.0
    %v266 = vmax.f32 %v202, -127.0
    %v267 = vmax.f32 %v203, -127.0
    %v268 = vmax.f32 %v204, -127.0
    %v269 = vmax.f32 %v205, -127.0
    %v270 = vmax.f32 %v206, -127.0
    %v271 = vmax.f32 %v207, -127.0
    %v272 = vmax.f32 %v208, -127.0
    %v273 = vmax.f32 %v209, -127.0
    %v274 = vmax.f32 %v210, -127.0
    %v275 = vmax.f32 %v211, -127.0
    %v276 = vmax.f32 %v212, -127.0
    %v277 = vmax.f32 %v213, -127.0
    %v278 = vmax.f32 %v214, -127.0
    %v279 = vmax.f32 %v215, -127.0
    %v280 = vmax.f32 %v216, -127.0
    %v281 = vmax.f32 %v217, -127.0
    %v282 = vmin.f32 %v218, 127.0
    %v283 = vmin.f32 %v219, 127.0
    %v284 = vmin.f32 %v220, 127.0
    %v285 = vmin.f32 %v221, 127.0
    %v286 = vmin.f32 %v222, 127.0
    %v287 = vmin.f32 %v223, 127.0
    %v288 = vmin.f32 %v224, 127.0
    %v289 = vmin.f32 %v225, 127.0
    %v290 = vmin.f32 %v226, 127.0
    %v291 = vmin.f32 %v227, 127.0
    %v292 = vmin.f32 %v228, 127.0
    %v293 = vmin.f32 %v229, 127.0
    %v294 = vmin.f32 %v230, 127.0
    %v295 = vmin.f32 %v231, 127.0
    %v296 = vmin.f32 %v232, 127.0
    %v297 = vmin.f32 %v233, 127.0
    %v298 = vmin.f32 %v234, 127.0
    %v299 = vmin.f32 %v235, 127.0
    %v300 = vmin.f32 %v236, 127.0
    %v301 = vmin.f32 %v237, 127.0
    %v302 = vmin.f32 %v238, 127.0
    %v303 = vmin.f32 %v239, 127.0
    %v304 = vmin.f32 %v240, 127.0
    %v305 = vmin.f32 %v241, 127.0
    %v306 = vmin.f32 %v242, 127.0
    %v307 = vmin.f32 %v243, 127.0
    %v308 = vmin.f32 %v244, 127.0
    %v309 = vmin.f32 %v245, 127.0
    %v310 = vmin.f32 %v246, 127.0
    %v311 = vmin.f32 %v247, 127.0
    %v312 = vmin.f32 %v248, 127.0
    %v313 = vmin.f32 %v249, 127.0
    %v314 = vmin.f32 %v250, 127.0
    %v315 = vmin.f32 %v251, 127.0
    %v316 = vmin.f32 %v252, 127.0
    %v317 = vmin.f32 %v253, 127.0
    %v318 = vmin.f32 %v254, 127.0
    %v319 = vmin.f32 %v255, 127.0
    %v320 = vmin.f32 %v256, 127.0
    %v321 = vmin.f32 %v257, 127.0
    %v322 = vmin.f32 %v258, 127.0
    %v323 = vmin.f32 %v259, 127.0
    %v324 = vmin.f32 %v260, 127.0
    %v325 = vmin.f32 %v261, 127.0
    %v326 = vmin.f32 %v262, 127.0
    %v327 = vmin.f32 %v263, 127.0
    %v328 = vmin.f32 %v264, 127.0
    %v329 = vmin.f32 %v265, 127.0
    %v330 = vmin.f32 %v266, 127.0
    %v331 = vmin.f32 %v267, 127.0
    %v332 = vmin.f32 %v268, 127.0
    %v333 = vmin.f32 %v269, 127.0
    %v334 = vmin.f32 %v270, 127.0
    %v335 = vmin.f32 %v271, 127.0
    %v336 = vmin.f32 %v272, 127.0
    %v337 = vmin.f32 %v273, 127.0
    %v338 = vmin.f32 %v274, 127.0
    %v339 = vmin.f32 %v275, 127.0
    %v340 = vmin.f32 %v276, 127.0
    %v341 = vmin.f32 %v277, 127.0
    %v342 = vmin.f32 %v278, 127.0
    %v343 = vmin.f32 %v279, 127.0
    %v344 = vmin.f32 %v280, 127.0
    %v345 = vmin.f32 %v281, 127.0
    %s346 = sld [smem:[#allocation2]]
    %v347 = vstv %s346
    %v348 = vmul.f32 %v282, %v347
    %v349 = vmul.f32 %v283, %v347
    %v350 = vmul.f32 %v284, %v347
    %v351 = vmul.f32 %v285, %v347
    %v352 = vmul.f32 %v286, %v347
    %v353 = vmul.f32 %v287, %v347
    %v354 = vmul.f32 %v288, %v347
    %v355 = vmul.f32 %v289, %v347
    %v356 = vmul.f32 %v290, %v347
    %v357 = vmul.f32 %v291, %v347
    %v358 = vmul.f32 %v292, %v347
    %v359 = vmul.f32 %v293, %v347
    %v360 = vmul.f32 %v294, %v347
    %v361 = vmul.f32 %v295, %v347
    %v362 = vmul.f32 %v296, %v347
    %v363 = vmul.f32 %v297, %v347
    %v364 = vmul.f32 %v298, %v347
    %v365 = vmul.f32 %v299, %v347
    %v366 = vmul.f32 %v300, %v347
    %v367 = vmul.f32 %v301, %v347
    %v368 = vmul.f32 %v302, %v347
    %v369 = vmul.f32 %v303, %v347
    %v370 = vmul.f32 %v304, %v347
    %v371 = vmul.f32 %v305, %v347
    %v372 = vmul.f32 %v306, %v347
    %v373 = vmul.f32 %v307, %v347
    %v374 = vmul.f32 %v308, %v347
    %v375 = vmul.f32 %v309, %v347
    %v376 = vmul.f32 %v310, %v347
    %v377 = vmul.f32 %v311, %v347
    %v378 = vmul.f32 %v312, %v347
    %v379 = vmul.f32 %v313, %v347
    %v380 = vmul.f32 %v314, %v347
    %v381 = vmul.f32 %v315, %v347
    %v382 = vmul.f32 %v316, %v347
    %v383 = vmul.f32 %v317, %v347
    %v384 = vmul.f32 %v318, %v347
    %v385 = vmul.f32 %v319, %v347
    %v386 = vmul.f32 %v320, %v347
    %v387 = vmul.f32 %v321, %v347
    %v388 = vmul.f32 %v322, %v347
    %v389 = vmul.f32 %v323, %v347
    %v390 = vmul.f32 %v324, %v347
    %v391 = vmul.f32 %v325, %v347
    %v392 = vmul.f32 %v326, %v347
    %v393 = vmul.f32 %v327, %v347
    %v394 = vmul.f32 %v328, %v347
    %v395 = vmul.f32 %v329, %v347
    %v396 = vmul.f32 %v330, %v347
    %v397 = vmul.f32 %v331, %v347
    %v398 = vmul.f32 %v332, %v347
    %v399 = vmul.f32 %v333, %v347
    %v400 = vmul.f32 %v334, %v347
    %v401 = vmul.f32 %v335, %v347
    %v402 = vmul.f32 %v336, %v347
    %v403 = vmul.f32 %v337, %v347
    %v404 = vmul.f32 %v338, %v347
    %v405 = vmul.f32 %v339, %v347
    %v406 = vmul.f32 %v340, %v347
    %v407 = vmul.f32 %v341, %v347
    %v408 = vmul.f32 %v342, %v347
    %v409 = vmul.f32 %v343, %v347
    %v410 = vmul.f32 %v344, %v347
    %v411 = vmul.f32 %v345, %v347
    %412 = vst [vmem:[%s2] sm:$0xff] %v348
    %413 = vst [vmem:[%s2 + $0x8] sm:$0xff] %v349
    %414 = vst [vmem:[%s2 + $0x10] sm:$0xff] %v350
    %415 = vst [vmem:[%s2 + $0x18] sm:$0xff] %v351
    %416 = vst [vmem:[%s2 + $0x20] sm:$0xff] %v352
    %417 = vst [vmem:[%s2 + $0x28] sm:$0xff] %v353
    %418 = vst [vmem:[%s2 + $0x30] sm:$0xff] %v354
    %419 = vst [vmem:[%s2 + $0x38] sm:$0xff] %v355
    %420 = vst [vmem:[%s2 + $0x40] sm:$0xff] %v356
    %421 = vst [vmem:[%s2 + $0x48] sm:$0xff] %v357
    %422 = vst [vmem:[%s2 + $0x50] sm:$0xff] %v358
    %423 = vst [vmem:[%s2 + $0x58] sm:$0xff] %v359
    %424 = vst [vmem:[%s2 + $0x60] sm:$0xff] %v360
    %425 = vst [vmem:[%s2 + $0x68] sm:$0xff] %v361
    %426 = vst [vmem:[%s2 + $0x70] sm:$0xff] %v362
    %427 = vst [vmem:[%s2 + $0x78] sm:$0xff] %v363
    %428 = vst [vmem:[%s2 + $0x80] sm:$0xff] %v364
    %429 = vst [vmem:[%s2 + $0x88] sm:$0xff] %v365
    %430 = vst [vmem:[%s2 + $0x90] sm:$0xff] %v366
    %431 = vst [vmem:[%s2 + $0x98] sm:$0xff] %v367
    %432 = vst [vmem:[%s2 + $0xa0] sm:$0xff] %v368
    %433 = vst [vmem:[%s2 + $0xa8] sm:$0xff] %v369
    %434 = vst [vmem:[%s2 + $0xb0] sm:$0xff] %v370
    %435 = vst [vmem:[%s2 + $0xb8] sm:$0xff] %v371
    %436 = vst [vmem:[%s2 + $0xc0] sm:$0xff] %v372
    %437 = vst [vmem:[%s2 + $0xc8] sm:$0xff] %v373
    %438 = vst [vmem:[%s2 + $0xd0] sm:$0xff] %v374
    %439 = vst [vmem:[%s2 + $0xd8] sm:$0xff] %v375
    %440 = vst [vmem:[%s2 + $0xe0] sm:$0xff] %v376
    %441 = vst [vmem:[%s2 + $0xe8] sm:$0xff] %v377
    %442 = vst [vmem:[%s2 + $0xf0] sm:$0xff] %v378
    %443 = vst [vmem:[%s2 + $0xf8] sm:$0xff] %v379
    %444 = vst [vmem:[%s2 + $0x100] sm:$0xff] %v380
    %445 = vst [vmem:[%s2 + $0x108] sm:$0xff] %v381
    %446 = vst [vmem:[%s2 + $0x110] sm:$0xff] %v382
    %447 = vst [vmem:[%s2 + $0x118] sm:$0xff] %v383
    %448 = vst [vmem:[%s2 + $0x120] sm:$0xff] %v384
    %449 = vst [vmem:[%s2 + $0x128] sm:$0xff] %v385
    %450 = vst [vmem:[%s2 + $0x130] sm:$0xff] %v386
    %451 = vst [vmem:[%s2 + $0x138] sm:$0xff] %v387
    %452 = vst [vmem:[%s2 + $0x140] sm:$0xff] %v388
    %453 = vst [vmem:[%s2 + $0x148] sm:$0xff] %v389
    %454 = vst [vmem:[%s2 + $0x150] sm:$0xff] %v390
    %455 = vst [vmem:[%s2 + $0x158] sm:$0xff] %v391
    %456 = vst [vmem:[%s2 + $0x160] sm:$0xff] %v392
    %457 = vst [vmem:[%s2 + $0x168] sm:$0xff] %v393
    %458 = vst [vmem:[%s2 + $0x170] sm:$0xff] %v394
    %459 = vst [vmem:[%s2 + $0x178] sm:$0xff] %v395
    %460 = vst [vmem:[%s2 + $0x180] sm:$0xff] %v396
    %461 = vst [vmem:[%s2 + $0x188] sm:$0xff] %v397
    %462 = vst [vmem:[%s2 + $0x190] sm:$0xff] %v398
    %463 = vst [vmem:[%s2 + $0x198] sm:$0xff] %v399
    %464 = vst [vmem:[%s2 + $0x1a0] sm:$0xff] %v400
    %465 = vst [vmem:[%s2 + $0x1a8] sm:$0xff] %v401
    %466 = vst [vmem:[%s2 + $0x1b0] sm:$0xff] %v402
    %467 = vst [vmem:[%s2 + $0x1b8] sm:$0xff] %v403
    %468 = vst [vmem:[%s2 + $0x1c0] sm:$0xff] %v404
    %469 = vst [vmem:[%s2 + $0x1c8] sm:$0xff] %v405
    %470 = vst [vmem:[%s2 + $0x1d0] sm:$0xff] %v406
    %471 = vst [vmem:[%s2 + $0x1d8] sm:$0xff] %v407
    %472 = vst [vmem:[%s2 + $0x1e0] sm:$0xff] %v408
    %473 = vst [vmem:[%s2 + $0x1e8] sm:$0xff] %v409
    %474 = vst [vmem:[%s2 + $0x1f0] sm:$0xff] %v410
    %475 = vst [vmem:[%s2 + $0x1f8] sm:$0xff] %v411
    // Predicated region
    $region14: #{q_conv_seq_branch.5} parent=1 // pred_check
      _
    $region15: #{q_conv_seq_branch.5} parent=1 // pred_check_branch
      %477 = sbr.rel (0) target = $region17
    $region16: #{q_conv_seq_branch.5} parent=1 // pred_region
      _
    $region17: #{q_conv_seq_branch.5} parent=1 // pred_fallthru
      _
    // Predicated region
    $region18: #{q_conv_seq_branch.5} parent=1 // pred_check
      _
    $region19: #{q_conv_seq_branch.5} parent=1 // pred_check_branch
      %479 = sbr.rel (0) target = $region21
    $region20: #{q_conv_seq_branch.5} parent=1 // pred_region
      _
    $region21: #{q_conv_seq_branch.5} parent=1 // pred_fallthru
      _
    %480 = vsyncpa [#allocation3], 1

// kernel: q_conv_seq_branch.3
$region0: #{q_conv_seq_branch.3}
  #allocation0 [shape = 'u32[]', space=smem, size = 0x4, offset = 0x4, fixed_abs, tag = 'smem constant byte address 0x4 - core index']
  #allocation1 [shape = 'u32[144,128]{1,0:T(1,128)}', space=vmem, size = 0x12000, scoped, tag = 'internal scratch']
  #allocation2 [shape = 'f32[1]{0:T(128)S(6)}', space=smem, size = 0x200, scoped, tag = 'scoped memory for q_conv_seq_branch.3']
  %s0 = inlined_call_operand.<no memory space> [shape: f32[1], index: 0, kind: input, shape index: {}]
  %s1 = inlined_call_operand.vmem [shape: f32[2,16,16,4], index: 1, kind: input, shape index: {}]
  %s2 = inlined_call_operand.vmem [shape: bf16[1,4,128], index: 2, kind: input, shape index: {}]
  %s3 = inlined_call_operand.vmem [shape: f32[1,128], index: 3, kind: input, shape index: {}]
  %s4 = inlined_call_operand.vmem [shape: f32[1,128], index: 4, kind: input, shape index: {}]
  %s5 = inlined_call_operand.vmem [shape: f32[2,16,16,128], index: 5, kind: output, shape index: {0}]
  %s6 = inlined_call_operand.vmem [shape: f32[2,1,8,128], index: 6, kind: output, shape index: {1}]
  %7 = xla_tuple %s5, %s6
  %s8 = sld [smem:[#allocation0]]
  $region61: #{q_conv_seq_branch.3} parent=0
    _
  %s10 = ssub.s32 1, %s8
  %s11 = scalar_select 0, %s10, %s8
  %12 = sst [smem:[#allocation2]] %s0
  loop: start=0, step=1, limit=4
  $region2: #{q_conv_seq_branch.3} parent=0 // loop_pre_header
    _
  $region3: #{q_conv_seq_branch.3} parent=0 // loop_header
    %s14 = sphi 0, %s18
    %p15 = scmp.ge.s32.totalorder %s14, 4
    %s21 = sphi 0, %s33
    %s22 = sphi 0, %s29
    %s23 = sphi 0, %s21
    %s24 = sphi 0, %s22
    %s25 = sphi 0, %s23
    %s26 = sphi 0, %s24
    %s34 = sphi 0, %s34
    %s36 = sphi 0, %s34
    %s37 = sphi 0, %s36
    %s51 = sphi 0, %s37
    %s57 = sphi 0, %s59
    %s60 = sphi 0, %s57
    %s61 = sphi 0, %s60
    %s77 = sphi 0, %s61
    %s81 = sphi 0, %s81
    %s83 = sphi 0, %s81
    %s84 = sphi 0, %s83
    %s98 = sphi 0, %s84
    %s102 = sphi 0, %s102
    %s104 = sphi 0, %s102
    %s105 = sphi 0, %s104
    %s119 = sphi 0, %s105
    %s123 = sphi 0, %s123
    %s125 = sphi 0, %s123
    %s126 = sphi 0, %s125
    %s140 = sphi 0, %s126
    %s148 = sphi 0, %s150
    %s151 = sphi 0, %s148
    %s152 = sphi 0, %s151
    %s168 = sphi 0, %s152
    %s176 = sphi 0, %s178
    %s179 = sphi 0, %s176
    %s180 = sphi 0, %s179
    %s196 = sphi 0, %s180
  $region4: #{q_conv_seq_branch.3} parent=0 // loop_header_branch
    %17 = sbr.rel (%p15) target = $region8
  $region5: #{q_conv_seq_branch.3} parent=0 // loop_body
    %s19 = ssub.s32 %s14, 1
    %s20 = ssub.s32 %s14, 2
    %s27 = sadd.s32 1, %s22
    %p28 = scmp.ge.s32.totalorder %s27, 1
    %s29 = scalar_select %p28, 0, %s27
    %s30 = sadd.s32 1, %s21
    %s31 = scalar_select %p28, %s30, %s21
    %p32 = scmp.ge.s32.totalorder %s31, 2
    %s33 = scalar_select %p32, 0, %s31
    %s35 = sadd.s32 %s34, 1
    %p38 = scmp.eq.s32.totalorder %s14, 1
    %p39 = scmp.ne.s32.totalorder %s34, %s36
    %p40 = scmp.eq.s32.totalorder %s14, 0
    %p41 = por %p39, %p40
    %p42 = scmp.ne.s32.totalorder %s34, %s36
    %p43 = scmp.eq.s32.totalorder %s19, 1
    %p44 = por %p42, %p43
    %p45 = scmp.ne.s32.totalorder %s36, %s37
    %p46 = scmp.eq.s32.totalorder %s19, 0
    %p47 = por %p45, %p46
    %p48 = scmp.ne.s32.totalorder %s36, %s37
    %p49 = scmp.eq.s32.totalorder %s20, 1
    %p50 = por %p48, %p49
    %p52 = scmp.ne.s32.totalorder %s37, %s51
    %p53 = scmp.eq.s32.totalorder %s20, 0
    %p54 = por %p52, %p53
    %s55 = ssub.s32 %s21, %s33
    %p56 = scmp.eq.s32.totalorder %s55, 0
    %s58 = sadd.s32 %s57, 1
    %s59 = scalar_select %p56, %s57, %s58
    %p62 = pneg %p56
    %p63 = scmp.eq.s32.totalorder %s14, 1
    %p64 = por %p62, %p63
    %p65 = scmp.ne.s32.totalorder %s57, %s60
    %p66 = scmp.eq.s32.totalorder %s14, 0
    %p67 = por %p65, %p66
    %p68 = scmp.ne.s32.totalorder %s57, %s60
    %p69 = scmp.eq.s32.totalorder %s19, 1
    %p70 = por %p68, %p69
    %p71 = scmp.ne.s32.totalorder %s60, %s61
    %p72 = scmp.eq.s32.totalorder %s19, 0
    %p73 = por %p71, %p72
    %p74 = scmp.ne.s32.totalorder %s60, %s61
    %p75 = scmp.eq.s32.totalorder %s20, 1
    %p76 = por %p74, %p75
    %p78 = scmp.ne.s32.totalorder %s61, %s77
    %p79 = scmp.eq.s32.totalorder %s20, 0
    %p80 = por %p78, %p79
    %s82 = sadd.s32 %s81, 1
    %p85 = scmp.eq.s32.totalorder %s14, 1
    %p86 = scmp.ne.s32.totalorder %s81, %s83
    %p87 = scmp.eq.s32.totalorder %s14, 0
    %p88 = por %p86, %p87
    %p89 = scmp.ne.s32.totalorder %s81, %s83
    %p90 = scmp.eq.s32.totalorder %s19, 1
    %p91 = por %p89, %p90
    %p92 = scmp.ne.s32.totalorder %s83, %s84
    %p93 = scmp.eq.s32.totalorder %s19, 0
    %p94 = por %p92, %p93
    %p95 = scmp.ne.s32.totalorder %s83, %s84
    %p96 = scmp.eq.s32.totalorder %s20, 1
    %p97 = por %p95, %p96
    %p99 = scmp.ne.s32.totalorder %s84, %s98
    %p100 = scmp.eq.s32.totalorder %s20, 0
    %p101 = por %p99, %p100
    %s103 = sadd.s32 %s102, 1
    %p106 = scmp.eq.s32.totalorder %s14, 1
    %p107 = scmp.ne.s32.totalorder %s102, %s104
    %p108 = scmp.eq.s32.totalorder %s14, 0
    %p109 = por %p107, %p108
    %p110 = scmp.ne.s32.totalorder %s102, %s104
    %p111 = scmp.eq.s32.totalorder %s19, 1
    %p112 = por %p110, %p111
    %p113 = scmp.ne.s32.totalorder %s104, %s105
    %p114 = scmp.eq.s32.totalorder %s19, 0
    %p115 = por %p113, %p114
    %p116 = scmp.ne.s32.totalorder %s104, %s105
    %p117 = scmp.eq.s32.totalorder %s20, 1
    %p118 = por %p116, %p117
    %p120 = scmp.ne.s32.totalorder %s105, %s119
    %p121 = scmp.eq.s32.totalorder %s20, 0
    %p122 = por %p120, %p121
    %s124 = sadd.s32 %s123, 1
    %p127 = scmp.eq.s32.totalorder %s14, 1
    %p128 = scmp.ne.s32.totalorder %s123, %s125
    %p129 = scmp.eq.s32.totalorder %s14, 0
    %p130 = por %p128, %p129
    %p131 = scmp.ne.s32.totalorder %s123, %s125
    %p132 = scmp.eq.s32.totalorder %s19, 1
    %p133 = por %p131, %p132
    %p134 = scmp.ne.s32.totalorder %s125, %s126
    %p135 = scmp.eq.s32.totalorder %s19, 0
    %p136 = por %p134, %p135
    %p137 = scmp.ne.s32.totalorder %s125, %s126
    %p138 = scmp.eq.s32.totalorder %s20, 1
    %p139 = por %p137, %p138
    %p141 = scmp.ne.s32.totalorder %s126, %s140
    %p142 = scmp.eq.s32.totalorder %s20, 0
    %p143 = por %p141, %p142
    %s144 = ssub.s32 %s21, %s33
    %s145 = ssub.s32 %s22, %s29
    %s146 = sor.u32 %s144, %s145
    %p147 = scmp.eq.s32.totalorder %s146, 0
    %s149 = sadd.s32 %s148, 1
    %s150 = scalar_select %p147, %s148, %s149
    %p153 = pneg %p147
    %p154 = scmp.eq.s32.totalorder %s14, 1
    %p155 = por %p153, %p154
    %p156 = scmp.ne.s32.totalorder %s148, %s151
    %p157 = scmp.eq.s32.totalorder %s14, 0
    %p158 = por %p156, %p157
    %p159 = scmp.ne.s32.totalorder %s148, %s151
    %p160 = scmp.eq.s32.totalorder %s19, 1
    %p161 = por %p159, %p160
    %p162 = scmp.ne.s32.totalorder %s151, %s152
    %p163 = scmp.eq.s32.totalorder %s19, 0
    %p164 = por %p162, %p163
    %p165 = scmp.ne.s32.totalorder %s151, %s152
    %p166 = scmp.eq.s32.totalorder %s20, 1
    %p167 = por %p165, %p166
    %p169 = scmp.ne.s32.totalorder %s152, %s168
    %p170 = scmp.eq.s32.totalorder %s20, 0
    %p171 = por %p169, %p170
    %s172 = ssub.s32 %s21, %s33
    %s173 = ssub.s32 %s22, %s29
    %s174 = sor.u32 %s172, %s173
    %p175 = scmp.eq.s32.totalorder %s174, 0
    %s177 = sadd.s32 %s176, 1
    %s178 = scalar_select %p175, %s176, %s177
    %p181 = pneg %p175
    %p182 = scmp.eq.s32.totalorder %s14, 1
    %p183 = por %p181, %p182
    %p184 = scmp.ne.s32.totalorder %s176, %s179
    %p185 = scmp.eq.s32.totalorder %s14, 0
    %p186 = por %p184, %p185
    %p187 = scmp.ne.s32.totalorder %s176, %s179
    %p188 = scmp.eq.s32.totalorder %s19, 1
    %p189 = por %p187, %p188
    %p190 = scmp.ne.s32.totalorder %s179, %s180
    %p191 = scmp.eq.s32.totalorder %s19, 0
    %p192 = por %p190, %p191
    %p193 = scmp.ne.s32.totalorder %s179, %s180
    %p194 = scmp.eq.s32.totalorder %s20, 1
    %p195 = por %p193, %p194
    %p197 = scmp.ne.s32.totalorder %s180, %s196
    %p198 = scmp.eq.s32.totalorder %s20, 0
    %p199 = por %p197, %p198
    %p200 = scmp.le.s32.totalorder 1, %s14
    %p201 = scmp.lt.s32.totalorder %s14, 3
    %p202 = pnand %p200, %p201
    %p203 = pneg %p202
    // Predicated region
    $region9: #{q_conv_seq_branch.3} parent=5 // pred_check
      _
    $region10: #{q_conv_seq_branch.3} parent=5 // pred_check_branch
      %205 = sbr.rel (%p202) target = $region12
    $region11: #{q_conv_seq_branch.3} parent=5 // pred_region
      %s206 = ssub.s32 %s14, 1
      // Predicated region
      $region13: #{q_conv_seq_branch.3} parent=11 // pred_check
        %p207 = pneg %p47
      $region14: #{q_conv_seq_branch.3} parent=11 // pred_check_branch
        %209 = sbr.rel (%p207) target = $region16
      $region15: #{q_conv_seq_branch.3} parent=11 // pred_region
        _
      $region16: #{q_conv_seq_branch.3} parent=11 // pred_fallthru
        _
      // Predicated region
      $region17: #{q_conv_seq_branch.3} parent=11 // pred_check
        %p210 = pneg %p94
      $region18: #{q_conv_seq_branch.3} parent=11 // pred_check_branch
        %212 = sbr.rel (%p210) target = $region20
      $region19: #{q_conv_seq_branch.3} parent=11 // pred_region
        _
      $region20: #{q_conv_seq_branch.3} parent=11 // pred_fallthru
        _
      // Predicated region
      $region21: #{q_conv_seq_branch.3} parent=11 // pred_check
        %p213 = pneg %p115
      $region22: #{q_conv_seq_branch.3} parent=11 // pred_check_branch
        %215 = sbr.rel (%p213) target = $region24
      $region23: #{q_conv_seq_branch.3} parent=11 // pred_region
        _
      $region24: #{q_conv_seq_branch.3} parent=11 // pred_fallthru
        _
      // Predicated region
      $region25: #{q_conv_seq_branch.3} parent=11 // pred_check
        %p216 = pneg %p136
      $region26: #{q_conv_seq_branch.3} parent=11 // pred_check_branch
        %218 = sbr.rel (%p216) target = $region28
      $region27: #{q_conv_seq_branch.3} parent=11 // pred_region
        _
      $region28: #{q_conv_seq_branch.3} parent=11 // pred_fallthru
        _
    $region12: #{q_conv_seq_branch.3} parent=5 // pred_fallthru
      _
    %p219 = scmp.lt.s32.totalorder %s14, 2
    // Predicated region
    $region29: #{q_conv_seq_branch.3} parent=5 // pred_check
      %p220 = pneg %p219
    $region30: #{q_conv_seq_branch.3} parent=5 // pred_check_branch
      %222 = sbr.rel (%p220) target = $region32
    $region31: #{q_conv_seq_branch.3} parent=5 // pred_region
      // Predicated region
      $region33: #{q_conv_seq_branch.3} parent=31 // pred_check
        %p223 = pneg %p67
      $region34: #{q_conv_seq_branch.3} parent=31 // pred_check_branch
        %225 = sbr.rel (%p223) target = $region36
      $region35: #{q_conv_seq_branch.3} parent=31 // pred_region
        %p226 = scmp.lt.s32.totalorder %s21, 1
        %s227 = scalar_select %p226, %s21, 1
        %s228 = smul.addr %s227, 32
        %s229 = smul.addr %s228, 8
        %s230 = scalar_lea.vmem %s1, %s229
      $region36: #{q_conv_seq_branch.3} parent=31 // pred_fallthru
        _
    $region32: #{q_conv_seq_branch.3} parent=5 // pred_fallthru
      _
    %p231 = scmp.le.s32.totalorder 1, %s14
    %p232 = scmp.lt.s32.totalorder %s14, 3
    %p233 = pnand %p231, %p232
    %p234 = pneg %p233
    // Predicated region
    $region37: #{q_conv_seq_branch.3} parent=5 // pred_check
      _
    $region38: #{q_conv_seq_branch.3} parent=5 // pred_check_branch
      %236 = sbr.rel (%p233) target = $region40
    $region39: #{q_conv_seq_branch.3} parent=5 // pred_region
      %s237 = ssub.s32 %s14, 1
      %p238 = pneg %p47
      %p239 = pneg %p44
      %p240 = scmp.lt.s32.totalorder %s23, 1
      %s241 = scalar_select %p240, %s23, 1
      %s242 = smul.addr %s241, 32
      %s243 = smul.addr %s242, 8
      %s244 = scalar_lea.vmem %s1, %s243
      %p245 = pneg %p73
      %p246 = pneg %p70
      %p247 = pneg %p94
      %p248 = pneg %p91
      %p249 = pneg %p115
      %p250 = pneg %p112
      %p251 = pneg %p136
      %p252 = pneg %p133
      %p253 = pneg %p164
      %p254 = pneg %p161
      %s255 = smul.u32 16, %s24
      %p256 = scmp.lt.s32.totalorder %s23, 1
      %s257 = scalar_select %p256, %s23, 1
      %p258 = scmp.lt.s32.totalorder %s255, 15
      %s259 = scalar_select %p258, %s255, 15
      %s260 = smul.addr %s259, 2
      %s261 = smul.addr %s257, 32
      %s262 = sadd.s32 %s260, %s261
      %s263 = smul.addr %s262, 8
      %s264 = scalar_lea.vmem %s5, %s263
      %p265 = pneg %p192
      %p266 = pneg %p189
      %p267 = scmp.lt.s32.totalorder %s23, 1
      %s268 = scalar_select %p267, %s23, 1
      %p269 = scmp.lt.s32.totalorder %s24, 0
      %s270 = scalar_select %p269, %s24, 0
      %s271 = sadd.s32 %s270, %s268
      %s272 = smul.addr %s271, 8
      %s273 = scalar_lea.vmem %s6, %s272
      %p274 = scmp.lt.s32.totalorder %s23, 1
      %s275 = scalar_select %p274, %s23, 1
      %s276 = smul.addr %s275, 32
      %s277 = smul.addr %s276, 8
      %s278 = scalar_lea.vmem %s1, %s277
      %s279 = smul.u32 16, %s24
      %p280 = scmp.lt.s32.totalorder %s23, 1
      %s281 = scalar_select %p280, %s23, 1
      %p282 = scmp.lt.s32.totalorder %s279, 15
      %s283 = scalar_select %p282, %s279, 15
      %s284 = smul.addr %s283, 2
      %s285 = smul.addr %s281, 32
      %s286 = sadd.s32 %s284, %s285
      %s287 = smul.addr %s286, 8
      %s288 = scalar_lea.vmem %s5, %s287
      %s289 = smul.u32 16, %s24
      %p290 = scmp.lt.s32.totalorder %s23, 1
      %s291 = scalar_select %p290, %s23, 1
      %p292 = scmp.lt.s32.totalorder %s24, 0
      %s293 = scalar_select %p292, %s24, 0
      %s294 = sadd.s32 %s293, %s291
      %s295 = smul.addr %s294, 8
      %s296 = scalar_lea.vmem %s6, %s295
      %s298 = sld [smem:[#allocation2]]
      %s299 = smul.u32 %s24, 16
      %s300 = smul.u32 %s299, 16
      %s301 = scalar_lea.vmem %s278, %s300
      %v302 = vld [vmem:[%s301] sm:$0xff]
      %v303 = vld [vmem:[%s301 + $0x8] sm:$0xff]
      %v304 = vld [vmem:[%s301 + $0x10] sm:$0xff]
      %v305 = vld [vmem:[%s301 + $0x18] sm:$0xff]
      %v306 = vld [vmem:[%s301 + $0x20] sm:$0xff]
      %v307 = vld [vmem:[%s301 + $0x28] sm:$0xff]
      %v308 = vld [vmem:[%s301 + $0x30] sm:$0xff]
      %v309 = vld [vmem:[%s301 + $0x38] sm:$0xff]
      %v310 = vld [vmem:[%s301 + $0x40] sm:$0xff]
      %v311 = vld [vmem:[%s301 + $0x48] sm:$0xff]
      %v312 = vld [vmem:[%s301 + $0x50] sm:$0xff]
      %v313 = vld [vmem:[%s301 + $0x58] sm:$0xff]
      %v314 = vld [vmem:[%s301 + $0x60] sm:$0xff]
      %v315 = vld [vmem:[%s301 + $0x68] sm:$0xff]
      %v316 = vld [vmem:[%s301 + $0x70] sm:$0xff]
      %v317 = vld [vmem:[%s301 + $0x78] sm:$0xff]
      %v318 = vld [vmem:[%s301 + $0x80] sm:$0xff]
      %v319 = vld [vmem:[%s301 + $0x88] sm:$0xff]
      %v320 = vld [vmem:[%s301 + $0x90] sm:$0xff]
      %v321 = vld [vmem:[%s301 + $0x98] sm:$0xff]
      %v322 = vld [vmem:[%s301 + $0xa0] sm:$0xff]
      %v323 = vld [vmem:[%s301 + $0xa8] sm:$0xff]
      %v324 = vld [vmem:[%s301 + $0xb0] sm:$0xff]
      %v325 = vld [vmem:[%s301 + $0xb8] sm:$0xff]
      %v326 = vld [vmem:[%s301 + $0xc0] sm:$0xff]
      %v327 = vld [vmem:[%s301 + $0xc8] sm:$0xff]
      %v328 = vld [vmem:[%s301 + $0xd0] sm:$0xff]
      %v329 = vld [vmem:[%s301 + $0xd8] sm:$0xff]
      %v330 = vld [vmem:[%s301 + $0xe0] sm:$0xff]
      %v331 = vld [vmem:[%s301 + $0xe8] sm:$0xff]
      %v332 = vld [vmem:[%s301 + $0xf0] sm:$0xff]
      %v333 = vld [vmem:[%s301 + $0xf8] sm:$0xff]
      %v334 = vstv %s298
      %v335 = vmul.f32 %v302, %v334
      %v336 = vmul.f32 %v303, %v334
      %v337 = vmul.f32 %v304, %v334
      %v338 = vmul.f32 %v305, %v334
      %v339 = vmul.f32 %v306, %v334
      %v340 = vmul.f32 %v307, %v334
      %v341 = vmul.f32 %v308, %v334
      %v342 = vmul.f32 %v309, %v334
      %v343 = vmul.f32 %v310, %v334
      %v344 = vmul.f32 %v311, %v334
      %v345 = vmul.f32 %v312, %v334
      %v346 = vmul.f32 %v313, %v334
      %v347 = vmul.f32 %v314, %v334
      %v348 = vmul.f32 %v315, %v334
      %v349 = vmul.f32 %v316, %v334
      %v350 = vmul.f32 %v317, %v334
      %v351 = vmul.f32 %v318, %v334
      %v352 = vmul.f32 %v319, %v334
      %v353 = vmul.f32 %v320, %v334
      %v354 = vmul.f32 %v321, %v334
      %v355 = vmul.f32 %v322, %v334
      %v356 = vmul.f32 %v323, %v334
      %v357 = vmul.f32 %v324, %v334
      %v358 = vmul.f32 %v325, %v334
      %v359 = vmul.f32 %v326, %v334
      %v360 = vmul.f32 %v327, %v334
      %v361 = vmul.f32 %v328, %v334
      %v362 = vmul.f32 %v329, %v334
      %v363 = vmul.f32 %v330, %v334
      %v364 = vmul.f32 %v331, %v334
      %v365 = vmul.f32 %v332, %v334
      %v366 = vmul.f32 %v333, %v334
      %v367 = vround.ne.pseudo %v335
      %v368 = vround.ne.pseudo %v336
      %v369 = vround.ne.pseudo %v337
      %v370 = vround.ne.pseudo %v338
      %v371 = vround.ne.pseudo %v339
      %v372 = vround.ne.pseudo %v340
      %v373 = vround.ne.pseudo %v341
      %v374 = vround.ne.pseudo %v342
      %v375 = vround.ne.pseudo %v343
      %v376 = vround.ne.pseudo %v344
      %v377 = vround.ne.pseudo %v345
      %v378 = vround.ne.pseudo %v346
      %v379 = vround.ne.pseudo %v347
      %v380 = vround.ne.pseudo %v348
      %v381 = vround.ne.pseudo %v349
      %v382 = vround.ne.pseudo %v350
      %v383 = vround.ne.pseudo %v351
      %v384 = vround.ne.pseudo %v352
      %v385 = vround.ne.pseudo %v353
      %v386 = vround.ne.pseudo %v354
      %v387 = vround.ne.pseudo %v355
      %v388 = vround.ne.pseudo %v356
      %v389 = vround.ne.pseudo %v357
      %v390 = vround.ne.pseudo %v358
      %v391 = vround.ne.pseudo %v359
      %v392 = vround.ne.pseudo %v360
      %v393 = vround.ne.pseudo %v361
      %v394 = vround.ne.pseudo %v362
      %v395 = vround.ne.pseudo %v363
      %v396 = vround.ne.pseudo %v364
      %v397 = vround.ne.pseudo %v365
      %v398 = vround.ne.pseudo %v366
      %v399 = vmax.f32 %v367, -127.0
      %v400 = vmax.f32 %v368, -127.0
      %v401 = vmax.f32 %v369, -127.0
      %v402 = vmax.f32 %v370, -127.0
      %v403 = vmax.f32 %v371, -127.0
      %v404 = vmax.f32 %v372, -127.0
      %v405 = vmax.f32 %v373, -127.0
      %v406 = vmax.f32 %v374, -127.0
      %v407 = vmax.f32 %v375, -127.0
      %v408 = vmax.f32 %v376, -127.0
      %v409 = vmax.f32 %v377, -127.0
      %v410 = vmax.f32 %v378, -127.0
      %v411 = vmax.f32 %v379, -127.0
      %v412 = vmax.f32 %v380, -127.0
      %v413 = vmax.f32 %v381, -127.0
      %v414 = vmax.f32 %v382, -127.0
      %v415 = vmax.f32 %v383, -127.0
      %v416 = vmax.f32 %v384, -127.0
      %v417 = vmax.f32 %v385, -127.0
      %v418 = vmax.f32 %v386, -127.0
      %v419 = vmax.f32 %v387, -127.0
      %v420 = vmax.f32 %v388, -127.0
      %v421 = vmax.f32 %v389, -127.0
      %v422 = vmax.f32 %v390, -127.0
      %v423 = vmax.f32 %v391, -127.0
      %v424 = vmax.f32 %v392, -127.0
      %v425 = vmax.f32 %v393, -127.0
      %v426 = vmax.f32 %v394, -127.0
      %v427 = vmax.f32 %v395, -127.0
      %v428 = vmax.f32 %v396, -127.0
      %v429 = vmax.f32 %v397, -127.0
      %v430 = vmax.f32 %v398, -127.0
      %v431 = vmin.f32 %v399, 127.0
      %v432 = vmin.f32 %v400, 127.0
      %v433 = vmin.f32 %v401, 127.0
      %v434 = vmin.f32 %v402, 127.0
      %v435 = vmin.f32 %v403, 127.0
      %v436 = vmin.f32 %v404, 127.0
      %v437 = vmin.f32 %v405, 127.0
      %v438 = vmin.f32 %v406, 127.0
      %v439 = vmin.f32 %v407, 127.0
      %v440 = vmin.f32 %v408, 127.0
      %v441 = vmin.f32 %v409, 127.0
      %v442 = vmin.f32 %v410, 127.0
      %v443 = vmin.f32 %v411, 127.0
      %v444 = vmin.f32 %v412, 127.0
      %v445 = vmin.f32 %v413, 127.0
      %v446 = vmin.f32 %v414, 127.0
      %v447 = vmin.f32 %v415, 127.0
      %v448 = vmin.f32 %v416, 127.0
      %v449 = vmin.f32 %v417, 127.0
      %v450 = vmin.f32 %v418, 127.0
      %v451 = vmin.f32 %v419, 127.0
      %v452 = vmin.f32 %v420, 127.0
      %v453 = vmin.f32 %v421, 127.0
      %v454 = vmin.f32 %v422, 127.0
      %v455 = vmin.f32 %v423, 127.0
      %v456 = vmin.f32 %v424, 127.0
      %v457 = vmin.f32 %v425, 127.0
      %v458 = vmin.f32 %v426, 127.0
      %v459 = vmin.f32 %v427, 127.0
      %v460 = vmin.f32 %v428, 127.0
      %v461 = vmin.f32 %v429, 127.0
      %v462 = vmin.f32 %v430, 127.0
      %v463 = vpack.c.bf16 %v432, %v431
      %v464 = vpack.c.bf16 %v434, %v433
      %v465 = vpack.c.bf16 %v436, %v435
      %v466 = vpack.c.bf16 %v438, %v437
      %v467 = vpack.c.bf16 %v440, %v439
      %v468 = vpack.c.bf16 %v442, %v441
      %v469 = vpack.c.bf16 %v444, %v443
      %v470 = vpack.c.bf16 %v446, %v445
      %v471 = vpack.c.bf16 %v448, %v447
      %v472 = vpack.c.bf16 %v450, %v449
      %v473 = vpack.c.bf16 %v452, %v451
      %v474 = vpack.c.bf16 %v454, %v453
      %v475 = vpack.c.bf16 %v456, %v455
      %v476 = vpack.c.bf16 %v458, %v457
      %v477 = vpack.c.bf16 %v460, %v459
      %v478 = vpack.c.bf16 %v462, %v461
      %v479 = vld [vmem:[%s2] sm:$0x3]
      %vm480 = vcmask 31744
      %v482 = vsel %vm480, %v463, 0
      %v485 = vsel %vm480, %v464, 0
      %v488 = vsel %vm480, %v465, 0
      %v491 = vsel %vm480, %v466, 0
      %v494 = vsel %vm480, %v467, 0
      %v497 = vsel %vm480, %v468, 0
      %v500 = vsel %vm480, %v469, 0
      %v503 = vsel %vm480, %v470, 0
      %v506 = vsel %vm480, %v471, 0
      %v509 = vsel %vm480, %v472, 0
      %v512 = vsel %vm480, %v473, 0
      %v515 = vsel %vm480, %v474, 0
      %v518 = vsel %vm480, %v475, 0
      %v521 = vsel %vm480, %v476, 0
      %v524 = vsel %vm480, %v477, 0
      %v527 = vsel %vm480, %v478, 0
      %vm529 = vcmask 1041408
      %v531 = vsel %vm529, %v479, 0
      %533 = vmatprep.subr.bf16.mxu0 0
      %534 = vmatpush1.bf16.msra.mxu0 0
      %535 = vmatprep.subr.bf16.mxu0 0
      %536 = vmatpush1.bf16.msra.mxu0 0
      %537 = vmatprep.subr.bf16.mxu0 0
      %538 = vmatpush1.bf16.msra.mxu0 0
      %539 = vmatprep.subr.bf16.mxu0 0
      %540 = vmatpush1.bf16.msra.mxu0 0
      %541 = vmatprep.subr.bf16.mxu0 0
      %542 = vmatpush1.bf16.msra.mxu0 0
      %543 = vmatprep.subr.bf16.mxu0 0
      %544 = vmatpush1.bf16.msra.mxu0 0
      %545 = vmatprep.subr.bf16.mxu0 0
      %546 = vmatpush1.bf16.msra.mxu0 0
      %547 = vmatprep.subr.bf16.mxu0 0
      %548 = vmatpush1.bf16.msra.mxu0 %v531
      %549 = vmatprep.subr.bf16.mxu0 0
      %550 = vmatpush2.bf16.msra.mxu0 0
      %551 = vmatprep.subr.bf16.mxu0 0
      %552 = vmatpush2.bf16.msra.mxu0 0
      %553 = vmatprep.subr.bf16.mxu0 0
      %554 = vmatpush2.bf16.msra.mxu0 0
      %555 = vmatprep.subr.bf16.mxu0 0
      %556 = vmatpush2.bf16.msra.mxu0 0
      %557 = vmatprep.subr.bf16.mxu0 0
      %558 = vmatpush2.bf16.msra.mxu0 0
      %559 = vmatprep.subr.bf16.mxu0 0
      %560 = vmatpush2.bf16.msra.mxu0 0
      %561 = vmatprep.subr.bf16.mxu0 0
      %562 = vmatpush2.bf16.msra.mxu0 0
      %563 = vmatprep.subr.bf16.mxu0 0
      %564 = vmatpush2.bf16.msra.mxu0 0
      %565 = vmatprep.mubr.bf16.mxu0 0
      %566 = vmatmul.mubr.bf16.gmra.mxu0 %v482
      %v567 = vpop.f32.mrf.mxu0
      %v568 = vadd.f32 0.0, %v567
      %v569 = vpop.f32.mrf.mxu0
      %v570 = vpop.f32.mrf.mxu0
      %v571 = vadd.f32 0.0, %v570
      %v572 = vpop.f32.mrf.mxu0
      %573 = vmatprep.mubr.bf16.mxu0 0
      %574 = vmatmul.mubr.bf16.gmra.mxu0 %v485
      %v575 = vpop.f32.mrf.mxu0
      %v576 = vadd.f32 0.0, %v575
      %v577 = vpop.f32.mrf.mxu0
      %v578 = vpop.f32.mrf.mxu0
      %v579 = vadd.f32 0.0, %v578
      %v580 = vpop.f32.mrf.mxu0
      %581 = vmatprep.mubr.bf16.mxu0 0
      %582 = vmatmul.mubr.bf16.gmra.mxu0 %v488
      %v583 = vpop.f32.mrf.mxu0
      %v584 = vadd.f32 0.0, %v583
      %v585 = vpop.f32.mrf.mxu0
      %v586 = vpop.f32.mrf.mxu0
      %v587 = vadd.f32 0.0, %v586
      %v588 = vpop.f32.mrf.mxu0
      %589 = vmatprep.mubr.bf16.mxu0 0
      %590 = vmatmul.mubr.bf16.gmra.mxu0 %v491
      %v591 = vpop.f32.mrf.mxu0
      %v592 = vadd.f32 0.0, %v591
      %v593 = vpop.f32.mrf.mxu0
      %v594 = vpop.f32.mrf.mxu0
      %v595 = vadd.f32 0.0, %v594
      %v596 = vpop.f32.mrf.mxu0
      %597 = vmatprep.mubr.bf16.mxu0 0
      %598 = vmatmul.mubr.bf16.gmra.mxu0 %v494
      %v599 = vpop.f32.mrf.mxu0
      %v600 = vadd.f32 0.0, %v599
      %v601 = vpop.f32.mrf.mxu0
      %v602 = vpop.f32.mrf.mxu0
      %v603 = vadd.f32 0.0, %v602
      %v604 = vpop.f32.mrf.mxu0
      %605 = vmatprep.mubr.bf16.mxu0 0
      %606 = vmatmul.mubr.bf16.gmra.mxu0 %v497
      %v607 = vpop.f32.mrf.mxu0
      %v608 = vadd.f32 0.0, %v607
      %v609 = vpop.f32.mrf.mxu0
      %v610 = vpop.f32.mrf.mxu0
      %v611 = vadd.f32 0.0, %v610
      %v612 = vpop.f32.mrf.mxu0
      %613 = vmatprep.mubr.bf16.mxu0 0
      %614 = vmatmul.mubr.bf16.gmra.mxu0 %v500
      %v615 = vpop.f32.mrf.mxu0
      %v616 = vadd.f32 0.0, %v615
      %v617 = vpop.f32.mrf.mxu0
      %v618 = vpop.f32.mrf.mxu0
      %v619 = vadd.f32 0.0, %v618
      %v620 = vpop.f32.mrf.mxu0
      %621 = vmatprep.mubr.bf16.mxu0 0
      %622 = vmatmul.mubr.bf16.gmra.mxu0 %v503
      %v623 = vpop.f32.mrf.mxu0
      %v624 = vadd.f32 0.0, %v623
      %v625 = vpop.f32.mrf.mxu0
      %v626 = vpop.f32.mrf.mxu0
      %v627 = vadd.f32 0.0, %v626
      %v628 = vpop.f32.mrf.mxu0
      %629 = vmatprep.mubr.bf16.mxu0 0
      %630 = vmatmul.mubr.bf16.gmra.mxu0 %v506
      %v631 = vpop.f32.mrf.mxu0
      %v632 = vadd.f32 0.0, %v631
      %v633 = vpop.f32.mrf.mxu0
      %v634 = vpop.f32.mrf.mxu0
      %v635 = vadd.f32 0.0, %v634
      %v636 = vpop.f32.mrf.mxu0
      %637 = vmatprep.mubr.bf16.mxu0 0
      %638 = vmatmul.mubr.bf16.gmra.mxu0 %v509
      %v639 = vpop.f32.mrf.mxu0
      %v640 = vadd.f32 0.0, %v639
      %v641 = vpop.f32.mrf.mxu0
      %v642 = vpop.f32.mrf.mxu0
      %v643 = vadd.f32 0.0, %v642
      %v644 = vpop.f32.mrf.mxu0
      %645 = vmatprep.mubr.bf16.mxu0 0
      %646 = vmatmul.mubr.bf16.gmra.mxu0 %v512
      %v647 = vpop.f32.mrf.mxu0
      %v648 = vadd.f32 0.0, %v647
      %v649 = vpop.f32.mrf.mxu0
      %v650 = vpop.f32.mrf.mxu0
      %v651 = vadd.f32 0.0, %v650
      %v652 = vpop.f32.mrf.mxu0
      %653 = vmatprep.mubr.bf16.mxu0 0
      %654 = vmatmul.mubr.bf16.gmra.mxu0 %v515
      %v655 = vpop.f32.mrf.mxu0
      %v656 = vadd.f32 0.0, %v655
      %v657 = vpop.f32.mrf.mxu0
      %v658 = vpop.f32.mrf.mxu0
      %v659 = vadd.f32 0.0, %v658
      %v660 = vpop.f32.mrf.mxu0
      %661 = vmatprep.mubr.bf16.mxu0 0
      %662 = vmatmul.mubr.bf16.gmra.mxu0 %v518
      %v663 = vpop.f32.mrf.mxu0
      %v664 = vadd.f32 0.0, %v663
      %v665 = vpop.f32.mrf.mxu0
      %v666 = vpop.f32.mrf.mxu0
      %v667 = vadd.f32 0.0, %v666
      %v668 = vpop.f32.mrf.mxu0
      %669 = vmatprep.mubr.bf16.mxu0 0
      %670 = vmatmul.mubr.bf16.gmra.mxu0 %v521
      %v671 = vpop.f32.mrf.mxu0
      %v672 = vadd.f32 0.0, %v671
      %v673 = vpop.f32.mrf.mxu0
      %v674 = vpop.f32.mrf.mxu0
      %v675 = vadd.f32 0.0, %v674
      %v676 = vpop.f32.mrf.mxu0
      %677 = vmatprep.mubr.bf16.mxu0 0
      %678 = vmatmul.mubr.bf16.gmra.mxu0 %v524
      %v679 = vpop.f32.mrf.mxu0
      %v680 = vadd.f32 0.0, %v679
      %v681 = vpop.f32.mrf.mxu0
      %v682 = vpop.f32.mrf.mxu0
      %v683 = vadd.f32 0.0, %v682
      %v684 = vpop.f32.mrf.mxu0
      %685 = vmatprep.mubr.bf16.mxu0 0
      %686 = vmatmul.mubr.bf16.gmra.mxu0 %v527
      %v687 = vpop.f32.mrf.mxu0
      %v688 = vadd.f32 0.0, %v687
      %v689 = vpop.f32.mrf.mxu0
      %v690 = vpop.f32.mrf.mxu0
      %v691 = vadd.f32 0.0, %v690
      %v692 = vpop.f32.mrf.mxu0
      %693 = vdwg.mxu0
      %v694 = vld [vmem:[%s3] sm:$0x1]
      %v696 = vlaneseq
      %v697 = vshrl.u32 %v696, 7
      %v698 = vsub.s32 0, %v697
      %v699 = vrot.slane %v694, %v698
      %v701 = vmul.f32 %v568, %v699
      %v702 = vmul.f32 %v571, %v699
      %v703 = vmul.f32 %v576, %v699
      %v704 = vmul.f32 %v579, %v699
      %v705 = vmul.f32 %v584, %v699
      %v706 = vmul.f32 %v587, %v699
      %v707 = vmul.f32 %v592, %v699
      %v708 = vmul.f32 %v595, %v699
      %v709 = vmul.f32 %v600, %v699
      %v710 = vmul.f32 %v603, %v699
      %v711 = vmul.f32 %v608, %v699
      %v712 = vmul.f32 %v611, %v699
      %v713 = vmul.f32 %v616, %v699
      %v714 = vmul.f32 %v619, %v699
      %v715 = vmul.f32 %v624, %v699
      %v716 = vmul.f32 %v627, %v699
      %v717 = vmul.f32 %v632, %v699
      %v718 = vmul.f32 %v635, %v699
      %v719 = vmul.f32 %v640, %v699
      %v720 = vmul.f32 %v643, %v699
      %v721 = vmul.f32 %v648, %v699
      %v722 = vmul.f32 %v651, %v699
      %v723 = vmul.f32 %v656, %v699
      %v724 = vmul.f32 %v659, %v699
      %v725 = vmul.f32 %v664, %v699
      %v726 = vmul.f32 %v667, %v699
      %v727 = vmul.f32 %v672, %v699
      %v728 = vmul.f32 %v675, %v699
      %v729 = vmul.f32 %v680, %v699
      %v730 = vmul.f32 %v683, %v699
      %v731 = vmul.f32 %v688, %v699
      %v732 = vmul.f32 %v691, %v699
      %v733 = vld [vmem:[%s4] sm:$0x1]
      %v735 = vlaneseq
      %v736 = vshrl.u32 %v735, 7
      %v737 = vsub.s32 0, %v736
      %v738 = vrot.slane %v733, %v737
      %v740 = vadd.f32 %v701, %v738
      %v741 = vadd.f32 %v702, %v738
      %v742 = vadd.f32 %v703, %v738
      %v743 = vadd.f32 %v704, %v738
      %v744 = vadd.f32 %v705, %v738
      %v745 = vadd.f32 %v706, %v738
      %v746 = vadd.f32 %v707, %v738
      %v747 = vadd.f32 %v708, %v738
      %v748 = vadd.f32 %v709, %v738
      %v749 = vadd.f32 %v710, %v738
      %v750 = vadd.f32 %v711, %v738
      %v751 = vadd.f32 %v712, %v738
      %v752 = vadd.f32 %v713, %v738
      %v753 = vadd.f32 %v714, %v738
      %v754 = vadd.f32 %v715, %v738
      %v755 = vadd.f32 %v716, %v738
      %v756 = vadd.f32 %v717, %v738
      %v757 = vadd.f32 %v718, %v738
      %v758 = vadd.f32 %v719, %v738
      %v759 = vadd.f32 %v720, %v738
      %v760 = vadd.f32 %v721, %v738
      %v761 = vadd.f32 %v722, %v738
      %v762 = vadd.f32 %v723, %v738
      %v763 = vadd.f32 %v724, %v738
      %v764 = vadd.f32 %v725, %v738
      %v765 = vadd.f32 %v726, %v738
      %v766 = vadd.f32 %v727, %v738
      %v767 = vadd.f32 %v728, %v738
      %v768 = vadd.f32 %v729, %v738
      %v769 = vadd.f32 %v730, %v738
      %v770 = vadd.f32 %v731, %v738
      %v771 = vadd.f32 %v732, %v738
      %v772 = vmax.f32 %v740, 0.0
      %v773 = vmax.f32 %v741, 0.0
      %v774 = vmax.f32 %v742, 0.0
      %v775 = vmax.f32 %v743, 0.0
      %v776 = vmax.f32 %v744, 0.0
      %v777 = vmax.f32 %v745, 0.0
      %v778 = vmax.f32 %v746, 0.0
      %v779 = vmax.f32 %v747, 0.0
      %v780 = vmax.f32 %v748, 0.0
      %v781 = vmax.f32 %v749, 0.0
      %v782 = vmax.f32 %v750, 0.0
      %v783 = vmax.f32 %v751, 0.0
      %v784 = vmax.f32 %v752, 0.0
      %v785 = vmax.f32 %v753, 0.0
      %v786 = vmax.f32 %v754, 0.0
      %v787 = vmax.f32 %v755, 0.0
      %v788 = vmax.f32 %v756, 0.0
      %v789 = vmax.f32 %v757, 0.0
      %v790 = vmax.f32 %v758, 0.0
      %v791 = vmax.f32 %v759, 0.0
      %v792 = vmax.f32 %v760, 0.0
      %v793 = vmax.f32 %v761, 0.0
      %v794 = vmax.f32 %v762, 0.0
      %v795 = vmax.f32 %v763, 0.0
      %v796 = vmax.f32 %v764, 0.0
      %v797 = vmax.f32 %v765, 0.0
      %v798 = vmax.f32 %v766, 0.0
      %v799 = vmax.f32 %v767, 0.0
      %v800 = vmax.f32 %v768, 0.0
      %v801 = vmax.f32 %v769, 0.0
      %v802 = vmax.f32 %v770, 0.0
      %v803 = vmax.f32 %v771, 0.0
      %804 = vst [vmem:[%s288] sm:$0xff] %v772
      %805 = vst [vmem:[%s288 + $0x8] sm:$0xff] %v773
      %806 = vst [vmem:[%s288 + $0x10] sm:$0xff] %v774
      %807 = vst [vmem:[%s288 + $0x18] sm:$0xff] %v775
      %808 = vst [vmem:[%s288 + $0x20] sm:$0xff] %v776
      %809 = vst [vmem:[%s288 + $0x28] sm:$0xff] %v777
      %810 = vst [vmem:[%s288 + $0x30] sm:$0xff] %v778
      %811 = vst [vmem:[%s288 + $0x38] sm:$0xff] %v779
      %812 = vst [vmem:[%s288 + $0x40] sm:$0xff] %v780
      %813 = vst [vmem:[%s288 + $0x48] sm:$0xff] %v781
      %814 = vst [vmem:[%s288 + $0x50] sm:$0xff] %v782
      %815 = vst [vmem:[%s288 + $0x58] sm:$0xff] %v783
      %816 = vst [vmem:[%s288 + $0x60] sm:$0xff] %v784
      %817 = vst [vmem:[%s288 + $0x68] sm:$0xff] %v785
      %818 = vst [vmem:[%s288 + $0x70] sm:$0xff] %v786
      %819 = vst [vmem:[%s288 + $0x78] sm:$0xff] %v787
      %820 = vst [vmem:[%s288 + $0x80] sm:$0xff] %v788
      %821 = vst [vmem:[%s288 + $0x88] sm:$0xff] %v789
      %822 = vst [vmem:[%s288 + $0x90] sm:$0xff] %v790
      %823 = vst [vmem:[%s288 + $0x98] sm:$0xff] %v791
      %824 = vst [vmem:[%s288 + $0xa0] sm:$0xff] %v792
      %825 = vst [vmem:[%s288 + $0xa8] sm:$0xff] %v793
      %826 = vst [vmem:[%s288 + $0xb0] sm:$0xff] %v794
      %827 = vst [vmem:[%s288 + $0xb8] sm:$0xff] %v795
      %828 = vst [vmem:[%s288 + $0xc0] sm:$0xff] %v796
      %829 = vst [vmem:[%s288 + $0xc8] sm:$0xff] %v797
      %830 = vst [vmem:[%s288 + $0xd0] sm:$0xff] %v798
      %831 = vst [vmem:[%s288 + $0xd8] sm:$0xff] %v799
      %832 = vst [vmem:[%s288 + $0xe0] sm:$0xff] %v800
      %833 = vst [vmem:[%s288 + $0xe8] sm:$0xff] %v801
      %834 = vst [vmem:[%s288 + $0xf0] sm:$0xff] %v802
      %835 = vst [vmem:[%s288 + $0xf8] sm:$0xff] %v803
      %v836 = vmax.f32 %v772, %v776
      %v837 = vmax.f32 %v773, %v777
      %v838 = vmax.f32 %v774, %v778
      %v839 = vmax.f32 %v775, %v779
      %v840 = vmax.f32 %v836, %v780
      %v841 = vmax.f32 %v837, %v781
      %v842 = vmax.f32 %v838, %v782
      %v843 = vmax.f32 %v839, %v783
      %v844 = vmax.f32 %v840, %v784
      %v845 = vmax.f32 %v841, %v785
      %v846 = vmax.f32 %v842, %v786
      %v847 = vmax.f32 %v843, %v787
      %v848 = vmax.f32 %v844, %v788
      %v849 = vmax.f32 %v845, %v789
      %v850 = vmax.f32 %v846, %v790
      %v851 = vmax.f32 %v847, %v791
      %v852 = vmax.f32 %v848, %v792
      %v853 = vmax.f32 %v849, %v793
      %v854 = vmax.f32 %v850, %v794
      %v855 = vmax.f32 %v851, %v795
      %v856 = vmax.f32 %v852, %v796
      %v857 = vmax.f32 %v853, %v797
      %v858 = vmax.f32 %v854, %v798
      %v859 = vmax.f32 %v855, %v799
      %v860 = vmax.f32 %v856, %v800
      %v861 = vmax.f32 %v857, %v801
      %v862 = vmax.f32 %v858, %v802
      %v863 = vmax.f32 %v859, %v803
      %v864 = vmax.f32 %v860, %v861
      %v865 = vmax.f32 %v862, %v863
      %v866 = vmax.f32 %v864, %v865
      %v867 = vrot.slane %v866, 4
      %v868 = vmax.f32 %v866, %v867
      %v869 = vrot.slane %v868, 2
      %v870 = vmax.f32 %v868, %v869
      %v871 = vrot.slane %v870, 1
      %v872 = vmax.f32 %v870, %v871
      %873 = vst [vmem:[%s296] sm:$0xff] %v872
      %s874 = smul.u32 16, %s24
      %p875 = scmp.lt.s32.totalorder %s23, 1
      %s876 = scalar_select %p875, %s23, 1
      %p877 = scmp.lt.s32.totalorder %s874, 15
      %s878 = scalar_select %p877, %s874, 15
      %s879 = smul.addr %s878, 2
      %s880 = smul.addr %s876, 32
      %s881 = sadd.s32 %s879, %s880
      %s882 = smul.addr %s881, 8
      %s883 = scalar_lea.vmem %s5, %s882
      %p884 = scmp.lt.s32.totalorder %s23, 1
      %s885 = scalar_select %p884, %s23, 1
      %p886 = scmp.lt.s32.totalorder %s24, 0
      %s887 = scalar_select %p886, %s24, 0
      %s888 = sadd.s32 %s887, %s885
      %s889 = smul.addr %s888, 8
      %s890 = scalar_lea.vmem %s6, %s889
      // Predicated region
      $region41: #{q_conv_seq_branch.3} parent=39 // pred_check
        %p891 = pneg %p161
      $region42: #{q_conv_seq_branch.3} parent=39 // pred_check_branch
        %893 = sbr.rel (%p891) target = $region44
      $region43: #{q_conv_seq_branch.3} parent=39 // pred_region
        %s894 = smul.u32 16, %s24
      $region44: #{q_conv_seq_branch.3} parent=39 // pred_fallthru
        _
      // Predicated region
      $region45: #{q_conv_seq_branch.3} parent=39 // pred_check
        %p895 = pneg %p189
      $region46: #{q_conv_seq_branch.3} parent=39 // pred_check_branch
        %897 = sbr.rel (%p895) target = $region48
      $region47: #{q_conv_seq_branch.3} parent=39 // pred_region
        _
      $region48: #{q_conv_seq_branch.3} parent=39 // pred_fallthru
        _
    $region40: #{q_conv_seq_branch.3} parent=5 // pred_fallthru
      _
    %p898 = scmp.le.s32.totalorder 2, %s14
    // Predicated region
    $region49: #{q_conv_seq_branch.3} parent=5 // pred_check
      %p899 = pneg %p898
    $region50: #{q_conv_seq_branch.3} parent=5 // pred_check_branch
      %901 = sbr.rel (%p899) target = $region52
    $region51: #{q_conv_seq_branch.3} parent=5 // pred_region
      %s902 = ssub.s32 %s14, 2
      // Predicated region
      $region53: #{q_conv_seq_branch.3} parent=51 // pred_check
        %p903 = pneg %p167
      $region54: #{q_conv_seq_branch.3} parent=51 // pred_check_branch
        %905 = sbr.rel (%p903) target = $region56
      $region55: #{q_conv_seq_branch.3} parent=51 // pred_region
        %s906 = smul.u32 16, %s26
        %p907 = scmp.lt.s32.totalorder %s25, 1
        %s908 = scalar_select %p907, %s25, 1
        %p909 = scmp.lt.s32.totalorder %s906, 15
        %s910 = scalar_select %p909, %s906, 15
        %s911 = smul.addr %s910, 2
        %s912 = smul.addr %s908, 32
        %s913 = sadd.s32 %s911, %s912
        %s914 = smul.addr %s913, 8
        %s915 = scalar_lea.vmem %s5, %s914
      $region56: #{q_conv_seq_branch.3} parent=51 // pred_fallthru
        _
      // Predicated region
      $region57: #{q_conv_seq_branch.3} parent=51 // pred_check
        %p916 = pneg %p195
      $region58: #{q_conv_seq_branch.3} parent=51 // pred_check_branch
        %918 = sbr.rel (%p916) target = $region60
      $region59: #{q_conv_seq_branch.3} parent=51 // pred_region
        %p919 = scmp.lt.s32.totalorder %s25, 1
        %s920 = scalar_select %p919, %s25, 1
        %p921 = scmp.lt.s32.totalorder %s26, 0
        %s922 = scalar_select %p921, %s26, 0
        %s923 = sadd.s32 %s922, %s920
        %s924 = smul.addr %s923, 8
        %s925 = scalar_lea.vmem %s6, %s924
      $region60: #{q_conv_seq_branch.3} parent=51 // pred_fallthru
        _
    $region52: #{q_conv_seq_branch.3} parent=5 // pred_fallthru
      _
  $region6: #{q_conv_seq_branch.3} parent=0 // loop_footer
    %s18 = sadd.s32 1, %s14
  $region7: #{q_conv_seq_branch.3} parent=0 // loop_footer_branch
    %13 = sbr.rel target = $region3
  $region8: #{q_conv_seq_branch.3} parent=0 // loop_exit
    _

// kernel: q_conv_seq_branch.4
$region0: #{q_conv_seq_branch.4}
  #allocation0 [shape = 'u32[]', space=smem, size = 0x4, offset = 0x4, fixed_abs, tag = 'smem constant byte address 0x4 - core index']
  #allocation1 [shape = 'u32[144,128]{1,0:T(1,128)}', space=vmem, size = 0x12000, scoped, tag = 'internal scratch']
  #allocation2 [shape = 'f32[1]{0:T(128)S(6)}', space=smem, size = 0x200, scoped, tag = 'scoped memory for q_conv_seq_branch.4']
  %s0 = inlined_call_operand.<no memory space> [shape: f32[1], index: 0, kind: input, shape index: {}]
  %s1 = inlined_call_operand.vmem [shape: f32[2,18,18,128], index: 1, kind: input, shape index: {}]
  %s2 = inlined_call_operand.vmem [shape: bf16[9,128,128], index: 2, kind: input, shape index: {}]
  %s3 = inlined_call_operand.vmem [shape: f32[1,128], index: 3, kind: input, shape index: {}]
  %s4 = inlined_call_operand.vmem [shape: f32[1,128], index: 4, kind: input, shape index: {}]
  %s5 = inlined_call_operand.vmem [shape: f32[2,16,16,128], index: 5, kind: output, shape index: {0}]
  %s6 = inlined_call_operand.vmem [shape: f32[2,1,8,128], index: 6, kind: output, shape index: {1}]
  %7 = xla_tuple %s5, %s6
  %s8 = sld [smem:[#allocation0]]
  $region61: #{q_conv_seq_branch.4} parent=0
    _
  %s10 = ssub.s32 1, %s8
  %s11 = scalar_select 0, %s10, %s8
  %12 = sst [smem:[#allocation2]] %s0
  loop: start=0, step=1, limit=4
  $region2: #{q_conv_seq_branch.4} parent=0 // loop_pre_header
    _
  $region3: #{q_conv_seq_branch.4} parent=0 // loop_header
    %s14 = sphi 0, %s18
    %p15 = scmp.ge.s32.totalorder %s14, 4
    %s21 = sphi 0, %s33
    %s22 = sphi 0, %s29
    %s23 = sphi 0, %s21
    %s24 = sphi 0, %s22
    %s25 = sphi 0, %s23
    %s26 = sphi 0, %s24
    %s34 = sphi 0, %s34
    %s36 = sphi 0, %s34
    %s37 = sphi 0, %s36
    %s51 = sphi 0, %s37
    %s57 = sphi 0, %s59
    %s60 = sphi 0, %s57
    %s61 = sphi 0, %s60
    %s77 = sphi 0, %s61
    %s81 = sphi 0, %s81
    %s83 = sphi 0, %s81
    %s84 = sphi 0, %s83
    %s98 = sphi 0, %s84
    %s102 = sphi 0, %s102
    %s104 = sphi 0, %s102
    %s105 = sphi 0, %s104
    %s119 = sphi 0, %s105
    %s123 = sphi 0, %s123
    %s125 = sphi 0, %s123
    %s126 = sphi 0, %s125
    %s140 = sphi 0, %s126
    %s148 = sphi 0, %s150
    %s151 = sphi 0, %s148
    %s152 = sphi 0, %s151
    %s168 = sphi 0, %s152
    %s176 = sphi 0, %s178
    %s179 = sphi 0, %s176
    %s180 = sphi 0, %s179
    %s196 = sphi 0, %s180
  $region4: #{q_conv_seq_branch.4} parent=0 // loop_header_branch
    %17 = sbr.rel (%p15) target = $region8
  $region5: #{q_conv_seq_branch.4} parent=0 // loop_body
    %s19 = ssub.s32 %s14, 1
    %s20 = ssub.s32 %s14, 2
    %s27 = sadd.s32 1, %s22
    %p28 = scmp.ge.s32.totalorder %s27, 1
    %s29 = scalar_select %p28, 0, %s27
    %s30 = sadd.s32 1, %s21
    %s31 = scalar_select %p28, %s30, %s21
    %p32 = scmp.ge.s32.totalorder %s31, 2
    %s33 = scalar_select %p32, 0, %s31
    %s35 = sadd.s32 %s34, 1
    %p38 = scmp.eq.s32.totalorder %s14, 1
    %p39 = scmp.ne.s32.totalorder %s34, %s36
    %p40 = scmp.eq.s32.totalorder %s14, 0
    %p41 = por %p39, %p40
    %p42 = scmp.ne.s32.totalorder %s34, %s36
    %p43 = scmp.eq.s32.totalorder %s19, 1
    %p44 = por %p42, %p43
    %p45 = scmp.ne.s32.totalorder %s36, %s37
    %p46 = scmp.eq.s32.totalorder %s19, 0
    %p47 = por %p45, %p46
    %p48 = scmp.ne.s32.totalorder %s36, %s37
    %p49 = scmp.eq.s32.totalorder %s20, 1
    %p50 = por %p48, %p49
    %p52 = scmp.ne.s32.totalorder %s37, %s51
    %p53 = scmp.eq.s32.totalorder %s20, 0
    %p54 = por %p52, %p53
    %s55 = ssub.s32 %s21, %s33
    %p56 = scmp.eq.s32.totalorder %s55, 0
    %s58 = sadd.s32 %s57, 1
    %s59 = scalar_select %p56, %s57, %s58
    %p62 = pneg %p56
    %p63 = scmp.eq.s32.totalorder %s14, 1
    %p64 = por %p62, %p63
    %p65 = scmp.ne.s32.totalorder %s57, %s60
    %p66 = scmp.eq.s32.totalorder %s14, 0
    %p67 = por %p65, %p66
    %p68 = scmp.ne.s32.totalorder %s57, %s60
    %p69 = scmp.eq.s32.totalorder %s19, 1
    %p70 = por %p68, %p69
    %p71 = scmp.ne.s32.totalorder %s60, %s61
    %p72 = scmp.eq.s32.totalorder %s19, 0
    %p73 = por %p71, %p72
    %p74 = scmp.ne.s32.totalorder %s60, %s61
    %p75 = scmp.eq.s32.totalorder %s20, 1
    %p76 = por %p74, %p75
    %p78 = scmp.ne.s32.totalorder %s61, %s77
    %p79 = scmp.eq.s32.totalorder %s20, 0
    %p80 = por %p78, %p79
    %s82 = sadd.s32 %s81, 1
    %p85 = scmp.eq.s32.totalorder %s14, 1
    %p86 = scmp.ne.s32.totalorder %s81, %s83
    %p87 = scmp.eq.s32.totalorder %s14, 0
    %p88 = por %p86, %p87
    %p89 = scmp.ne.s32.totalorder %s81, %s83
    %p90 = scmp.eq.s32.totalorder %s19, 1
    %p91 = por %p89, %p90
    %p92 = scmp.ne.s32.totalorder %s83, %s84
    %p93 = scmp.eq.s32.totalorder %s19, 0
    %p94 = por %p92, %p93
    %p95 = scmp.ne.s32.totalorder %s83, %s84
    %p96 = scmp.eq.s32.totalorder %s20, 1
    %p97 = por %p95, %p96
    %p99 = scmp.ne.s32.totalorder %s84, %s98
    %p100 = scmp.eq.s32.totalorder %s20, 0
    %p101 = por %p99, %p100
    %s103 = sadd.s32 %s102, 1
    %p106 = scmp.eq.s32.totalorder %s14, 1
    %p107 = scmp.ne.s32.totalorder %s102, %s104
    %p108 = scmp.eq.s32.totalorder %s14, 0
    %p109 = por %p107, %p108
    %p110 = scmp.ne.s32.totalorder %s102, %s104
    %p111 = scmp.eq.s32.totalorder %s19, 1
    %p112 = por %p110, %p111
    %p113 = scmp.ne.s32.totalorder %s104, %s105
    %p114 = scmp.eq.s32.totalorder %s19, 0
    %p115 = por %p113, %p114
    %p116 = scmp.ne.s32.totalorder %s104, %s105
    %p117 = scmp.eq.s32.totalorder %s20, 1
    %p118 = por %p116, %p117
    %p120 = scmp.ne.s32.totalorder %s105, %s119
    %p121 = scmp.eq.s32.totalorder %s20, 0
    %p122 = por %p120, %p121
    %s124 = sadd.s32 %s123, 1
    %p127 = scmp.eq.s32.totalorder %s14, 1
    %p128 = scmp.ne.s32.totalorder %s123, %s125
    %p129 = scmp.eq.s32.totalorder %s14, 0
    %p130 = por %p128, %p129
    %p131 = scmp.ne.s32.totalorder %s123, %s125
    %p132 = scmp.eq.s32.totalorder %s19, 1
    %p133 = por %p131, %p132
    %p134 = scmp.ne.s32.totalorder %s125, %s126
    %p135 = scmp.eq.s32.totalorder %s19, 0
    %p136 = por %p134, %p135
    %p137 = scmp.ne.s32.totalorder %s125, %s126
    %p138 = scmp.eq.s32.totalorder %s20, 1
    %p139 = por %p137, %p138
    %p141 = scmp.ne.s32.totalorder %s126, %s140
    %p142 = scmp.eq.s32.totalorder %s20, 0
    %p143 = por %p141, %p142
    %s144 = ssub.s32 %s21, %s33
    %s145 = ssub.s32 %s22, %s29
    %s146 = sor.u32 %s144, %s145
    %p147 = scmp.eq.s32.totalorder %s146, 0
    %s149 = sadd.s32 %s148, 1
    %s150 = scalar_select %p147, %s148, %s149
    %p153 = pneg %p147
    %p154 = scmp.eq.s32.totalorder %s14, 1
    %p155 = por %p153, %p154
    %p156 = scmp.ne.s32.totalorder %s148, %s151
    %p157 = scmp.eq.s32.totalorder %s14, 0
    %p158 = por %p156, %p157
    %p159 = scmp.ne.s32.totalorder %s148, %s151
    %p160 = scmp.eq.s32.totalorder %s19, 1
    %p161 = por %p159, %p160
    %p162 = scmp.ne.s32.totalorder %s151, %s152
    %p163 = scmp.eq.s32.totalorder %s19, 0
    %p164 = por %p162, %p163
    %p165 = scmp.ne.s32.totalorder %s151, %s152
    %p166 = scmp.eq.s32.totalorder %s20, 1
    %p167 = por %p165, %p166
    %p169 = scmp.ne.s32.totalorder %s152, %s168
    %p170 = scmp.eq.s32.totalorder %s20, 0
    %p171 = por %p169, %p170
    %s172 = ssub.s32 %s21, %s33
    %s173 = ssub.s32 %s22, %s29
    %s174 = sor.u32 %s172, %s173
    %p175 = scmp.eq.s32.totalorder %s174, 0
    %s177 = sadd.s32 %s176, 1
    %s178 = scalar_select %p175, %s176, %s177
    %p181 = pneg %p175
    %p182 = scmp.eq.s32.totalorder %s14, 1
    %p183 = por %p181, %p182
    %p184 = scmp.ne.s32.totalorder %s176, %s179
    %p185 = scmp.eq.s32.totalorder %s14, 0
    %p186 = por %p184, %p185
    %p187 = scmp.ne.s32.totalorder %s176, %s179
    %p188 = scmp.eq.s32.totalorder %s19, 1
    %p189 = por %p187, %p188
    %p190 = scmp.ne.s32.totalorder %s179, %s180
    %p191 = scmp.eq.s32.totalorder %s19, 0
    %p192 = por %p190, %p191
    %p193 = scmp.ne.s32.totalorder %s179, %s180
    %p194 = scmp.eq.s32.totalorder %s20, 1
    %p195 = por %p193, %p194
    %p197 = scmp.ne.s32.totalorder %s180, %s196
    %p198 = scmp.eq.s32.totalorder %s20, 0
    %p199 = por %p197, %p198
    %p200 = scmp.le.s32.totalorder 1, %s14
    %p201 = scmp.lt.s32.totalorder %s14, 3
    %p202 = pnand %p200, %p201
    %p203 = pneg %p202
    // Predicated region
    $region9: #{q_conv_seq_branch.4} parent=5 // pred_check
      _
    $region10: #{q_conv_seq_branch.4} parent=5 // pred_check_branch
      %205 = sbr.rel (%p202) target = $region12
    $region11: #{q_conv_seq_branch.4} parent=5 // pred_region
      %s206 = ssub.s32 %s14, 1
      // Predicated region
      $region13: #{q_conv_seq_branch.4} parent=11 // pred_check
        %p207 = pneg %p47
      $region14: #{q_conv_seq_branch.4} parent=11 // pred_check_branch
        %209 = sbr.rel (%p207) target = $region16
      $region15: #{q_conv_seq_branch.4} parent=11 // pred_region
        _
      $region16: #{q_conv_seq_branch.4} parent=11 // pred_fallthru
        _
      // Predicated region
      $region17: #{q_conv_seq_branch.4} parent=11 // pred_check
        %p210 = pneg %p94
      $region18: #{q_conv_seq_branch.4} parent=11 // pred_check_branch
        %212 = sbr.rel (%p210) target = $region20
      $region19: #{q_conv_seq_branch.4} parent=11 // pred_region
        _
      $region20: #{q_conv_seq_branch.4} parent=11 // pred_fallthru
        _
      // Predicated region
      $region21: #{q_conv_seq_branch.4} parent=11 // pred_check
        %p213 = pneg %p115
      $region22: #{q_conv_seq_branch.4} parent=11 // pred_check_branch
        %215 = sbr.rel (%p213) target = $region24
      $region23: #{q_conv_seq_branch.4} parent=11 // pred_region
        _
      $region24: #{q_conv_seq_branch.4} parent=11 // pred_fallthru
        _
      // Predicated region
      $region25: #{q_conv_seq_branch.4} parent=11 // pred_check
        %p216 = pneg %p136
      $region26: #{q_conv_seq_branch.4} parent=11 // pred_check_branch
        %218 = sbr.rel (%p216) target = $region28
      $region27: #{q_conv_seq_branch.4} parent=11 // pred_region
        _
      $region28: #{q_conv_seq_branch.4} parent=11 // pred_fallthru
        _
    $region12: #{q_conv_seq_branch.4} parent=5 // pred_fallthru
      _
    %p219 = scmp.lt.s32.totalorder %s14, 2
    // Predicated region
    $region29: #{q_conv_seq_branch.4} parent=5 // pred_check
      %p220 = pneg %p219
    $region30: #{q_conv_seq_branch.4} parent=5 // pred_check_branch
      %222 = sbr.rel (%p220) target = $region32
    $region31: #{q_conv_seq_branch.4} parent=5 // pred_region
      // Predicated region
      $region33: #{q_conv_seq_branch.4} parent=31 // pred_check
        %p223 = pneg %p67
      $region34: #{q_conv_seq_branch.4} parent=31 // pred_check_branch
        %225 = sbr.rel (%p223) target = $region36
      $region35: #{q_conv_seq_branch.4} parent=31 // pred_region
        %p226 = scmp.lt.s32.totalorder %s21, 1
        %s227 = scalar_select %p226, %s21, 1
        %s228 = smul.addr %s227, 54
        %s229 = smul.addr %s228, 8
        %s230 = scalar_lea.vmem %s1, %s229
      $region36: #{q_conv_seq_branch.4} parent=31 // pred_fallthru
        _
    $region32: #{q_conv_seq_branch.4} parent=5 // pred_fallthru
      _
    %p231 = scmp.le.s32.totalorder 1, %s14
    %p232 = scmp.lt.s32.totalorder %s14, 3
    %p233 = pnand %p231, %p232
    %p234 = pneg %p233
    // Predicated region
    $region37: #{q_conv_seq_branch.4} parent=5 // pred_check
      _
    $region38: #{q_conv_seq_branch.4} parent=5 // pred_check_branch
      %236 = sbr.rel (%p233) target = $region40
    $region39: #{q_conv_seq_branch.4} parent=5 // pred_region
      %s237 = ssub.s32 %s14, 1
      %p238 = pneg %p47
      %p239 = pneg %p44
      %p240 = scmp.lt.s32.totalorder %s23, 1
      %s241 = scalar_select %p240, %s23, 1
      %s242 = smul.addr %s241, 54
      %s243 = smul.addr %s242, 8
      %s244 = scalar_lea.vmem %s1, %s243
      %p245 = pneg %p73
      %p246 = pneg %p70
      %p247 = pneg %p94
      %p248 = pneg %p91
      %p249 = pneg %p115
      %p250 = pneg %p112
      %p251 = pneg %p136
      %p252 = pneg %p133
      %p253 = pneg %p164
      %p254 = pneg %p161
      %s255 = smul.u32 16, %s24
      %p256 = scmp.lt.s32.totalorder %s23, 1
      %s257 = scalar_select %p256, %s23, 1
      %p258 = scmp.lt.s32.totalorder %s255, 15
      %s259 = scalar_select %p258, %s255, 15
      %s260 = smul.addr %s259, 2
      %s261 = smul.addr %s257, 32
      %s262 = sadd.s32 %s260, %s261
      %s263 = smul.addr %s262, 8
      %s264 = scalar_lea.vmem %s5, %s263
      %p265 = pneg %p192
      %p266 = pneg %p189
      %p267 = scmp.lt.s32.totalorder %s23, 1
      %s268 = scalar_select %p267, %s23, 1
      %p269 = scmp.lt.s32.totalorder %s24, 0
      %s270 = scalar_select %p269, %s24, 0
      %s271 = sadd.s32 %s270, %s268
      %s272 = smul.addr %s271, 8
      %s273 = scalar_lea.vmem %s6, %s272
      %p274 = scmp.lt.s32.totalorder %s23, 1
      %s275 = scalar_select %p274, %s23, 1
      %s276 = smul.addr %s275, 54
      %s277 = smul.addr %s276, 8
      %s278 = scalar_lea.vmem %s1, %s277
      %s279 = smul.u32 16, %s24
      %p280 = scmp.lt.s32.totalorder %s23, 1
      %s281 = scalar_select %p280, %s23, 1
      %p282 = scmp.lt.s32.totalorder %s279, 15
      %s283 = scalar_select %p282, %s279, 15
      %s284 = smul.addr %s283, 2
      %s285 = smul.addr %s281, 32
      %s286 = sadd.s32 %s284, %s285
      %s287 = smul.addr %s286, 8
      %s288 = scalar_lea.vmem %s5, %s287
      %s289 = smul.u32 16, %s24
      %p290 = scmp.lt.s32.totalorder %s23, 1
      %s291 = scalar_select %p290, %s23, 1
      %p292 = scmp.lt.s32.totalorder %s24, 0
      %s293 = scalar_select %p292, %s24, 0
      %s294 = sadd.s32 %s293, %s291
      %s295 = smul.addr %s294, 8
      %s296 = scalar_lea.vmem %s6, %s295
      %s298 = sld [smem:[#allocation2]]
      %s299 = smul.u32 %s24, 16
      %s300 = smul.u32 %s299, 24
      %s301 = scalar_lea.vmem %s278, %s300
      %v302 = vld [vmem:[%s301] sm:$0xff]
      %v303 = vld [vmem:[%s301 + $0x8] sm:$0xff]
      %v304 = vld [vmem:[%s301 + $0x10] sm:$0x3]
      %v305 = vld [vmem:[%s301 + $0x18] sm:$0xff]
      %v306 = vld [vmem:[%s301 + $0x20] sm:$0xff]
      %v307 = vld [vmem:[%s301 + $0x28] sm:$0x3]
      %v308 = vld [vmem:[%s301 + $0x30] sm:$0xff]
      %v309 = vld [vmem:[%s301 + $0x38] sm:$0xff]
      %v310 = vld [vmem:[%s301 + $0x40] sm:$0x3]
      %v311 = vld [vmem:[%s301 + $0x48] sm:$0xff]
      %v312 = vld [vmem:[%s301 + $0x50] sm:$0xff]
      %v313 = vld [vmem:[%s301 + $0x58] sm:$0x3]
      %v314 = vld [vmem:[%s301 + $0x60] sm:$0xff]
      %v315 = vld [vmem:[%s301 + $0x68] sm:$0xff]
      %v316 = vld [vmem:[%s301 + $0x70] sm:$0x3]
      %v317 = vld [vmem:[%s301 + $0x78] sm:$0xff]
      %v318 = vld [vmem:[%s301 + $0x80] sm:$0xff]
      %v319 = vld [vmem:[%s301 + $0x88] sm:$0x3]
      %v320 = vld [vmem:[%s301 + $0x90] sm:$0xff]
      %v321 = vld [vmem:[%s301 + $0x98] sm:$0xff]
      %v322 = vld [vmem:[%s301 + $0xa0] sm:$0x3]
      %v323 = vld [vmem:[%s301 + $0xa8] sm:$0xff]
      %v324 = vld [vmem:[%s301 + $0xb0] sm:$0xff]
      %v325 = vld [vmem:[%s301 + $0xb8] sm:$0x3]
      %v326 = vld [vmem:[%s301 + $0xc0] sm:$0xff]
      %v327 = vld [vmem:[%s301 + $0xc8] sm:$0xff]
      %v328 = vld [vmem:[%s301 + $0xd0] sm:$0x3]
      %v329 = vld [vmem:[%s301 + $0xd8] sm:$0xff]
      %v330 = vld [vmem:[%s301 + $0xe0] sm:$0xff]
      %v331 = vld [vmem:[%s301 + $0xe8] sm:$0x3]
      %v332 = vld [vmem:[%s301 + $0xf0] sm:$0xff]
      %v333 = vld [vmem:[%s301 + $0xf8] sm:$0xff]
      %v334 = vld [vmem:[%s301 + $0x100] sm:$0x3]
      %v335 = vld [vmem:[%s301 + $0x108] sm:$0xff]
      %v336 = vld [vmem:[%s301 + $0x110] sm:$0xff]
      %v337 = vld [vmem:[%s301 + $0x118] sm:$0x3]
      %v338 = vld [vmem:[%s301 + $0x120] sm:$0xff]
      %v339 = vld [vmem:[%s301 + $0x128] sm:$0xff]
      %v340 = vld [vmem:[%s301 + $0x130] sm:$0x3]
      %v341 = vld [vmem:[%s301 + $0x138] sm:$0xff]
      %v342 = vld [vmem:[%s301 + $0x140] sm:$0xff]
      %v343 = vld [vmem:[%s301 + $0x148] sm:$0x3]
      %v344 = vld [vmem:[%s301 + $0x150] sm:$0xff]
      %v345 = vld [vmem:[%s301 + $0x158] sm:$0xff]
      %v346 = vld [vmem:[%s301 + $0x160] sm:$0x3]
      %v347 = vld [vmem:[%s301 + $0x168] sm:$0xff]
      %v348 = vld [vmem:[%s301 + $0x170] sm:$0xff]
      %v349 = vld [vmem:[%s301 + $0x178] sm:$0x3]
      %v350 = vld [vmem:[%s301 + $0x180] sm:$0xff]
      %v351 = vld [vmem:[%s301 + $0x188] sm:$0xff]
      %v352 = vld [vmem:[%s301 + $0x190] sm:$0x3]
      %v353 = vld [vmem:[%s301 + $0x198] sm:$0xff]
      %v354 = vld [vmem:[%s301 + $0x1a0] sm:$0xff]
      %v355 = vld [vmem:[%s301 + $0x1a8] sm:$0x3]
      %v356 = vstv %s298
      %v357 = vmul.f32 %v302, %v356
      %v358 = vmul.f32 %v303, %v356
      %v359 = vmul.f32 %v304, %v356
      %v360 = vmul.f32 %v305, %v356
      %v361 = vmul.f32 %v306, %v356
      %v362 = vmul.f32 %v307, %v356
      %v363 = vmul.f32 %v308, %v356
      %v364 = vmul.f32 %v309, %v356
      %v365 = vmul.f32 %v310, %v356
      %v366 = vmul.f32 %v311, %v356
      %v367 = vmul.f32 %v312, %v356
      %v368 = vmul.f32 %v313, %v356
      %v369 = vmul.f32 %v314, %v356
      %v370 = vmul.f32 %v315, %v356
      %v371 = vmul.f32 %v316, %v356
      %v372 = vmul.f32 %v317, %v356
      %v373 = vmul.f32 %v318, %v356
      %v374 = vmul.f32 %v319, %v356
      %v375 = vmul.f32 %v320, %v356
      %v376 = vmul.f32 %v321, %v356
      %v377 = vmul.f32 %v322, %v356
      %v378 = vmul.f32 %v323, %v356
      %v379 = vmul.f32 %v324, %v356
      %v380 = vmul.f32 %v325, %v356
      %v381 = vmul.f32 %v326, %v356
      %v382 = vmul.f32 %v327, %v356
      %v383 = vmul.f32 %v328, %v356
      %v384 = vmul.f32 %v329, %v356
      %v385 = vmul.f32 %v330, %v356
      %v386 = vmul.f32 %v331, %v356
      %v387 = vmul.f32 %v332, %v356
      %v388 = vmul.f32 %v333, %v356
      %v389 = vmul.f32 %v334, %v356
      %v390 = vmul.f32 %v335, %v356
      %v391 = vmul.f32 %v336, %v356
      %v392 = vmul.f32 %v337, %v356
      %v393 = vmul.f32 %v338, %v356
      %v394 = vmul.f32 %v339, %v356
      %v395 = vmul.f32 %v340, %v356
      %v396 = vmul.f32 %v341, %v356
      %v397 = vmul.f32 %v342, %v356
      %v398 = vmul.f32 %v343, %v356
      %v399 = vmul.f32 %v344, %v356
      %v400 = vmul.f32 %v345, %v356
      %v401 = vmul.f32 %v346, %v356
      %v402 = vmul.f32 %v347, %v356
      %v403 = vmul.f32 %v348, %v356
      %v404 = vmul.f32 %v349, %v356
      %v405 = vmul.f32 %v350, %v356
      %v406 = vmul.f32 %v351, %v356
      %v407 = vmul.f32 %v352, %v356
      %v408 = vmul.f32 %v353, %v356
      %v409 = vmul.f32 %v354, %v356
      %v410 = vmul.f32 %v355, %v356
      %v411 = vround.ne.pseudo %v357
      %v412 = vround.ne.pseudo %v358
      %v413 = vround.ne.pseudo %v359
      %v414 = vround.ne.pseudo %v360
      %v415 = vround.ne.pseudo %v361
      %v416 = vround.ne.pseudo %v362
      %v417 = vround.ne.pseudo %v363
      %v418 = vround.ne.pseudo %v364
      %v419 = vround.ne.pseudo %v365
      %v420 = vround.ne.pseudo %v366
      %v421 = vround.ne.pseudo %v367
      %v422 = vround.ne.pseudo %v368
      %v423 = vround.ne.pseudo %v369
      %v424 = vround.ne.pseudo %v370
      %v425 = vround.ne.pseudo %v371
      %v426 = vround.ne.pseudo %v372
      %v427 = vround.ne.pseudo %v373
      %v428 = vround.ne.pseudo %v374
      %v429 = vround.ne.pseudo %v375
      %v430 = vround.ne.pseudo %v376
      %v431 = vround.ne.pseudo %v377
      %v432 = vround.ne.pseudo %v378
      %v433 = vround.ne.pseudo %v379
      %v434 = vround.ne.pseudo %v380
      %v435 = vround.ne.pseudo %v381
      %v436 = vround.ne.pseudo %v382
      %v437 = vround.ne.pseudo %v383
      %v438 = vround.ne.pseudo %v384
      %v439 = vround.ne.pseudo %v385
      %v440 = vround.ne.pseudo %v386
      %v441 = vround.ne.pseudo %v387
      %v442 = vround.ne.pseudo %v388
      %v443 = vround.ne.pseudo %v389
      %v444 = vround.ne.pseudo %v390
      %v445 = vround.ne.pseudo %v391
      %v446 = vround.ne.pseudo %v392
      %v447 = vround.ne.pseudo %v393
      %v448 = vround.ne.pseudo %v394
      %v449 = vround.ne.pseudo %v395
      %v450 = vround.ne.pseudo %v396
      %v451 = vround.ne.pseudo %v397
      %v452 = vround.ne.pseudo %v398
      %v453 = vround.ne.pseudo %v399
      %v454 = vround.ne.pseudo %v400
      %v455 = vround.ne.pseudo %v401
      %v456 = vround.ne.pseudo %v402
      %v457 = vround.ne.pseudo %v403
      %v458 = vround.ne.pseudo %v404
      %v459 = vround.ne.pseudo %v405
      %v460 = vround.ne.pseudo %v406
      %v461 = vround.ne.pseudo %v407
      %v462 = vround.ne.pseudo %v408
      %v463 = vround.ne.pseudo %v409
      %v464 = vround.ne.pseudo %v410
      %v465 = vmax.f32 %v411, -127.0
      %v466 = vmax.f32 %v412, -127.0
      %v467 = vmax.f32 %v413, -127.0
      %v468 = vmax.f32 %v414, -127.0
      %v469 = vmax.f32 %v415, -127.0
      %v470 = vmax.f32 %v416, -127.0
      %v471 = vmax.f32 %v417, -127.0
      %v472 = vmax.f32 %v418, -127.0
      %v473 = vmax.f32 %v419, -127.0
      %v474 = vmax.f32 %v420, -127.0
      %v475 = vmax.f32 %v421, -127.0
      %v476 = vmax.f32 %v422, -127.0
      %v477 = vmax.f32 %v423, -127.0
      %v478 = vmax.f32 %v424, -127.0
      %v479 = vmax.f32 %v425, -127.0
      %v480 = vmax.f32 %v426, -127.0
      %v481 = vmax.f32 %v427, -127.0
      %v482 = vmax.f32 %v428, -127.0
      %v483 = vmax.f32 %v429, -127.0
      %v484 = vmax.f32 %v430, -127.0
      %v485 = vmax.f32 %v431, -127.0
      %v486 = vmax.f32 %v432, -127.0
      %v487 = vmax.f32 %v433, -127.0
      %v488 = vmax.f32 %v434, -127.0
      %v489 = vmax.f32 %v435, -127.0
      %v490 = vmax.f32 %v436, -127.0
      %v491 = vmax.f32 %v437, -127.0
      %v492 = vmax.f32 %v438, -127.0
      %v493 = vmax.f32 %v439, -127.0
      %v494 = vmax.f32 %v440, -127.0
      %v495 = vmax.f32 %v441, -127.0
      %v496 = vmax.f32 %v442, -127.0
      %v497 = vmax.f32 %v443, -127.0
      %v498 = vmax.f32 %v444, -127.0
      %v499 = vmax.f32 %v445, -127.0
      %v500 = vmax.f32 %v446, -127.0
      %v501 = vmax.f32 %v447, -127.0
      %v502 = vmax.f32 %v448, -127.0
      %v503 = vmax.f32 %v449, -127.0
      %v504 = vmax.f32 %v450, -127.0
      %v505 = vmax.f32 %v451, -127.0
      %v506 = vmax.f32 %v452, -127.0
      %v507 = vmax.f32 %v453, -127.0
      %v508 = vmax.f32 %v454, -127.0
      %v509 = vmax.f32 %v455, -127.0
      %v510 = vmax.f32 %v456, -127.0
      %v511 = vmax.f32 %v457, -127.0
      %v512 = vmax.f32 %v458, -127.0
      %v513 = vmax.f32 %v459, -127.0
      %v514 = vmax.f32 %v460, -127.0
      %v515 = vmax.f32 %v461, -127.0
      %v516 = vmax.f32 %v462, -127.0
      %v517 = vmax.f32 %v463, -127.0
      %v518 = vmax.f32 %v464, -127.0
      %v519 = vmin.f32 %v465, 127.0
      %v520 = vmin.f32 %v466, 127.0
      %v521 = vmin.f32 %v467, 127.0
      %v522 = vmin.f32 %v468, 127.0
      %v523 = vmin.f32 %v469, 127.0
      %v524 = vmin.f32 %v470, 127.0
      %v525 = vmin.f32 %v471, 127.0
      %v526 = vmin.f32 %v472, 127.0
      %v527 = vmin.f32 %v473, 127.0
      %v528 = vmin.f32 %v474, 127.0
      %v529 = vmin.f32 %v475, 127.0
      %v530 = vmin.f32 %v476, 127.0
      %v531 = vmin.f32 %v477, 127.0
      %v532 = vmin.f32 %v478, 127.0
      %v533 = vmin.f32 %v479, 127.0
      %v534 = vmin.f32 %v480, 127.0
      %v535 = vmin.f32 %v481, 127.0
      %v536 = vmin.f32 %v482, 127.0
      %v537 = vmin.f32 %v483, 127.0
      %v538 = vmin.f32 %v484, 127.0
      %v539 = vmin.f32 %v485, 127.0
      %v540 = vmin.f32 %v486, 127.0
      %v541 = vmin.f32 %v487, 127.0
      %v542 = vmin.f32 %v488, 127.0
      %v543 = vmin.f32 %v489, 127.0
      %v544 = vmin.f32 %v490, 127.0
      %v545 = vmin.f32 %v491, 127.0
      %v546 = vmin.f32 %v492, 127.0
      %v547 = vmin.f32 %v493, 127.0
      %v548 = vmin.f32 %v494, 127.0
      %v549 = vmin.f32 %v495, 127.0
      %v550 = vmin.f32 %v496, 127.0
      %v551 = vmin.f32 %v497, 127.0
      %v552 = vmin.f32 %v498, 127.0
      %v553 = vmin.f32 %v499, 127.0
      %v554 = vmin.f32 %v500, 127.0
      %v555 = vmin.f32 %v501, 127.0
      %v556 = vmin.f32 %v502, 127.0
      %v557 = vmin.f32 %v503, 127.0
      %v558 = vmin.f32 %v504, 127.0
      %v559 = vmin.f32 %v505, 127.0
      %v560 = vmin.f32 %v506, 127.0
      %v561 = vmin.f32 %v507, 127.0
      %v562 = vmin.f32 %v508, 127.0
      %v563 = vmin.f32 %v509, 127.0
      %v564 = vmin.f32 %v510, 127.0
      %v565 = vmin.f32 %v511, 127.0
      %v566 = vmin.f32 %v512, 127.0
      %v567 = vmin.f32 %v513, 127.0
      %v568 = vmin.f32 %v514, 127.0
      %v569 = vmin.f32 %v515, 127.0
      %v570 = vmin.f32 %v516, 127.0
      %v571 = vmin.f32 %v517, 127.0
      %v572 = vmin.f32 %v518, 127.0
      %v573 = vpack.c.bf16 %v520, %v519
      %v574 = vpack.c.bf16 %v523, %v522
      %v575 = vpack.c.bf16 %v526, %v525
      %v576 = vpack.c.bf16 %v529, %v528
      %v577 = vpack.c.bf16 %v532, %v531
      %v578 = vpack.c.bf16 %v535, %v534
      %v579 = vpack.c.bf16 %v538, %v537
      %v580 = vpack.c.bf16 %v541, %v540
      %v581 = vpack.c.bf16 %v544, %v543
      %v582 = vpack.c.bf16 %v547, %v546
      %v583 = vpack.c.bf16 %v550, %v549
      %v584 = vpack.c.bf16 %v553, %v552
      %v585 = vpack.c.bf16 %v556, %v555
      %v586 = vpack.c.bf16 %v559, %v558
      %v587 = vpack.c.bf16 %v562, %v561
      %v588 = vpack.c.bf16 %v565, %v564
      %v589 = vld [vmem:[%s2] sm:$0xf]
      %v590 = vld [vmem:[%s2 + $0x4] sm:$0xf]
      %v591 = vld [vmem:[%s2 + $0x8] sm:$0xf]
      %v592 = vld [vmem:[%s2 + $0xc] sm:$0xf]
      %v593 = vld [vmem:[%s2 + $0x10] sm:$0xf]
      %v594 = vld [vmem:[%s2 + $0x14] sm:$0xf]
      %v595 = vld [vmem:[%s2 + $0x18] sm:$0xf]
      %v596 = vld [vmem:[%s2 + $0x1c] sm:$0xf]
      %v597 = vld [vmem:[%s2 + $0x20] sm:$0xf]
      %v598 = vld [vmem:[%s2 + $0x24] sm:$0xf]
      %v599 = vld [vmem:[%s2 + $0x28] sm:$0xf]
      %v600 = vld [vmem:[%s2 + $0x2c] sm:$0xf]
      %v601 = vld [vmem:[%s2 + $0x30] sm:$0xf]
      %v602 = vld [vmem:[%s2 + $0x34] sm:$0xf]
      %v603 = vld [vmem:[%s2 + $0x38] sm:$0xf]
      %v604 = vld [vmem:[%s2 + $0x3c] sm:$0xf]
      %vm653 = vcmask 1046528
      %v654 = vrot.slane %v519, 1
      %v655 = vrot.slane %v520, 1
      %v656 = vsel %vm653, %v654, %v655
      %v657 = vrot.slane %v521, 1
      %v658 = vsel %vm653, %v655, %v657
      %v659 = vrot.slane %v522, 1
      %v660 = vrot.slane %v523, 1
      %v661 = vsel %vm653, %v659, %v660
      %v662 = vrot.slane %v524, 1
      %v663 = vsel %vm653, %v660, %v662
      %v664 = vrot.slane %v525, 1
      %v665 = vrot.slane %v526, 1
      %v666 = vsel %vm653, %v664, %v665
      %v667 = vrot.slane %v527, 1
      %v668 = vsel %vm653, %v665, %v667
      %v669 = vrot.slane %v528, 1
      %v670 = vrot.slane %v529, 1
      %v671 = vsel %vm653, %v669, %v670
      %v672 = vrot.slane %v530, 1
      %v673 = vsel %vm653, %v670, %v672
      %v674 = vrot.slane %v531, 1
      %v675 = vrot.slane %v532, 1
      %v676 = vsel %vm653, %v674, %v675
      %v677 = vrot.slane %v533, 1
      %v678 = vsel %vm653, %v675, %v677
      %v679 = vrot.slane %v534, 1
      %v680 = vrot.slane %v535, 1
      %v681 = vsel %vm653, %v679, %v680
      %v682 = vrot.slane %v536, 1
      %v683 = vsel %vm653, %v680, %v682
      %v684 = vrot.slane %v537, 1
      %v685 = vrot.slane %v538, 1
      %v686 = vsel %vm653, %v684, %v685
      %v687 = vrot.slane %v539, 1
      %v688 = vsel %vm653, %v685, %v687
      %v689 = vrot.slane %v540, 1
      %v690 = vrot.slane %v541, 1
      %v691 = vsel %vm653, %v689, %v690
      %v692 = vrot.slane %v542, 1
      %v693 = vsel %vm653, %v690, %v692
      %v694 = vrot.slane %v543, 1
      %v695 = vrot.slane %v544, 1
      %v696 = vsel %vm653, %v694, %v695
      %v697 = vrot.slane %v545, 1
      %v698 = vsel %vm653, %v695, %v697
      %v699 = vrot.slane %v546, 1
      %v700 = vrot.slane %v547, 1
      %v701 = vsel %vm653, %v699, %v700
      %v702 = vrot.slane %v548, 1
      %v703 = vsel %vm653, %v700, %v702
      %v704 = vrot.slane %v549, 1
      %v705 = vrot.slane %v550, 1
      %v706 = vsel %vm653, %v704, %v705
      %v707 = vrot.slane %v551, 1
      %v708 = vsel %vm653, %v705, %v707
      %v709 = vrot.slane %v552, 1
      %v710 = vrot.slane %v553, 1
      %v711 = vsel %vm653, %v709, %v710
      %v712 = vrot.slane %v554, 1
      %v713 = vsel %vm653, %v710, %v712
      %v714 = vrot.slane %v555, 1
      %v715 = vrot.slane %v556, 1
      %v716 = vsel %vm653, %v714, %v715
      %v717 = vrot.slane %v557, 1
      %v718 = vsel %vm653, %v715, %v717
      %v719 = vrot.slane %v558, 1
      %v720 = vrot.slane %v559, 1
      %v721 = vsel %vm653, %v719, %v720
      %v722 = vrot.slane %v560, 1
      %v723 = vsel %vm653, %v720, %v722
      %v724 = vrot.slane %v561, 1
      %v725 = vrot.slane %v562, 1
      %v726 = vsel %vm653, %v724, %v725
      %v727 = vrot.slane %v563, 1
      %v728 = vsel %vm653, %v725, %v727
      %v729 = vrot.slane %v564, 1
      %v730 = vrot.slane %v565, 1
      %v731 = vsel %vm653, %v729, %v730
      %v732 = vrot.slane %v566, 1
      %v733 = vsel %vm653, %v730, %v732
      %v766 = vpack.c.bf16 %v658, %v656
      %v767 = vpack.c.bf16 %v663, %v661
      %v768 = vpack.c.bf16 %v668, %v666
      %v769 = vpack.c.bf16 %v673, %v671
      %v770 = vpack.c.bf16 %v678, %v676
      %v771 = vpack.c.bf16 %v683, %v681
      %v772 = vpack.c.bf16 %v688, %v686
      %v773 = vpack.c.bf16 %v693, %v691
      %v774 = vpack.c.bf16 %v698, %v696
      %v775 = vpack.c.bf16 %v703, %v701
      %v776 = vpack.c.bf16 %v708, %v706
      %v777 = vpack.c.bf16 %v713, %v711
      %v778 = vpack.c.bf16 %v718, %v716
      %v779 = vpack.c.bf16 %v723, %v721
      %v780 = vpack.c.bf16 %v728, %v726
      %v781 = vpack.c.bf16 %v733, %v731
      %s782 = scalar_lea.vmem %s2, 64
      %v783 = vld [vmem:[%s782] sm:$0xf]
      %v784 = vld [vmem:[%s782 + $0x4] sm:$0xf]
      %v785 = vld [vmem:[%s782 + $0x8] sm:$0xf]
      %v786 = vld [vmem:[%s782 + $0xc] sm:$0xf]
      %v787 = vld [vmem:[%s782 + $0x10] sm:$0xf]
      %v788 = vld [vmem:[%s782 + $0x14] sm:$0xf]
      %v789 = vld [vmem:[%s782 + $0x18] sm:$0xf]
      %v790 = vld [vmem:[%s782 + $0x1c] sm:$0xf]
      %v791 = vld [vmem:[%s782 + $0x20] sm:$0xf]
      %v792 = vld [vmem:[%s782 + $0x24] sm:$0xf]
      %v793 = vld [vmem:[%s782 + $0x28] sm:$0xf]
      %v794 = vld [vmem:[%s782 + $0x2c] sm:$0xf]
      %v795 = vld [vmem:[%s782 + $0x30] sm:$0xf]
      %v796 = vld [vmem:[%s782 + $0x34] sm:$0xf]
      %v797 = vld [vmem:[%s782 + $0x38] sm:$0xf]
      %v798 = vld [vmem:[%s782 + $0x3c] sm:$0xf]
      %v815 = vunpack.c.l.b16 %v783
      %v816 = vunpack.c.l.b16 %v784
      %v817 = vunpack.c.l.b16 %v785
      %v818 = vunpack.c.l.b16 %v786
      %v819 = vunpack.c.l.b16 %v787
      %v820 = vunpack.c.l.b16 %v788
      %v821 = vunpack.c.l.b16 %v789
      %v822 = vunpack.c.l.b16 %v790
      %v823 = vunpack.c.l.b16 %v791
      %v824 = vunpack.c.l.b16 %v792
      %v825 = vunpack.c.l.b16 %v793
      %v826 = vunpack.c.l.b16 %v794
      %v827 = vunpack.c.l.b16 %v795
      %v828 = vunpack.c.l.b16 %v796
      %v829 = vunpack.c.l.b16 %v797
      %v830 = vunpack.c.l.b16 %v798
      %v831 = vpack.c.b16 %v816, %v815
      %v832 = vpack.c.b16 %v818, %v817
      %v833 = vpack.c.b16 %v820, %v819
      %v834 = vpack.c.b16 %v822, %v821
      %v835 = vpack.c.b16 %v824, %v823
      %v836 = vpack.c.b16 %v826, %v825
      %v837 = vpack.c.b16 %v828, %v827
      %v838 = vpack.c.b16 %v830, %v829
      %847 = vmatprep.subr.bf16.mxu0 0
      %848 = vmatpush1.bf16.msra.mxu0 %v838
      %849 = vmatprep.subr.bf16.mxu0 0
      %850 = vmatpush1.bf16.msra.mxu0 %v837
      %851 = vmatprep.subr.bf16.mxu0 0
      %852 = vmatpush1.bf16.msra.mxu0 %v836
      %853 = vmatprep.subr.bf16.mxu0 0
      %854 = vmatpush1.bf16.msra.mxu0 %v835
      %855 = vmatprep.subr.bf16.mxu0 0
      %856 = vmatpush1.bf16.msra.mxu0 %v834
      %857 = vmatprep.subr.bf16.mxu0 0
      %858 = vmatpush1.bf16.msra.mxu0 %v833
      %859 = vmatprep.subr.bf16.mxu0 0
      %860 = vmatpush1.bf16.msra.mxu0 %v832
      %861 = vmatprep.subr.bf16.mxu0 0
      %862 = vmatpush1.bf16.msra.mxu0 %v831
      %863 = vmatprep.subr.bf16.mxu0 0
      %864 = vmatpush2.bf16.msra.mxu0 0
      %865 = vmatprep.subr.bf16.mxu0 0
      %866 = vmatpush2.bf16.msra.mxu0 0
      %867 = vmatprep.subr.bf16.mxu0 0
      %868 = vmatpush2.bf16.msra.mxu0 0
      %869 = vmatprep.subr.bf16.mxu0 0
      %870 = vmatpush2.bf16.msra.mxu0 0
      %871 = vmatprep.subr.bf16.mxu0 0
      %872 = vmatpush2.bf16.msra.mxu0 0
      %873 = vmatprep.subr.bf16.mxu0 0
      %874 = vmatpush2.bf16.msra.mxu0 0
      %875 = vmatprep.subr.bf16.mxu0 0
      %876 = vmatpush2.bf16.msra.mxu0 0
      %877 = vmatprep.subr.bf16.mxu0 0
      %878 = vmatpush2.bf16.msra.mxu0 0
      %879 = vmatprep.mubr.bf16.mxu0 0
      %880 = vmatmul.mubr.bf16.gmra.mxu0 %v766
      %v881 = vpop.f32.mrf.mxu0
      %v882 = vadd.f32 0.0, %v881
      %v883 = vpop.f32.mrf.mxu0
      %v884 = vpop.f32.mrf.mxu0
      %v885 = vadd.f32 0.0, %v884
      %v886 = vpop.f32.mrf.mxu0
      %887 = vmatprep.mubr.bf16.mxu0 0
      %888 = vmatmul.mubr.bf16.gmra.mxu0 %v767
      %v889 = vpop.f32.mrf.mxu0
      %v890 = vadd.f32 0.0, %v889
      %v891 = vpop.f32.mrf.mxu0
      %v892 = vpop.f32.mrf.mxu0
      %v893 = vadd.f32 0.0, %v892
      %v894 = vpop.f32.mrf.mxu0
      %895 = vmatprep.mubr.bf16.mxu0 0
      %896 = vmatmul.mubr.bf16.gmra.mxu0 %v768
      %v897 = vpop.f32.mrf.mxu0
      %v898 = vadd.f32 0.0, %v897
      %v899 = vpop.f32.mrf.mxu0
      %v900 = vpop.f32.mrf.mxu0
      %v901 = vadd.f32 0.0, %v900
      %v902 = vpop.f32.mrf.mxu0
      %903 = vmatprep.mubr.bf16.mxu0 0
      %904 = vmatmul.mubr.bf16.gmra.mxu0 %v769
      %v905 = vpop.f32.mrf.mxu0
      %v906 = vadd.f32 0.0, %v905
      %v907 = vpop.f32.mrf.mxu0
      %v908 = vpop.f32.mrf.mxu0
      %v909 = vadd.f32 0.0, %v908
      %v910 = vpop.f32.mrf.mxu0
      %911 = vmatprep.mubr.bf16.mxu0 0
      %912 = vmatmul.mubr.bf16.gmra.mxu0 %v770
      %v913 = vpop.f32.mrf.mxu0
      %v914 = vadd.f32 0.0, %v913
      %v915 = vpop.f32.mrf.mxu0
      %v916 = vpop.f32.mrf.mxu0
      %v917 = vadd.f32 0.0, %v916
      %v918 = vpop.f32.mrf.mxu0
      %919 = vmatprep.mubr.bf16.mxu0 0
      %920 = vmatmul.mubr.bf16.gmra.mxu0 %v771
      %v921 = vpop.f32.mrf.mxu0
      %v922 = vadd.f32 0.0, %v921
      %v923 = vpop.f32.mrf.mxu0
      %v924 = vpop.f32.mrf.mxu0
      %v925 = vadd.f32 0.0, %v924
      %v926 = vpop.f32.mrf.mxu0
      %927 = vmatprep.mubr.bf16.mxu0 0
      %928 = vmatmul.mubr.bf16.gmra.mxu0 %v772
      %v929 = vpop.f32.mrf.mxu0
      %v930 = vadd.f32 0.0, %v929
      %v931 = vpop.f32.mrf.mxu0
      %v932 = vpop.f32.mrf.mxu0
      %v933 = vadd.f32 0.0, %v932
      %v934 = vpop.f32.mrf.mxu0
      %935 = vmatprep.mubr.bf16.mxu0 0
      %936 = vmatmul.mubr.bf16.gmra.mxu0 %v773
      %v937 = vpop.f32.mrf.mxu0
      %v938 = vadd.f32 0.0, %v937
      %v939 = vpop.f32.mrf.mxu0
      %v940 = vpop.f32.mrf.mxu0
      %v941 = vadd.f32 0.0, %v940
      %v942 = vpop.f32.mrf.mxu0
      %943 = vmatprep.mubr.bf16.mxu0 0
      %944 = vmatmul.mubr.bf16.gmra.mxu0 %v774
      %v945 = vpop.f32.mrf.mxu0
      %v946 = vadd.f32 0.0, %v945
      %v947 = vpop.f32.mrf.mxu0
      %v948 = vpop.f32.mrf.mxu0
      %v949 = vadd.f32 0.0, %v948
      %v950 = vpop.f32.mrf.mxu0
      %951 = vmatprep.mubr.bf16.mxu0 0
      %952 = vmatmul.mubr.bf16.gmra.mxu0 %v775
      %v953 = vpop.f32.mrf.mxu0
      %v954 = vadd.f32 0.0, %v953
      %v955 = vpop.f32.mrf.mxu0
      %v956 = vpop.f32.mrf.mxu0
      %v957 = vadd.f32 0.0, %v956
      %v958 = vpop.f32.mrf.mxu0
      %959 = vmatprep.mubr.bf16.mxu0 0
      %960 = vmatmul.mubr.bf16.gmra.mxu0 %v776
      %v961 = vpop.f32.mrf.mxu0
      %v962 = vadd.f32 0.0, %v961
      %v963 = vpop.f32.mrf.mxu0
      %v964 = vpop.f32.mrf.mxu0
      %v965 = vadd.f32 0.0, %v964
      %v966 = vpop.f32.mrf.mxu0
      %967 = vmatprep.mubr.bf16.mxu0 0
      %968 = vmatmul.mubr.bf16.gmra.mxu0 %v777
      %v969 = vpop.f32.mrf.mxu0
      %v970 = vadd.f32 0.0, %v969
      %v971 = vpop.f32.mrf.mxu0
      %v972 = vpop.f32.mrf.mxu0
      %v973 = vadd.f32 0.0, %v972
      %v974 = vpop.f32.mrf.mxu0
      %975 = vmatprep.mubr.bf16.mxu0 0
      %976 = vmatmul.mubr.bf16.gmra.mxu0 %v778
      %v977 = vpop.f32.mrf.mxu0
      %v978 = vadd.f32 0.0, %v977
      %v979 = vpop.f32.mrf.mxu0
      %v980 = vpop.f32.mrf.mxu0
      %v981 = vadd.f32 0.0, %v980
      %v982 = vpop.f32.mrf.mxu0
      %983 = vmatprep.mubr.bf16.mxu0 0
      %984 = vmatmul.mubr.bf16.gmra.mxu0 %v779
      %v985 = vpop.f32.mrf.mxu0
      %v986 = vadd.f32 0.0, %v985
      %v987 = vpop.f32.mrf.mxu0
      %v988 = vpop.f32.mrf.mxu0
      %v989 = vadd.f32 0.0, %v988
      %v990 = vpop.f32.mrf.mxu0
      %991 = vmatprep.mubr.bf16.mxu0 0
      %992 = vmatmul.mubr.bf16.gmra.mxu0 %v780
      %v993 = vpop.f32.mrf.mxu0
      %v994 = vadd.f32 0.0, %v993
      %v995 = vpop.f32.mrf.mxu0
      %v996 = vpop.f32.mrf.mxu0
      %v997 = vadd.f32 0.0, %v996
      %v998 = vpop.f32.mrf.mxu0
      %999 = vmatprep.mubr.bf16.mxu0 0
      %1000 = vmatmul.mubr.bf16.gmra.mxu0 %v781
      %v1001 = vpop.f32.mrf.mxu0
      %v1002 = vadd.f32 0.0, %v1001
      %v1003 = vpop.f32.mrf.mxu0
      %v1004 = vpop.f32.mrf.mxu0
      %v1005 = vadd.f32 0.0, %v1004
      %v1006 = vpop.f32.mrf.mxu0
      %1007 = vdwg.mxu0
      %v1024 = vunpack.c.l.b16 %v589
      %v1025 = vunpack.c.l.b16 %v590
      %v1026 = vunpack.c.l.b16 %v591
      %v1027 = vunpack.c.l.b16 %v592
      %v1028 = vunpack.c.l.b16 %v593
      %v1029 = vunpack.c.l.b16 %v594
      %v1030 = vunpack.c.l.b16 %v595
      %v1031 = vunpack.c.l.b16 %v596
      %v1032 = vunpack.c.l.b16 %v597
      %v1033 = vunpack.c.l.b16 %v598
      %v1034 = vunpack.c.l.b16 %v599
      %v1035 = vunpack.c.l.b16 %v600
      %v1036 = vunpack.c.l.b16 %v601
      %v1037 = vunpack.c.l.b16 %v602
      %v1038 = vunpack.c.l.b16 %v603
      %v1039 = vunpack.c.l.b16 %v604
      %v1040 = vpack.c.b16 %v1025, %v1024
      %v1041 = vpack.c.b16 %v1027, %v1026
      %v1042 = vpack.c.b16 %v1029, %v1028
      %v1043 = vpack.c.b16 %v1031, %v1030
      %v1044 = vpack.c.b16 %v1033, %v1032
      %v1045 = vpack.c.b16 %v1035, %v1034
      %v1046 = vpack.c.b16 %v1037, %v1036
      %v1047 = vpack.c.b16 %v1039, %v1038
      %1056 = vmatprep.subr.bf16.mxu0 0
      %1057 = vmatpush1.bf16.msra.mxu0 %v1047
      %1058 = vmatprep.subr.bf16.mxu0 0
      %1059 = vmatpush1.bf16.msra.mxu0 %v1046
      %1060 = vmatprep.subr.bf16.mxu0 0
      %1061 = vmatpush1.bf16.msra.mxu0 %v1045
      %1062 = vmatprep.subr.bf16.mxu0 0
      %1063 = vmatpush1.bf16.msra.mxu0 %v1044
      %1064 = vmatprep.subr.bf16.mxu0 0
      %1065 = vmatpush1.bf16.msra.mxu0 %v1043
      %1066 = vmatprep.subr.bf16.mxu0 0
      %1067 = vmatpush1.bf16.msra.mxu0 %v1042
      %1068 = vmatprep.subr.bf16.mxu0 0
      %1069 = vmatpush1.bf16.msra.mxu0 %v1041
      %1070 = vmatprep.subr.bf16.mxu0 0
      %1071 = vmatpush1.bf16.msra.mxu0 %v1040
      %1072 = vmatprep.subr.bf16.mxu0 0
      %1073 = vmatpush2.bf16.msra.mxu0 0
      %1074 = vmatprep.subr.bf16.mxu0 0
      %1075 = vmatpush2.bf16.msra.mxu0 0
      %1076 = vmatprep.subr.bf16.mxu0 0
      %1077 = vmatpush2.bf16.msra.mxu0 0
      %1078 = vmatprep.subr.bf16.mxu0 0
      %1079 = vmatpush2.bf16.msra.mxu0 0
      %1080 = vmatprep.subr.bf16.mxu0 0
      %1081 = vmatpush2.bf16.msra.mxu0 0
      %1082 = vmatprep.subr.bf16.mxu0 0
      %1083 = vmatpush2.bf16.msra.mxu0 0
      %1084 = vmatprep.subr.bf16.mxu0 0
      %1085 = vmatpush2.bf16.msra.mxu0 0
      %1086 = vmatprep.subr.bf16.mxu0 0
      %1087 = vmatpush2.bf16.msra.mxu0 0
      %1088 = vmatprep.mubr.bf16.mxu0 0
      %1089 = vmatmul.mubr.bf16.gmra.mxu0 %v573
      %v1090 = vpop.f32.mrf.mxu0
      %v1091 = vadd.f32 %v882, %v1090
      %v1092 = vpop.f32.mrf.mxu0
      %v1093 = vpop.f32.mrf.mxu0
      %v1094 = vadd.f32 %v885, %v1093
      %v1095 = vpop.f32.mrf.mxu0
      %1096 = vmatprep.mubr.bf16.mxu0 0
      %1097 = vmatmul.mubr.bf16.gmra.mxu0 %v574
      %v1098 = vpop.f32.mrf.mxu0
      %v1099 = vadd.f32 %v890, %v1098
      %v1100 = vpop.f32.mrf.mxu0
      %v1101 = vpop.f32.mrf.mxu0
      %v1102 = vadd.f32 %v893, %v1101
      %v1103 = vpop.f32.mrf.mxu0
      %1104 = vmatprep.mubr.bf16.mxu0 0
      %1105 = vmatmul.mubr.bf16.gmra.mxu0 %v575
      %v1106 = vpop.f32.mrf.mxu0
      %v1107 = vadd.f32 %v898, %v1106
      %v1108 = vpop.f32.mrf.mxu0
      %v1109 = vpop.f32.mrf.mxu0
      %v1110 = vadd.f32 %v901, %v1109
      %v1111 = vpop.f32.mrf.mxu0
      %1112 = vmatprep.mubr.bf16.mxu0 0
      %1113 = vmatmul.mubr.bf16.gmra.mxu0 %v576
      %v1114 = vpop.f32.mrf.mxu0
      %v1115 = vadd.f32 %v906, %v1114
      %v1116 = vpop.f32.mrf.mxu0
      %v1117 = vpop.f32.mrf.mxu0
      %v1118 = vadd.f32 %v909, %v1117
      %v1119 = vpop.f32.mrf.mxu0
      %1120 = vmatprep.mubr.bf16.mxu0 0
      %1121 = vmatmul.mubr.bf16.gmra.mxu0 %v577
      %v1122 = vpop.f32.mrf.mxu0
      %v1123 = vadd.f32 %v914, %v1122
      %v1124 = vpop.f32.mrf.mxu0
      %v1125 = vpop.f32.mrf.mxu0
      %v1126 = vadd.f32 %v917, %v1125
      %v1127 = vpop.f32.mrf.mxu0
      %1128 = vmatprep.mubr.bf16.mxu0 0
      %1129 = vmatmul.mubr.bf16.gmra.mxu0 %v578
      %v1130 = vpop.f32.mrf.mxu0
      %v1131 = vadd.f32 %v922, %v1130
      %v1132 = vpop.f32.mrf.mxu0
      %v1133 = vpop.f32.mrf.mxu0
      %v1134 = vadd.f32 %v925, %v1133
      %v1135 = vpop.f32.mrf.mxu0
      %1136 = vmatprep.mubr.bf16.mxu0 0
      %1137 = vmatmul.mubr.bf16.gmra.mxu0 %v579
      %v1138 = vpop.f32.mrf.mxu0
      %v1139 = vadd.f32 %v930, %v1138
      %v1140 = vpop.f32.mrf.mxu0
      %v1141 = vpop.f32.mrf.mxu0
      %v1142 = vadd.f32 %v933, %v1141
      %v1143 = vpop.f32.mrf.mxu0
      %1144 = vmatprep.mubr.bf16.mxu0 0
      %1145 = vmatmul.mubr.bf16.gmra.mxu0 %v580
      %v1146 = vpop.f32.mrf.mxu0
      %v1147 = vadd.f32 %v938, %v1146
      %v1148 = vpop.f32.mrf.mxu0
      %v1149 = vpop.f32.mrf.mxu0
      %v1150 = vadd.f32 %v941, %v1149
      %v1151 = vpop.f32.mrf.mxu0
      %1152 = vmatprep.mubr.bf16.mxu0 0
      %1153 = vmatmul.mubr.bf16.gmra.mxu0 %v581
      %v1154 = vpop.f32.mrf.mxu0
      %v1155 = vadd.f32 %v946, %v1154
      %v1156 = vpop.f32.mrf.mxu0
      %v1157 = vpop.f32.mrf.mxu0
      %v1158 = vadd.f32 %v949, %v1157
      %v1159 = vpop.f32.mrf.mxu0
      %1160 = vmatprep.mubr.bf16.mxu0 0
      %1161 = vmatmul.mubr.bf16.gmra.mxu0 %v582
      %v1162 = vpop.f32.mrf.mxu0
      %v1163 = vadd.f32 %v954, %v1162
      %v1164 = vpop.f32.mrf.mxu0
      %v1165 = vpop.f32.mrf.mxu0
      %v1166 = vadd.f32 %v957, %v1165
      %v1167 = vpop.f32.mrf.mxu0
      %1168 = vmatprep.mubr.bf16.mxu0 0
      %1169 = vmatmul.mubr.bf16.gmra.mxu0 %v583
      %v1170 = vpop.f32.mrf.mxu0
      %v1171 = vadd.f32 %v962, %v1170
      %v1172 = vpop.f32.mrf.mxu0
      %v1173 = vpop.f32.mrf.mxu0
      %v1174 = vadd.f32 %v965, %v1173
      %v1175 = vpop.f32.mrf.mxu0
      %1176 = vmatprep.mubr.bf16.mxu0 0
      %1177 = vmatmul.mubr.bf16.gmra.mxu0 %v584
      %v1178 = vpop.f32.mrf.mxu0
      %v1179 = vadd.f32 %v970, %v1178
      %v1180 = vpop.f32.mrf.mxu0
      %v1181 = vpop.f32.mrf.mxu0
      %v1182 = vadd.f32 %v973, %v1181
      %v1183 = vpop.f32.mrf.mxu0
      %1184 = vmatprep.mubr.bf16.mxu0 0
      %1185 = vmatmul.mubr.bf16.gmra.mxu0 %v585
      %v1186 = vpop.f32.mrf.mxu0
      %v1187 = vadd.f32 %v978, %v1186
      %v1188 = vpop.f32.mrf.mxu0
      %v1189 = vpop.f32.mrf.mxu0
      %v1190 = vadd.f32 %v981, %v1189
      %v1191 = vpop.f32.mrf.mxu0
      %1192 = vmatprep.mubr.bf16.mxu0 0
      %1193 = vmatmul.mubr.bf16.gmra.mxu0 %v586
      %v1194 = vpop.f32.mrf.mxu0
      %v1195 = vadd.f32 %v986, %v1194
      %v1196 = vpop.f32.mrf.mxu0
      %v1197 = vpop.f32.mrf.mxu0
      %v1198 = vadd.f32 %v989, %v1197
      %v1199 = vpop.f32.mrf.mxu0
      %1200 = vmatprep.mubr.bf16.mxu0 0
      %1201 = vmatmul.mubr.bf16.gmra.mxu0 %v587
      %v1202 = vpop.f32.mrf.mxu0
      %v1203 = vadd.f32 %v994, %v1202
      %v1204 = vpop.f32.mrf.mxu0
      %v1205 = vpop.f32.mrf.mxu0
      %v1206 = vadd.f32 %v997, %v1205
      %v1207 = vpop.f32.mrf.mxu0
      %1208 = vmatprep.mubr.bf16.mxu0 0
      %1209 = vmatmul.mubr.bf16.gmra.mxu0 %v588
      %v1210 = vpop.f32.mrf.mxu0
      %v1211 = vadd.f32 %v1002, %v1210
      %v1212 = vpop.f32.mrf.mxu0
      %v1213 = vpop.f32.mrf.mxu0
      %v1214 = vadd.f32 %v1005, %v1213
      %v1215 = vpop.f32.mrf.mxu0
      %1216 = vdwg.mxu0
      %vm1217 = vcmask 1045504
      %v1218 = vrot.slane %v519, 2
      %v1219 = vrot.slane %v520, 2
      %v1220 = vsel %vm1217, %v1218, %v1219
      %v1221 = vrot.slane %v521, 2
      %v1222 = vsel %vm1217, %v1219, %v1221
      %v1223 = vrot.slane %v522, 2
      %v1224 = vrot.slane %v523, 2
      %v1225 = vsel %vm1217, %v1223, %v1224
      %v1226 = vrot.slane %v524, 2
      %v1227 = vsel %vm1217, %v1224, %v1226
      %v1228 = vrot.slane %v525, 2
      %v1229 = vrot.slane %v526, 2
      %v1230 = vsel %vm1217, %v1228, %v1229
      %v1231 = vrot.slane %v527, 2
      %v1232 = vsel %vm1217, %v1229, %v1231
      %v1233 = vrot.slane %v528, 2
      %v1234 = vrot.slane %v529, 2
      %v1235 = vsel %vm1217, %v1233, %v1234
      %v1236 = vrot.slane %v530, 2
      %v1237 = vsel %vm1217, %v1234, %v1236
      %v1238 = vrot.slane %v531, 2
      %v1239 = vrot.slane %v532, 2
      %v1240 = vsel %vm1217, %v1238, %v1239
      %v1241 = vrot.slane %v533, 2
      %v1242 = vsel %vm1217, %v1239, %v1241
      %v1243 = vrot.slane %v534, 2
      %v1244 = vrot.slane %v535, 2
      %v1245 = vsel %vm1217, %v1243, %v1244
      %v1246 = vrot.slane %v536, 2
      %v1247 = vsel %vm1217, %v1244, %v1246
      %v1248 = vrot.slane %v537, 2
      %v1249 = vrot.slane %v538, 2
      %v1250 = vsel %vm1217, %v1248, %v1249
      %v1251 = vrot.slane %v539, 2
      %v1252 = vsel %vm1217, %v1249, %v1251
      %v1253 = vrot.slane %v540, 2
      %v1254 = vrot.slane %v541, 2
      %v1255 = vsel %vm1217, %v1253, %v1254
      %v1256 = vrot.slane %v542, 2
      %v1257 = vsel %vm1217, %v1254, %v1256
      %v1258 = vrot.slane %v543, 2
      %v1259 = vrot.slane %v544, 2
      %v1260 = vsel %vm1217, %v1258, %v1259
      %v1261 = vrot.slane %v545, 2
      %v1262 = vsel %vm1217, %v1259, %v1261
      %v1263 = vrot.slane %v546, 2
      %v1264 = vrot.slane %v547, 2
      %v1265 = vsel %vm1217, %v1263, %v1264
      %v1266 = vrot.slane %v548, 2
      %v1267 = vsel %vm1217, %v1264, %v1266
      %v1268 = vrot.slane %v549, 2
      %v1269 = vrot.slane %v550, 2
      %v1270 = vsel %vm1217, %v1268, %v1269
      %v1271 = vrot.slane %v551, 2
      %v1272 = vsel %vm1217, %v1269, %v1271
      %v1273 = vrot.slane %v552, 2
      %v1274 = vrot.slane %v553, 2
      %v1275 = vsel %vm1217, %v1273, %v1274
      %v1276 = vrot.slane %v554, 2
      %v1277 = vsel %vm1217, %v1274, %v1276
      %v1278 = vrot.slane %v555, 2
      %v1279 = vrot.slane %v556, 2
      %v1280 = vsel %vm1217, %v1278, %v1279
      %v1281 = vrot.slane %v557, 2
      %v1282 = vsel %vm1217, %v1279, %v1281
      %v1283 = vrot.slane %v558, 2
      %v1284 = vrot.slane %v559, 2
      %v1285 = vsel %vm1217, %v1283, %v1284
      %v1286 = vrot.slane %v560, 2
      %v1287 = vsel %vm1217, %v1284, %v1286
      %v1288 = vrot.slane %v561, 2
      %v1289 = vrot.slane %v562, 2
      %v1290 = vsel %vm1217, %v1288, %v1289
      %v1291 = vrot.slane %v563, 2
      %v1292 = vsel %vm1217, %v1289, %v1291
      %v1293 = vrot.slane %v564, 2
      %v1294 = vrot.slane %v565, 2
      %v1295 = vsel %vm1217, %v1293, %v1294
      %v1296 = vrot.slane %v566, 2
      %v1297 = vsel %vm1217, %v1294, %v1296
      %v1330 = vpack.c.bf16 %v1222, %v1220
      %v1331 = vpack.c.bf16 %v1227, %v1225
      %v1332 = vpack.c.bf16 %v1232, %v1230
      %v1333 = vpack.c.bf16 %v1237, %v1235
      %v1334 = vpack.c.bf16 %v1242, %v1240
      %v1335 = vpack.c.bf16 %v1247, %v1245
      %v1336 = vpack.c.bf16 %v1252, %v1250
      %v1337 = vpack.c.bf16 %v1257, %v1255
      %v1338 = vpack.c.bf16 %v1262, %v1260
      %v1339 = vpack.c.bf16 %v1267, %v1265
      %v1340 = vpack.c.bf16 %v1272, %v1270
      %v1341 = vpack.c.bf16 %v1277, %v1275
      %v1342 = vpack.c.bf16 %v1282, %v1280
      %v1343 = vpack.c.bf16 %v1287, %v1285
      %v1344 = vpack.c.bf16 %v1292, %v1290
      %v1345 = vpack.c.bf16 %v1297, %v1295
      %s1346 = scalar_lea.vmem %s2, 128
      %v1347 = vld [vmem:[%s1346] sm:$0xf]
      %v1348 = vld [vmem:[%s1346 + $0x4] sm:$0xf]
      %v1349 = vld [vmem:[%s1346 + $0x8] sm:$0xf]
      %v1350 = vld [vmem:[%s1346 + $0xc] sm:$0xf]
      %v1351 = vld [vmem:[%s1346 + $0x10] sm:$0xf]
      %v1352 = vld [vmem:[%s1346 + $0x14] sm:$0xf]
      %v1353 = vld [vmem:[%s1346 + $0x18] sm:$0xf]
      %v1354 = vld [vmem:[%s1346 + $0x1c] sm:$0xf]
      %v1355 = vld [vmem:[%s1346 + $0x20] sm:$0xf]
      %v1356 = vld [vmem:[%s1346 + $0x24] sm:$0xf]
      %v1357 = vld [vmem:[%s1346 + $0x28] sm:$0xf]
      %v1358 = vld [vmem:[%s1346 + $0x2c] sm:$0xf]
      %v1359 = vld [vmem:[%s1346 + $0x30] sm:$0xf]
      %v1360 = vld [vmem:[%s1346 + $0x34] sm:$0xf]
      %v1361 = vld [vmem:[%s1346 + $0x38] sm:$0xf]
      %v1362 = vld [vmem:[%s1346 + $0x3c] sm:$0xf]
      %v1379 = vunpack.c.l.b16 %v1347
      %v1380 = vunpack.c.l.b16 %v1348
      %v1381 = vunpack.c.l.b16 %v1349
      %v1382 = vunpack.c.l.b16 %v1350
      %v1383 = vunpack.c.l.b16 %v1351
      %v1384 = vunpack.c.l.b16 %v1352
      %v1385 = vunpack.c.l.b16 %v1353
      %v1386 = vunpack.c.l.b16 %v1354
      %v1387 = vunpack.c.l.b16 %v1355
      %v1388 = vunpack.c.l.b16 %v1356
      %v1389 = vunpack.c.l.b16 %v1357
      %v1390 = vunpack.c.l.b16 %v1358
      %v1391 = vunpack.c.l.b16 %v1359
      %v1392 = vunpack.c.l.b16 %v1360
      %v1393 = vunpack.c.l.b16 %v1361
      %v1394 = vunpack.c.l.b16 %v1362
      %v1395 = vpack.c.b16 %v1380, %v1379
      %v1396 = vpack.c.b16 %v1382, %v1381
      %v1397 = vpack.c.b16 %v1384, %v1383
      %v1398 = vpack.c.b16 %v1386, %v1385
      %v1399 = vpack.c.b16 %v1388, %v1387
      %v1400 = vpack.c.b16 %v1390, %v1389
      %v1401 = vpack.c.b16 %v1392, %v1391
      %v1402 = vpack.c.b16 %v1394, %v1393
      %1411 = vmatprep.subr.bf16.mxu0 0
      %1412 = vmatpush1.bf16.msra.mxu0 %v1402
      %1413 = vmatprep.subr.bf16.mxu0 0
      %1414 = vmatpush1.bf16.msra.mxu0 %v1401
      %1415 = vmatprep.subr.bf16.mxu0 0
      %1416 = vmatpush1.bf16.msra.mxu0 %v1400
      %1417 = vmatprep.subr.bf16.mxu0 0
      %1418 = vmatpush1.bf16.msra.mxu0 %v1399
      %1419 = vmatprep.subr.bf16.mxu0 0
      %1420 = vmatpush1.bf16.msra.mxu0 %v1398
      %1421 = vmatprep.subr.bf16.mxu0 0
      %1422 = vmatpush1.bf16.msra.mxu0 %v1397
      %1423 = vmatprep.subr.bf16.mxu0 0
      %1424 = vmatpush1.bf16.msra.mxu0 %v1396
      %1425 = vmatprep.subr.bf16.mxu0 0
      %1426 = vmatpush1.bf16.msra.mxu0 %v1395
      %1427 = vmatprep.subr.bf16.mxu0 0
      %1428 = vmatpush2.bf16.msra.mxu0 0
      %1429 = vmatprep.subr.bf16.mxu0 0
      %1430 = vmatpush2.bf16.msra.mxu0 0
      %1431 = vmatprep.subr.bf16.mxu0 0
      %1432 = vmatpush2.bf16.msra.mxu0 0
      %1433 = vmatprep.subr.bf16.mxu0 0
      %1434 = vmatpush2.bf16.msra.mxu0 0
      %1435 = vmatprep.subr.bf16.mxu0 0
      %1436 = vmatpush2.bf16.msra.mxu0 0
      %1437 = vmatprep.subr.bf16.mxu0 0
      %1438 = vmatpush2.bf16.msra.mxu0 0
      %1439 = vmatprep.subr.bf16.mxu0 0
      %1440 = vmatpush2.bf16.msra.mxu0 0
      %1441 = vmatprep.subr.bf16.mxu0 0
      %1442 = vmatpush2.bf16.msra.mxu0 0
      %1443 = vmatprep.mubr.bf16.mxu0 0
      %1444 = vmatmul.mubr.bf16.gmra.mxu0 %v1330
      %v1445 = vpop.f32.mrf.mxu0
      %v1446 = vadd.f32 0.0, %v1445
      %v1447 = vpop.f32.mrf.mxu0
      %v1448 = vpop.f32.mrf.mxu0
      %v1449 = vadd.f32 0.0, %v1448
      %v1450 = vpop.f32.mrf.mxu0
      %1451 = vmatprep.mubr.bf16.mxu0 0
      %1452 = vmatmul.mubr.bf16.gmra.mxu0 %v1331
      %v1453 = vpop.f32.mrf.mxu0
      %v1454 = vadd.f32 0.0, %v1453
      %v1455 = vpop.f32.mrf.mxu0
      %v1456 = vpop.f32.mrf.mxu0
      %v1457 = vadd.f32 0.0, %v1456
      %v1458 = vpop.f32.mrf.mxu0
      %1459 = vmatprep.mubr.bf16.mxu0 0
      %1460 = vmatmul.mubr.bf16.gmra.mxu0 %v1332
      %v1461 = vpop.f32.mrf.mxu0
      %v1462 = vadd.f32 0.0, %v1461
      %v1463 = vpop.f32.mrf.mxu0
      %v1464 = vpop.f32.mrf.mxu0
      %v1465 = vadd.f32 0.0, %v1464
      %v1466 = vpop.f32.mrf.mxu0
      %1467 = vmatprep.mubr.bf16.mxu0 0
      %1468 = vmatmul.mubr.bf16.gmra.mxu0 %v1333
      %v1469 = vpop.f32.mrf.mxu0
      %v1470 = vadd.f32 0.0, %v1469
      %v1471 = vpop.f32.mrf.mxu0
      %v1472 = vpop.f32.mrf.mxu0
      %v1473 = vadd.f32 0.0, %v1472
      %v1474 = vpop.f32.mrf.mxu0
      %1475 = vmatprep.mubr.bf16.mxu0 0
      %1476 = vmatmul.mubr.bf16.gmra.mxu0 %v1334
      %v1477 = vpop.f32.mrf.mxu0
      %v1478 = vadd.f32 0.0, %v1477
      %v1479 = vpop.f32.mrf.mxu0
      %v1480 = vpop.f32.mrf.mxu0
      %v1481 = vadd.f32 0.0, %v1480
      %v1482 = vpop.f32.mrf.mxu0
      %1483 = vmatprep.mubr.bf16.mxu0 0
      %1484 = vmatmul.mubr.bf16.gmra.mxu0 %v1335
      %v1485 = vpop.f32.mrf.mxu0
      %v1486 = vadd.f32 0.0, %v1485
      %v1487 = vpop.f32.mrf.mxu0
      %v1488 = vpop.f32.mrf.mxu0
      %v1489 = vadd.f32 0.0, %v1488
      %v1490 = vpop.f32.mrf.mxu0
      %1491 = vmatprep.mubr.bf16.mxu0 0
      %1492 = vmatmul.mubr.bf16.gmra.mxu0 %v1336
      %v1493 = vpop.f32.mrf.mxu0
      %v1494 = vadd.f32 0.0, %v1493
      %v1495 = vpop.f32.mrf.mxu0
      %v1496 = vpop.f32.mrf.mxu0
      %v1497 = vadd.f32 0.0, %v1496
      %v1498 = vpop.f32.mrf.mxu0
      %1499 = vmatprep.mubr.bf16.mxu0 0
      %1500 = vmatmul.mubr.bf16.gmra.mxu0 %v1337
      %v1501 = vpop.f32.mrf.mxu0
      %v1502 = vadd.f32 0.0, %v1501
      %v1503 = vpop.f32.mrf.mxu0
      %v1504 = vpop.f32.mrf.mxu0
      %v1505 = vadd.f32 0.0, %v1504
      %v1506 = vpop.f32.mrf.mxu0
      %1507 = vmatprep.mubr.bf16.mxu0 0
      %1508 = vmatmul.mubr.bf16.gmra.mxu0 %v1338
      %v1509 = vpop.f32.mrf.mxu0
      %v1510 = vadd.f32 0.0, %v1509
      %v1511 = vpop.f32.mrf.mxu0
      %v1512 = vpop.f32.mrf.mxu0
      %v1513 = vadd.f32 0.0, %v1512
      %v1514 = vpop.f32.mrf.mxu0
      %1515 = vmatprep.mubr.bf16.mxu0 0
      %1516 = vmatmul.mubr.bf16.gmra.mxu0 %v1339
      %v1517 = vpop.f32.mrf.mxu0
      %v1518 = vadd.f32 0.0, %v1517
      %v1519 = vpop.f32.mrf.mxu0
      %v1520 = vpop.f32.mrf.mxu0
      %v1521 = vadd.f32 0.0, %v1520
      %v1522 = vpop.f32.mrf.mxu0
      %1523 = vmatprep.mubr.bf16.mxu0 0
      %1524 = vmatmul.mubr.bf16.gmra.mxu0 %v1340
      %v1525 = vpop.f32.mrf.mxu0
      %v1526 = vadd.f32 0.0, %v1525
      %v1527 = vpop.f32.mrf.mxu0
      %v1528 = vpop.f32.mrf.mxu0
      %v1529 = vadd.f32 0.0, %v1528
      %v1530 = vpop.f32.mrf.mxu0
      %1531 = vmatprep.mubr.bf16.mxu0 0
      %1532 = vmatmul.mubr.bf16.gmra.mxu0 %v1341
      %v1533 = vpop.f32.mrf.mxu0
      %v1534 = vadd.f32 0.0, %v1533
      %v1535 = vpop.f32.mrf.mxu0
      %v1536 = vpop.f32.mrf.mxu0
      %v1537 = vadd.f32 0.0, %v1536
      %v1538 = vpop.f32.mrf.mxu0
      %1539 = vmatprep.mubr.bf16.mxu0 0
      %1540 = vmatmul.mubr.bf16.gmra.mxu0 %v1342
      %v1541 = vpop.f32.mrf.mxu0
      %v1542 = vadd.f32 0.0, %v1541
      %v1543 = vpop.f32.mrf.mxu0
      %v1544 = vpop.f32.mrf.mxu0
      %v1545 = vadd.f32 0.0, %v1544
      %v1546 = vpop.f32.mrf.mxu0
      %1547 = vmatprep.mubr.bf16.mxu0 0
      %1548 = vmatmul.mubr.bf16.gmra.mxu0 %v1343
      %v1549 = vpop.f32.mrf.mxu0
      %v1550 = vadd.f32 0.0, %v1549
      %v1551 = vpop.f32.mrf.mxu0
      %v1552 = vpop.f32.mrf.mxu0
      %v1553 = vadd.f32 0.0, %v1552
      %v1554 = vpop.f32.mrf.mxu0
      %1555 = vmatprep.mubr.bf16.mxu0 0
      %1556 = vmatmul.mubr.bf16.gmra.mxu0 %v1344
      %v1557 = vpop.f32.mrf.mxu0
      %v1558 = vadd.f32 0.0, %v1557
      %v1559 = vpop.f32.mrf.mxu0
      %v1560 = vpop.f32.mrf.mxu0
      %v1561 = vadd.f32 0.0, %v1560
      %v1562 = vpop.f32.mrf.mxu0
      %1563 = vmatprep.mubr.bf16.mxu0 0
      %1564 = vmatmul.mubr.bf16.gmra.mxu0 %v1345
      %v1565 = vpop.f32.mrf.mxu0
      %v1566 = vadd.f32 0.0, %v1565
      %v1567 = vpop.f32.mrf.mxu0
      %v1568 = vpop.f32.mrf.mxu0
      %v1569 = vadd.f32 0.0, %v1568
      %v1570 = vpop.f32.mrf.mxu0
      %1571 = vdwg.mxu0
      %v1572 = vadd.f32 %v1091, %v1446
      %v1573 = vadd.f32 %v1094, %v1449
      %v1574 = vadd.f32 %v1099, %v1454
      %v1575 = vadd.f32 %v1102, %v1457
      %v1576 = vadd.f32 %v1107, %v1462
      %v1577 = vadd.f32 %v1110, %v1465
      %v1578 = vadd.f32 %v1115, %v1470
      %v1579 = vadd.f32 %v1118, %v1473
      %v1580 = vadd.f32 %v1123, %v1478
      %v1581 = vadd.f32 %v1126, %v1481
      %v1582 = vadd.f32 %v1131, %v1486
      %v1583 = vadd.f32 %v1134, %v1489
      %v1584 = vadd.f32 %v1139, %v1494
      %v1585 = vadd.f32 %v1142, %v1497
      %v1586 = vadd.f32 %v1147, %v1502
      %v1587 = vadd.f32 %v1150, %v1505
      %v1588 = vadd.f32 %v1155, %v1510
      %v1589 = vadd.f32 %v1158, %v1513
      %v1590 = vadd.f32 %v1163, %v1518
      %v1591 = vadd.f32 %v1166, %v1521
      %v1592 = vadd.f32 %v1171, %v1526
      %v1593 = vadd.f32 %v1174, %v1529
      %v1594 = vadd.f32 %v1179, %v1534
      %v1595 = vadd.f32 %v1182, %v1537
      %v1596 = vadd.f32 %v1187, %v1542
      %v1597 = vadd.f32 %v1190, %v1545
      %v1598 = vadd.f32 %v1195, %v1550
      %v1599 = vadd.f32 %v1198, %v1553
      %v1600 = vadd.f32 %v1203, %v1558
      %v1601 = vadd.f32 %v1206, %v1561
      %v1602 = vadd.f32 %v1211, %v1566
      %v1603 = vadd.f32 %v1214, %v1569
      %v1604 = vpack.c.bf16 %v568, %v567
      %s1605 = scalar_lea.vmem %s2, 192
      %v1606 = vld [vmem:[%s1605] sm:$0xf]
      %v1607 = vld [vmem:[%s1605 + $0x4] sm:$0xf]
      %v1608 = vld [vmem:[%s1605 + $0x8] sm:$0xf]
      %v1609 = vld [vmem:[%s1605 + $0xc] sm:$0xf]
      %v1610 = vld [vmem:[%s1605 + $0x10] sm:$0xf]
      %v1611 = vld [vmem:[%s1605 + $0x14] sm:$0xf]
      %v1612 = vld [vmem:[%s1605 + $0x18] sm:$0xf]
      %v1613 = vld [vmem:[%s1605 + $0x1c] sm:$0xf]
      %v1614 = vld [vmem:[%s1605 + $0x20] sm:$0xf]
      %v1615 = vld [vmem:[%s1605 + $0x24] sm:$0xf]
      %v1616 = vld [vmem:[%s1605 + $0x28] sm:$0xf]
      %v1617 = vld [vmem:[%s1605 + $0x2c] sm:$0xf]
      %v1618 = vld [vmem:[%s1605 + $0x30] sm:$0xf]
      %v1619 = vld [vmem:[%s1605 + $0x34] sm:$0xf]
      %v1620 = vld [vmem:[%s1605 + $0x38] sm:$0xf]
      %v1621 = vld [vmem:[%s1605 + $0x3c] sm:$0xf]
      %v1638 = vunpack.c.l.b16 %v1606
      %v1639 = vunpack.c.l.b16 %v1607
      %v1640 = vunpack.c.l.b16 %v1608
      %v1641 = vunpack.c.l.b16 %v1609
      %v1642 = vunpack.c.l.b16 %v1610
      %v1643 = vunpack.c.l.b16 %v1611
      %v1644 = vunpack.c.l.b16 %v1612
      %v1645 = vunpack.c.l.b16 %v1613
      %v1646 = vunpack.c.l.b16 %v1614
      %v1647 = vunpack.c.l.b16 %v1615
      %v1648 = vunpack.c.l.b16 %v1616
      %v1649 = vunpack.c.l.b16 %v1617
      %v1650 = vunpack.c.l.b16 %v1618
      %v1651 = vunpack.c.l.b16 %v1619
      %v1652 = vunpack.c.l.b16 %v1620
      %v1653 = vunpack.c.l.b16 %v1621
      %v1654 = vpack.c.b16 %v1639, %v1638
      %v1655 = vpack.c.b16 %v1641, %v1640
      %v1656 = vpack.c.b16 %v1643, %v1642
      %v1657 = vpack.c.b16 %v1645, %v1644
      %v1658 = vpack.c.b16 %v1647, %v1646
      %v1659 = vpack.c.b16 %v1649, %v1648
      %v1660 = vpack.c.b16 %v1651, %v1650
      %v1661 = vpack.c.b16 %v1653, %v1652
      %1670 = vmatprep.subr.bf16.mxu0 0
      %1671 = vmatpush1.bf16.msra.mxu0 %v1661
      %1672 = vmatprep.subr.bf16.mxu0 0
      %1673 = vmatpush1.bf16.msra.mxu0 %v1660
      %1674 = vmatprep.subr.bf16.mxu0 0
      %1675 = vmatpush1.bf16.msra.mxu0 %v1659
      %1676 = vmatprep.subr.bf16.mxu0 0
      %1677 = vmatpush1.bf16.msra.mxu0 %v1658
      %1678 = vmatprep.subr.bf16.mxu0 0
      %1679 = vmatpush1.bf16.msra.mxu0 %v1657
      %1680 = vmatprep.subr.bf16.mxu0 0
      %1681 = vmatpush1.bf16.msra.mxu0 %v1656
      %1682 = vmatprep.subr.bf16.mxu0 0
      %1683 = vmatpush1.bf16.msra.mxu0 %v1655
      %1684 = vmatprep.subr.bf16.mxu0 0
      %1685 = vmatpush1.bf16.msra.mxu0 %v1654
      %1686 = vmatprep.subr.bf16.mxu0 0
      %1687 = vmatpush2.bf16.msra.mxu0 0
      %1688 = vmatprep.subr.bf16.mxu0 0
      %1689 = vmatpush2.bf16.msra.mxu0 0
      %1690 = vmatprep.subr.bf16.mxu0 0
      %1691 = vmatpush2.bf16.msra.mxu0 0
      %1692 = vmatprep.subr.bf16.mxu0 0
      %1693 = vmatpush2.bf16.msra.mxu0 0
      %1694 = vmatprep.subr.bf16.mxu0 0
      %1695 = vmatpush2.bf16.msra.mxu0 0
      %1696 = vmatprep.subr.bf16.mxu0 0
      %1697 = vmatpush2.bf16.msra.mxu0 0
      %1698 = vmatprep.subr.bf16.mxu0 0
      %1699 = vmatpush2.bf16.msra.mxu0 0
      %1700 = vmatprep.subr.bf16.mxu0 0
      %1701 = vmatpush2.bf16.msra.mxu0 0
      %1702 = vmatprep.mubr.bf16.mxu0 0
      %1703 = vmatmul.mubr.bf16.gmra.mxu0 %v574
      %v1704 = vpop.f32.mrf.mxu0
      %v1705 = vadd.f32 0.0, %v1704
      %v1706 = vpop.f32.mrf.mxu0
      %v1707 = vpop.f32.mrf.mxu0
      %v1708 = vadd.f32 0.0, %v1707
      %v1709 = vpop.f32.mrf.mxu0
      %1710 = vmatprep.mubr.bf16.mxu0 0
      %1711 = vmatmul.mubr.bf16.gmra.mxu0 %v575
      %v1712 = vpop.f32.mrf.mxu0
      %v1713 = vadd.f32 0.0, %v1712
      %v1714 = vpop.f32.mrf.mxu0
      %v1715 = vpop.f32.mrf.mxu0
      %v1716 = vadd.f32 0.0, %v1715
      %v1717 = vpop.f32.mrf.mxu0
      %1718 = vmatprep.mubr.bf16.mxu0 0
      %1719 = vmatmul.mubr.bf16.gmra.mxu0 %v576
      %v1720 = vpop.f32.mrf.mxu0
      %v1721 = vadd.f32 0.0, %v1720
      %v1722 = vpop.f32.mrf.mxu0
      %v1723 = vpop.f32.mrf.mxu0
      %v1724 = vadd.f32 0.0, %v1723
      %v1725 = vpop.f32.mrf.mxu0
      %1726 = vmatprep.mubr.bf16.mxu0 0
      %1727 = vmatmul.mubr.bf16.gmra.mxu0 %v577
      %v1728 = vpop.f32.mrf.mxu0
      %v1729 = vadd.f32 0.0, %v1728
      %v1730 = vpop.f32.mrf.mxu0
      %v1731 = vpop.f32.mrf.mxu0
      %v1732 = vadd.f32 0.0, %v1731
      %v1733 = vpop.f32.mrf.mxu0
      %1734 = vmatprep.mubr.bf16.mxu0 0
      %1735 = vmatmul.mubr.bf16.gmra.mxu0 %v578
      %v1736 = vpop.f32.mrf.mxu0
      %v1737 = vadd.f32 0.0, %v1736
      %v1738 = vpop.f32.mrf.mxu0
      %v1739 = vpop.f32.mrf.mxu0
      %v1740 = vadd.f32 0.0, %v1739
      %v1741 = vpop.f32.mrf.mxu0
      %1742 = vmatprep.mubr.bf16.mxu0 0
      %1743 = vmatmul.mubr.bf16.gmra.mxu0 %v579
      %v1744 = vpop.f32.mrf.mxu0
      %v1745 = vadd.f32 0.0, %v1744
      %v1746 = vpop.f32.mrf.mxu0
      %v1747 = vpop.f32.mrf.mxu0
      %v1748 = vadd.f32 0.0, %v1747
      %v1749 = vpop.f32.mrf.mxu0
      %1750 = vmatprep.mubr.bf16.mxu0 0
      %1751 = vmatmul.mubr.bf16.gmra.mxu0 %v580
      %v1752 = vpop.f32.mrf.mxu0
      %v1753 = vadd.f32 0.0, %v1752
      %v1754 = vpop.f32.mrf.mxu0
      %v1755 = vpop.f32.mrf.mxu0
      %v1756 = vadd.f32 0.0, %v1755
      %v1757 = vpop.f32.mrf.mxu0
      %1758 = vmatprep.mubr.bf16.mxu0 0
      %1759 = vmatmul.mubr.bf16.gmra.mxu0 %v581
      %v1760 = vpop.f32.mrf.mxu0
      %v1761 = vadd.f32 0.0, %v1760
      %v1762 = vpop.f32.mrf.mxu0
      %v1763 = vpop.f32.mrf.mxu0
      %v1764 = vadd.f32 0.0, %v1763
      %v1765 = vpop.f32.mrf.mxu0
      %1766 = vmatprep.mubr.bf16.mxu0 0
      %1767 = vmatmul.mubr.bf16.gmra.mxu0 %v582
      %v1768 = vpop.f32.mrf.mxu0
      %v1769 = vadd.f32 0.0, %v1768
      %v1770 = vpop.f32.mrf.mxu0
      %v1771 = vpop.f32.mrf.mxu0
      %v1772 = vadd.f32 0.0, %v1771
      %v1773 = vpop.f32.mrf.mxu0
      %1774 = vmatprep.mubr.bf16.mxu0 0
      %1775 = vmatmul.mubr.bf16.gmra.mxu0 %v583
      %v1776 = vpop.f32.mrf.mxu0
      %v1777 = vadd.f32 0.0, %v1776
      %v1778 = vpop.f32.mrf.mxu0
      %v1779 = vpop.f32.mrf.mxu0
      %v1780 = vadd.f32 0.0, %v1779
      %v1781 = vpop.f32.mrf.mxu0
      %1782 = vmatprep.mubr.bf16.mxu0 0
      %1783 = vmatmul.mubr.bf16.gmra.mxu0 %v584
      %v1784 = vpop.f32.mrf.mxu0
      %v1785 = vadd.f32 0.0, %v1784
      %v1786 = vpop.f32.mrf.mxu0
      %v1787 = vpop.f32.mrf.mxu0
      %v1788 = vadd.f32 0.0, %v1787
      %v1789 = vpop.f32.mrf.mxu0
      %1790 = vmatprep.mubr.bf16.mxu0 0
      %1791 = vmatmul.mubr.bf16.gmra.mxu0 %v585
      %v1792 = vpop.f32.mrf.mxu0
      %v1793 = vadd.f32 0.0, %v1792
      %v1794 = vpop.f32.mrf.mxu0
      %v1795 = vpop.f32.mrf.mxu0
      %v1796 = vadd.f32 0.0, %v1795
      %v1797 = vpop.f32.mrf.mxu0
      %1798 = vmatprep.mubr.bf16.mxu0 0
      %1799 = vmatmul.mubr.bf16.gmra.mxu0 %v586
      %v1800 = vpop.f32.mrf.mxu0
      %v1801 = vadd.f32 0.0, %v1800
      %v1802 = vpop.f32.mrf.mxu0
      %v1803 = vpop.f32.mrf.mxu0
      %v1804 = vadd.f32 0.0, %v1803
      %v1805 = vpop.f32.mrf.mxu0
      %1806 = vmatprep.mubr.bf16.mxu0 0
      %1807 = vmatmul.mubr.bf16.gmra.mxu0 %v587
      %v1808 = vpop.f32.mrf.mxu0
      %v1809 = vadd.f32 0.0, %v1808
      %v1810 = vpop.f32.mrf.mxu0
      %v1811 = vpop.f32.mrf.mxu0
      %v1812 = vadd.f32 0.0, %v1811
      %v1813 = vpop.f32.mrf.mxu0
      %1814 = vmatprep.mubr.bf16.mxu0 0
      %1815 = vmatmul.mubr.bf16.gmra.mxu0 %v588
      %v1816 = vpop.f32.mrf.mxu0
      %v1817 = vadd.f32 0.0, %v1816
      %v1818 = vpop.f32.mrf.mxu0
      %v1819 = vpop.f32.mrf.mxu0
      %v1820 = vadd.f32 0.0, %v1819
      %v1821 = vpop.f32.mrf.mxu0
      %1822 = vmatprep.mubr.bf16.mxu0 0
      %1823 = vmatmul.mubr.bf16.gmra.mxu0 %v1604
      %v1824 = vpop.f32.mrf.mxu0
      %v1825 = vadd.f32 0.0, %v1824
      %v1826 = vpop.f32.mrf.mxu0
      %v1827 = vpop.f32.mrf.mxu0
      %v1828 = vadd.f32 0.0, %v1827
      %v1829 = vpop.f32.mrf.mxu0
      %1830 = vdwg.mxu0
      %v1831 = vadd.f32 %v1572, %v1705
      %v1832 = vadd.f32 %v1573, %v1708
      %v1833 = vadd.f32 %v1574, %v1713
      %v1834 = vadd.f32 %v1575, %v1716
      %v1835 = vadd.f32 %v1576, %v1721
      %v1836 = vadd.f32 %v1577, %v1724
      %v1837 = vadd.f32 %v1578, %v1729
      %v1838 = vadd.f32 %v1579, %v1732
      %v1839 = vadd.f32 %v1580, %v1737
      %v1840 = vadd.f32 %v1581, %v1740
      %v1841 = vadd.f32 %v1582, %v1745
      %v1842 = vadd.f32 %v1583, %v1748
      %v1843 = vadd.f32 %v1584, %v1753
      %v1844 = vadd.f32 %v1585, %v1756
      %v1845 = vadd.f32 %v1586, %v1761
      %v1846 = vadd.f32 %v1587, %v1764
      %v1847 = vadd.f32 %v1588, %v1769
      %v1848 = vadd.f32 %v1589, %v1772
      %v1849 = vadd.f32 %v1590, %v1777
      %v1850 = vadd.f32 %v1591, %v1780
      %v1851 = vadd.f32 %v1592, %v1785
      %v1852 = vadd.f32 %v1593, %v1788
      %v1853 = vadd.f32 %v1594, %v1793
      %v1854 = vadd.f32 %v1595, %v1796
      %v1855 = vadd.f32 %v1596, %v1801
      %v1856 = vadd.f32 %v1597, %v1804
      %v1857 = vadd.f32 %v1598, %v1809
      %v1858 = vadd.f32 %v1599, %v1812
      %v1859 = vadd.f32 %v1600, %v1817
      %v1860 = vadd.f32 %v1601, %v1820
      %v1861 = vadd.f32 %v1602, %v1825
      %v1862 = vadd.f32 %v1603, %v1828
      %v1866 = vrot.slane %v567, 1
      %v1867 = vrot.slane %v568, 1
      %v1868 = vsel %vm653, %v1866, %v1867
      %v1869 = vrot.slane %v569, 1
      %v1870 = vsel %vm653, %v1867, %v1869
      %v1873 = vpack.c.bf16 %v1870, %v1868
      %s1874 = scalar_lea.vmem %s2, 256
      %v1875 = vld [vmem:[%s1874] sm:$0xf]
      %v1876 = vld [vmem:[%s1874 + $0x4] sm:$0xf]
      %v1877 = vld [vmem:[%s1874 + $0x8] sm:$0xf]
      %v1878 = vld [vmem:[%s1874 + $0xc] sm:$0xf]
      %v1879 = vld [vmem:[%s1874 + $0x10] sm:$0xf]
      %v1880 = vld [vmem:[%s1874 + $0x14] sm:$0xf]
      %v1881 = vld [vmem:[%s1874 + $0x18] sm:$0xf]
      %v1882 = vld [vmem:[%s1874 + $0x1c] sm:$0xf]
      %v1883 = vld [vmem:[%s1874 + $0x20] sm:$0xf]
      %v1884 = vld [vmem:[%s1874 + $0x24] sm:$0xf]
      %v1885 = vld [vmem:[%s1874 + $0x28] sm:$0xf]
      %v1886 = vld [vmem:[%s1874 + $0x2c] sm:$0xf]
      %v1887 = vld [vmem:[%s1874 + $0x30] sm:$0xf]
      %v1888 = vld [vmem:[%s1874 + $0x34] sm:$0xf]
      %v1889 = vld [vmem:[%s1874 + $0x38] sm:$0xf]
      %v1890 = vld [vmem:[%s1874 + $0x3c] sm:$0xf]
      %v1907 = vunpack.c.l.b16 %v1875
      %v1908 = vunpack.c.l.b16 %v1876
      %v1909 = vunpack.c.l.b16 %v1877
      %v1910 = vunpack.c.l.b16 %v1878
      %v1911 = vunpack.c.l.b16 %v1879
      %v1912 = vunpack.c.l.b16 %v1880
      %v1913 = vunpack.c.l.b16 %v1881
      %v1914 = vunpack.c.l.b16 %v1882
      %v1915 = vunpack.c.l.b16 %v1883
      %v1916 = vunpack.c.l.b16 %v1884
      %v1917 = vunpack.c.l.b16 %v1885
      %v1918 = vunpack.c.l.b16 %v1886
      %v1919 = vunpack.c.l.b16 %v1887
      %v1920 = vunpack.c.l.b16 %v1888
      %v1921 = vunpack.c.l.b16 %v1889
      %v1922 = vunpack.c.l.b16 %v1890
      %v1923 = vpack.c.b16 %v1908, %v1907
      %v1924 = vpack.c.b16 %v1910, %v1909
      %v1925 = vpack.c.b16 %v1912, %v1911
      %v1926 = vpack.c.b16 %v1914, %v1913
      %v1927 = vpack.c.b16 %v1916, %v1915
      %v1928 = vpack.c.b16 %v1918, %v1917
      %v1929 = vpack.c.b16 %v1920, %v1919
      %v1930 = vpack.c.b16 %v1922, %v1921
      %1939 = vmatprep.subr.bf16.mxu0 0
      %1940 = vmatpush1.bf16.msra.mxu0 %v1930
      %1941 = vmatprep.subr.bf16.mxu0 0
      %1942 = vmatpush1.bf16.msra.mxu0 %v1929
      %1943 = vmatprep.subr.bf16.mxu0 0
      %1944 = vmatpush1.bf16.msra.mxu0 %v1928
      %1945 = vmatprep.subr.bf16.mxu0 0
      %1946 = vmatpush1.bf16.msra.mxu0 %v1927
      %1947 = vmatprep.subr.bf16.mxu0 0
      %1948 = vmatpush1.bf16.msra.mxu0 %v1926
      %1949 = vmatprep.subr.bf16.mxu0 0
      %1950 = vmatpush1.bf16.msra.mxu0 %v1925
      %1951 = vmatprep.subr.bf16.mxu0 0
      %1952 = vmatpush1.bf16.msra.mxu0 %v1924
      %1953 = vmatprep.subr.bf16.mxu0 0
      %1954 = vmatpush1.bf16.msra.mxu0 %v1923
      %1955 = vmatprep.subr.bf16.mxu0 0
      %1956 = vmatpush2.bf16.msra.mxu0 0
      %1957 = vmatprep.subr.bf16.mxu0 0
      %1958 = vmatpush2.bf16.msra.mxu0 0
      %1959 = vmatprep.subr.bf16.mxu0 0
      %1960 = vmatpush2.bf16.msra.mxu0 0
      %1961 = vmatprep.subr.bf16.mxu0 0
      %1962 = vmatpush2.bf16.msra.mxu0 0
      %1963 = vmatprep.subr.bf16.mxu0 0
      %1964 = vmatpush2.bf16.msra.mxu0 0
      %1965 = vmatprep.subr.bf16.mxu0 0
      %1966 = vmatpush2.bf16.msra.mxu0 0
      %1967 = vmatprep.subr.bf16.mxu0 0
      %1968 = vmatpush2.bf16.msra.mxu0 0
      %1969 = vmatprep.subr.bf16.mxu0 0
      %1970 = vmatpush2.bf16.msra.mxu0 0
      %1971 = vmatprep.mubr.bf16.mxu0 0
      %1972 = vmatmul.mubr.bf16.gmra.mxu0 %v767
      %v1973 = vpop.f32.mrf.mxu0
      %v1974 = vadd.f32 0.0, %v1973
      %v1975 = vpop.f32.mrf.mxu0
      %v1976 = vpop.f32.mrf.mxu0
      %v1977 = vadd.f32 0.0, %v1976
      %v1978 = vpop.f32.mrf.mxu0
      %1979 = vmatprep.mubr.bf16.mxu0 0
      %1980 = vmatmul.mubr.bf16.gmra.mxu0 %v768
      %v1981 = vpop.f32.mrf.mxu0
      %v1982 = vadd.f32 0.0, %v1981
      %v1983 = vpop.f32.mrf.mxu0
      %v1984 = vpop.f32.mrf.mxu0
      %v1985 = vadd.f32 0.0, %v1984
      %v1986 = vpop.f32.mrf.mxu0
      %1987 = vmatprep.mubr.bf16.mxu0 0
      %1988 = vmatmul.mubr.bf16.gmra.mxu0 %v769
      %v1989 = vpop.f32.mrf.mxu0
      %v1990 = vadd.f32 0.0, %v1989
      %v1991 = vpop.f32.mrf.mxu0
      %v1992 = vpop.f32.mrf.mxu0
      %v1993 = vadd.f32 0.0, %v1992
      %v1994 = vpop.f32.mrf.mxu0
      %1995 = vmatprep.mubr.bf16.mxu0 0
      %1996 = vmatmul.mubr.bf16.gmra.mxu0 %v770
      %v1997 = vpop.f32.mrf.mxu0
      %v1998 = vadd.f32 0.0, %v1997
      %v1999 = vpop.f32.mrf.mxu0
      %v2000 = vpop.f32.mrf.mxu0
      %v2001 = vadd.f32 0.0, %v2000
      %v2002 = vpop.f32.mrf.mxu0
      %2003 = vmatprep.mubr.bf16.mxu0 0
      %2004 = vmatmul.mubr.bf16.gmra.mxu0 %v771
      %v2005 = vpop.f32.mrf.mxu0
      %v2006 = vadd.f32 0.0, %v2005
      %v2007 = vpop.f32.mrf.mxu0
      %v2008 = vpop.f32.mrf.mxu0
      %v2009 = vadd.f32 0.0, %v2008
      %v2010 = vpop.f32.mrf.mxu0
      %2011 = vmatprep.mubr.bf16.mxu0 0
      %2012 = vmatmul.mubr.bf16.gmra.mxu0 %v772
      %v2013 = vpop.f32.mrf.mxu0
      %v2014 = vadd.f32 0.0, %v2013
      %v2015 = vpop.f32.mrf.mxu0
      %v2016 = vpop.f32.mrf.mxu0
      %v2017 = vadd.f32 0.0, %v2016
      %v2018 = vpop.f32.mrf.mxu0
      %2019 = vmatprep.mubr.bf16.mxu0 0
      %2020 = vmatmul.mubr.bf16.gmra.mxu0 %v773
      %v2021 = vpop.f32.mrf.mxu0
      %v2022 = vadd.f32 0.0, %v2021
      %v2023 = vpop.f32.mrf.mxu0
      %v2024 = vpop.f32.mrf.mxu0
      %v2025 = vadd.f32 0.0, %v2024
      %v2026 = vpop.f32.mrf.mxu0
      %2027 = vmatprep.mubr.bf16.mxu0 0
      %2028 = vmatmul.mubr.bf16.gmra.mxu0 %v774
      %v2029 = vpop.f32.mrf.mxu0
      %v2030 = vadd.f32 0.0, %v2029
      %v2031 = vpop.f32.mrf.mxu0
      %v2032 = vpop.f32.mrf.mxu0
      %v2033 = vadd.f32 0.0, %v2032
      %v2034 = vpop.f32.mrf.mxu0
      %2035 = vmatprep.mubr.bf16.mxu0 0
      %2036 = vmatmul.mubr.bf16.gmra.mxu0 %v775
      %v2037 = vpop.f32.mrf.mxu0
      %v2038 = vadd.f32 0.0, %v2037
      %v2039 = vpop.f32.mrf.mxu0
      %v2040 = vpop.f32.mrf.mxu0
      %v2041 = vadd.f32 0.0, %v2040
      %v2042 = vpop.f32.mrf.mxu0
      %2043 = vmatprep.mubr.bf16.mxu0 0
      %2044 = vmatmul.mubr.bf16.gmra.mxu0 %v776
      %v2045 = vpop.f32.mrf.mxu0
      %v2046 = vadd.f32 0.0, %v2045
      %v2047 = vpop.f32.mrf.mxu0
      %v2048 = vpop.f32.mrf.mxu0
      %v2049 = vadd.f32 0.0, %v2048
      %v2050 = vpop.f32.mrf.mxu0
      %2051 = vmatprep.mubr.bf16.mxu0 0
      %2052 = vmatmul.mubr.bf16.gmra.mxu0 %v777
      %v2053 = vpop.f32.mrf.mxu0
      %v2054 = vadd.f32 0.0, %v2053
      %v2055 = vpop.f32.mrf.mxu0
      %v2056 = vpop.f32.mrf.mxu0
      %v2057 = vadd.f32 0.0, %v2056
      %v2058 = vpop.f32.mrf.mxu0
      %2059 = vmatprep.mubr.bf16.mxu0 0
      %2060 = vmatmul.mubr.bf16.gmra.mxu0 %v778
      %v2061 = vpop.f32.mrf.mxu0
      %v2062 = vadd.f32 0.0, %v2061
      %v2063 = vpop.f32.mrf.mxu0
      %v2064 = vpop.f32.mrf.mxu0
      %v2065 = vadd.f32 0.0, %v2064
      %v2066 = vpop.f32.mrf.mxu0
      %2067 = vmatprep.mubr.bf16.mxu0 0
      %2068 = vmatmul.mubr.bf16.gmra.mxu0 %v779
      %v2069 = vpop.f32.mrf.mxu0
      %v2070 = vadd.f32 0.0, %v2069
      %v2071 = vpop.f32.mrf.mxu0
      %v2072 = vpop.f32.mrf.mxu0
      %v2073 = vadd.f32 0.0, %v2072
      %v2074 = vpop.f32.mrf.mxu0
      %2075 = vmatprep.mubr.bf16.mxu0 0
      %2076 = vmatmul.mubr.bf16.gmra.mxu0 %v780
      %v2077 = vpop.f32.mrf.mxu0
      %v2078 = vadd.f32 0.0, %v2077
      %v2079 = vpop.f32.mrf.mxu0
      %v2080 = vpop.f32.mrf.mxu0
      %v2081 = vadd.f32 0.0, %v2080
      %v2082 = vpop.f32.mrf.mxu0
      %2083 = vmatprep.mubr.bf16.mxu0 0
      %2084 = vmatmul.mubr.bf16.gmra.mxu0 %v781
      %v2085 = vpop.f32.mrf.mxu0
      %v2086 = vadd.f32 0.0, %v2085
      %v2087 = vpop.f32.mrf.mxu0
      %v2088 = vpop.f32.mrf.mxu0
      %v2089 = vadd.f32 0.0, %v2088
      %v2090 = vpop.f32.mrf.mxu0
      %2091 = vmatprep.mubr.bf16.mxu0 0
      %2092 = vmatmul.mubr.bf16.gmra.mxu0 %v1873
      %v2093 = vpop.f32.mrf.mxu0
      %v2094 = vadd.f32 0.0, %v2093
      %v2095 = vpop.f32.mrf.mxu0
      %v2096 = vpop.f32.mrf.mxu0
      %v2097 = vadd.f32 0.0, %v2096
      %v2098 = vpop.f32.mrf.mxu0
      %2099 = vdwg.mxu0
      %v2100 = vadd.f32 %v1831, %v1974
      %v2101 = vadd.f32 %v1832, %v1977
      %v2102 = vadd.f32 %v1833, %v1982
      %v2103 = vadd.f32 %v1834, %v1985
      %v2104 = vadd.f32 %v1835, %v1990
      %v2105 = vadd.f32 %v1836, %v1993
      %v2106 = vadd.f32 %v1837, %v1998
      %v2107 = vadd.f32 %v1838, %v2001
      %v2108 = vadd.f32 %v1839, %v2006
      %v2109 = vadd.f32 %v1840, %v2009
      %v2110 = vadd.f32 %v1841, %v2014
      %v2111 = vadd.f32 %v1842, %v2017
      %v2112 = vadd.f32 %v1843, %v2022
      %v2113 = vadd.f32 %v1844, %v2025
      %v2114 = vadd.f32 %v1845, %v2030
      %v2115 = vadd.f32 %v1846, %v2033
      %v2116 = vadd.f32 %v1847, %v2038
      %v2117 = vadd.f32 %v1848, %v2041
      %v2118 = vadd.f32 %v1849, %v2046
      %v2119 = vadd.f32 %v1850, %v2049
      %v2120 = vadd.f32 %v1851, %v2054
      %v2121 = vadd.f32 %v1852, %v2057
      %v2122 = vadd.f32 %v1853, %v2062
      %v2123 = vadd.f32 %v1854, %v2065
      %v2124 = vadd.f32 %v1855, %v2070
      %v2125 = vadd.f32 %v1856, %v2073
      %v2126 = vadd.f32 %v1857, %v2078
      %v2127 = vadd.f32 %v1858, %v2081
      %v2128 = vadd.f32 %v1859, %v2086
      %v2129 = vadd.f32 %v1860, %v2089
      %v2130 = vadd.f32 %v1861, %v2094
      %v2131 = vadd.f32 %v1862, %v2097
      %v2132 = vrot.slane %v567, 2
      %v2133 = vrot.slane %v568, 2
      %v2134 = vsel %vm1217, %v2132, %v2133
      %v2135 = vrot.slane %v569, 2
      %v2136 = vsel %vm1217, %v2133, %v2135
      %v2139 = vpack.c.bf16 %v2136, %v2134
      %s2140 = scalar_lea.vmem %s2, 320
      %v2141 = vld [vmem:[%s2140] sm:$0xf]
      %v2142 = vld [vmem:[%s2140 + $0x4] sm:$0xf]
      %v2143 = vld [vmem:[%s2140 + $0x8] sm:$0xf]
      %v2144 = vld [vmem:[%s2140 + $0xc] sm:$0xf]
      %v2145 = vld [vmem:[%s2140 + $0x10] sm:$0xf]
      %v2146 = vld [vmem:[%s2140 + $0x14] sm:$0xf]
      %v2147 = vld [vmem:[%s2140 + $0x18] sm:$0xf]
      %v2148 = vld [vmem:[%s2140 + $0x1c] sm:$0xf]
      %v2149 = vld [vmem:[%s2140 + $0x20] sm:$0xf]
      %v2150 = vld [vmem:[%s2140 + $0x24] sm:$0xf]
      %v2151 = vld [vmem:[%s2140 + $0x28] sm:$0xf]
      %v2152 = vld [vmem:[%s2140 + $0x2c] sm:$0xf]
      %v2153 = vld [vmem:[%s2140 + $0x30] sm:$0xf]
      %v2154 = vld [vmem:[%s2140 + $0x34] sm:$0xf]
      %v2155 = vld [vmem:[%s2140 + $0x38] sm:$0xf]
      %v2156 = vld [vmem:[%s2140 + $0x3c] sm:$0xf]
      %v2173 = vunpack.c.l.b16 %v2141
      %v2174 = vunpack.c.l.b16 %v2142
      %v2175 = vunpack.c.l.b16 %v2143
      %v2176 = vunpack.c.l.b16 %v2144
      %v2177 = vunpack.c.l.b16 %v2145
      %v2178 = vunpack.c.l.b16 %v2146
      %v2179 = vunpack.c.l.b16 %v2147
      %v2180 = vunpack.c.l.b16 %v2148
      %v2181 = vunpack.c.l.b16 %v2149
      %v2182 = vunpack.c.l.b16 %v2150
      %v2183 = vunpack.c.l.b16 %v2151
      %v2184 = vunpack.c.l.b16 %v2152
      %v2185 = vunpack.c.l.b16 %v2153
      %v2186 = vunpack.c.l.b16 %v2154
      %v2187 = vunpack.c.l.b16 %v2155
      %v2188 = vunpack.c.l.b16 %v2156
      %v2189 = vpack.c.b16 %v2174, %v2173
      %v2190 = vpack.c.b16 %v2176, %v2175
      %v2191 = vpack.c.b16 %v2178, %v2177
      %v2192 = vpack.c.b16 %v2180, %v2179
      %v2193 = vpack.c.b16 %v2182, %v2181
      %v2194 = vpack.c.b16 %v2184, %v2183
      %v2195 = vpack.c.b16 %v2186, %v2185
      %v2196 = vpack.c.b16 %v2188, %v2187
      %2205 = vmatprep.subr.bf16.mxu0 0
      %2206 = vmatpush1.bf16.msra.mxu0 %v2196
      %2207 = vmatprep.subr.bf16.mxu0 0
      %2208 = vmatpush1.bf16.msra.mxu0 %v2195
      %2209 = vmatprep.subr.bf16.mxu0 0
      %2210 = vmatpush1.bf16.msra.mxu0 %v2194
      %2211 = vmatprep.subr.bf16.mxu0 0
      %2212 = vmatpush1.bf16.msra.mxu0 %v2193
      %2213 = vmatprep.subr.bf16.mxu0 0
      %2214 = vmatpush1.bf16.msra.mxu0 %v2192
      %2215 = vmatprep.subr.bf16.mxu0 0
      %2216 = vmatpush1.bf16.msra.mxu0 %v2191
      %2217 = vmatprep.subr.bf16.mxu0 0
      %2218 = vmatpush1.bf16.msra.mxu0 %v2190
      %2219 = vmatprep.subr.bf16.mxu0 0
      %2220 = vmatpush1.bf16.msra.mxu0 %v2189
      %2221 = vmatprep.subr.bf16.mxu0 0
      %2222 = vmatpush2.bf16.msra.mxu0 0
      %2223 = vmatprep.subr.bf16.mxu0 0
      %2224 = vmatpush2.bf16.msra.mxu0 0
      %2225 = vmatprep.subr.bf16.mxu0 0
      %2226 = vmatpush2.bf16.msra.mxu0 0
      %2227 = vmatprep.subr.bf16.mxu0 0
      %2228 = vmatpush2.bf16.msra.mxu0 0
      %2229 = vmatprep.subr.bf16.mxu0 0
      %2230 = vmatpush2.bf16.msra.mxu0 0
      %2231 = vmatprep.subr.bf16.mxu0 0
      %2232 = vmatpush2.bf16.msra.mxu0 0
      %2233 = vmatprep.subr.bf16.mxu0 0
      %2234 = vmatpush2.bf16.msra.mxu0 0
      %2235 = vmatprep.subr.bf16.mxu0 0
      %2236 = vmatpush2.bf16.msra.mxu0 0
      %2237 = vmatprep.mubr.bf16.mxu0 0
      %2238 = vmatmul.mubr.bf16.gmra.mxu0 %v1331
      %v2239 = vpop.f32.mrf.mxu0
      %v2240 = vadd.f32 0.0, %v2239
      %v2241 = vpop.f32.mrf.mxu0
      %v2242 = vpop.f32.mrf.mxu0
      %v2243 = vadd.f32 0.0, %v2242
      %v2244 = vpop.f32.mrf.mxu0
      %2245 = vmatprep.mubr.bf16.mxu0 0
      %2246 = vmatmul.mubr.bf16.gmra.mxu0 %v1332
      %v2247 = vpop.f32.mrf.mxu0
      %v2248 = vadd.f32 0.0, %v2247
      %v2249 = vpop.f32.mrf.mxu0
      %v2250 = vpop.f32.mrf.mxu0
      %v2251 = vadd.f32 0.0, %v2250
      %v2252 = vpop.f32.mrf.mxu0
      %2253 = vmatprep.mubr.bf16.mxu0 0
      %2254 = vmatmul.mubr.bf16.gmra.mxu0 %v1333
      %v2255 = vpop.f32.mrf.mxu0
      %v2256 = vadd.f32 0.0, %v2255
      %v2257 = vpop.f32.mrf.mxu0
      %v2258 = vpop.f32.mrf.mxu0
      %v2259 = vadd.f32 0.0, %v2258
      %v2260 = vpop.f32.mrf.mxu0
      %2261 = vmatprep.mubr.bf16.mxu0 0
      %2262 = vmatmul.mubr.bf16.gmra.mxu0 %v1334
      %v2263 = vpop.f32.mrf.mxu0
      %v2264 = vadd.f32 0.0, %v2263
      %v2265 = vpop.f32.mrf.mxu0
      %v2266 = vpop.f32.mrf.mxu0
      %v2267 = vadd.f32 0.0, %v2266
      %v2268 = vpop.f32.mrf.mxu0
      %2269 = vmatprep.mubr.bf16.mxu0 0
      %2270 = vmatmul.mubr.bf16.gmra.mxu0 %v1335
      %v2271 = vpop.f32.mrf.mxu0
      %v2272 = vadd.f32 0.0, %v2271
      %v2273 = vpop.f32.mrf.mxu0
      %v2274 = vpop.f32.mrf.mxu0
      %v2275 = vadd.f32 0.0, %v2274
      %v2276 = vpop.f32.mrf.mxu0
      %2277 = vmatprep.mubr.bf16.mxu0 0
      %2278 = vmatmul.mubr.bf16.gmra.mxu0 %v1336
      %v2279 = vpop.f32.mrf.mxu0
      %v2280 = vadd.f32 0.0, %v2279
      %v2281 = vpop.f32.mrf.mxu0
      %v2282 = vpop.f32.mrf.mxu0
      %v2283 = vadd.f32 0.0, %v2282
      %v2284 = vpop.f32.mrf.mxu0
      %2285 = vmatprep.mubr.bf16.mxu0 0
      %2286 = vmatmul.mubr.bf16.gmra.mxu0 %v1337
      %v2287 = vpop.f32.mrf.mxu0
      %v2288 = vadd.f32 0.0, %v2287
      %v2289 = vpop.f32.mrf.mxu0
      %v2290 = vpop.f32.mrf.mxu0
      %v2291 = vadd.f32 0.0, %v2290
      %v2292 = vpop.f32.mrf.mxu0
      %2293 = vmatprep.mubr.bf16.mxu0 0
      %2294 = vmatmul.mubr.bf16.gmra.mxu0 %v1338
      %v2295 = vpop.f32.mrf.mxu0
      %v2296 = vadd.f32 0.0, %v2295
      %v2297 = vpop.f32.mrf.mxu0
      %v2298 = vpop.f32.mrf.mxu0
      %v2299 = vadd.f32 0.0, %v2298
      %v2300 = vpop.f32.mrf.mxu0
      %2301 = vmatprep.mubr.bf16.mxu0 0
      %2302 = vmatmul.mubr.bf16.gmra.mxu0 %v1339
      %v2303 = vpop.f32.mrf.mxu0
      %v2304 = vadd.f32 0.0, %v2303
      %v2305 = vpop.f32.mrf.mxu0
      %v2306 = vpop.f32.mrf.mxu0
      %v2307 = vadd.f32 0.0, %v2306
      %v2308 = vpop.f32.mrf.mxu0
      %2309 = vmatprep.mubr.bf16.mxu0 0
      %2310 = vmatmul.mubr.bf16.gmra.mxu0 %v1340
      %v2311 = vpop.f32.mrf.mxu0
      %v2312 = vadd.f32 0.0, %v2311
      %v2313 = vpop.f32.mrf.mxu0
      %v2314 = vpop.f32.mrf.mxu0
      %v2315 = vadd.f32 0.0, %v2314
      %v2316 = vpop.f32.mrf.mxu0
      %2317 = vmatprep.mubr.bf16.mxu0 0
      %2318 = vmatmul.mubr.bf16.gmra.mxu0 %v1341
      %v2319 = vpop.f32.mrf.mxu0
      %v2320 = vadd.f32 0.0, %v2319
      %v2321 = vpop.f32.mrf.mxu0
      %v2322 = vpop.f32.mrf.mxu0
      %v2323 = vadd.f32 0.0, %v2322
      %v2324 = vpop.f32.mrf.mxu0
      %2325 = vmatprep.mubr.bf16.mxu0 0
      %2326 = vmatmul.mubr.bf16.gmra.mxu0 %v1342
      %v2327 = vpop.f32.mrf.mxu0
      %v2328 = vadd.f32 0.0, %v2327
      %v2329 = vpop.f32.mrf.mxu0
      %v2330 = vpop.f32.mrf.mxu0
      %v2331 = vadd.f32 0.0, %v2330
      %v2332 = vpop.f32.mrf.mxu0
      %2333 = vmatprep.mubr.bf16.mxu0 0
      %2334 = vmatmul.mubr.bf16.gmra.mxu0 %v1343
      %v2335 = vpop.f32.mrf.mxu0
      %v2336 = vadd.f32 0.0, %v2335
      %v2337 = vpop.f32.mrf.mxu0
      %v2338 = vpop.f32.mrf.mxu0
      %v2339 = vadd.f32 0.0, %v2338
      %v2340 = vpop.f32.mrf.mxu0
      %2341 = vmatprep.mubr.bf16.mxu0 0
      %2342 = vmatmul.mubr.bf16.gmra.mxu0 %v1344
      %v2343 = vpop.f32.mrf.mxu0
      %v2344 = vadd.f32 0.0, %v2343
      %v2345 = vpop.f32.mrf.mxu0
      %v2346 = vpop.f32.mrf.mxu0
      %v2347 = vadd.f32 0.0, %v2346
      %v2348 = vpop.f32.mrf.mxu0
      %2349 = vmatprep.mubr.bf16.mxu0 0
      %2350 = vmatmul.mubr.bf16.gmra.mxu0 %v1345
      %v2351 = vpop.f32.mrf.mxu0
      %v2352 = vadd.f32 0.0, %v2351
      %v2353 = vpop.f32.mrf.mxu0
      %v2354 = vpop.f32.mrf.mxu0
      %v2355 = vadd.f32 0.0, %v2354
      %v2356 = vpop.f32.mrf.mxu0
      %2357 = vmatprep.mubr.bf16.mxu0 0
      %2358 = vmatmul.mubr.bf16.gmra.mxu0 %v2139
      %v2359 = vpop.f32.mrf.mxu0
      %v2360 = vadd.f32 0.0, %v2359
      %v2361 = vpop.f32.mrf.mxu0
      %v2362 = vpop.f32.mrf.mxu0
      %v2363 = vadd.f32 0.0, %v2362
      %v2364 = vpop.f32.mrf.mxu0
      %2365 = vdwg.mxu0
      %v2366 = vadd.f32 %v2100, %v2240
      %v2367 = vadd.f32 %v2101, %v2243
      %v2368 = vadd.f32 %v2102, %v2248
      %v2369 = vadd.f32 %v2103, %v2251
      %v2370 = vadd.f32 %v2104, %v2256
      %v2371 = vadd.f32 %v2105, %v2259
      %v2372 = vadd.f32 %v2106, %v2264
      %v2373 = vadd.f32 %v2107, %v2267
      %v2374 = vadd.f32 %v2108, %v2272
      %v2375 = vadd.f32 %v2109, %v2275
      %v2376 = vadd.f32 %v2110, %v2280
      %v2377 = vadd.f32 %v2111, %v2283
      %v2378 = vadd.f32 %v2112, %v2288
      %v2379 = vadd.f32 %v2113, %v2291
      %v2380 = vadd.f32 %v2114, %v2296
      %v2381 = vadd.f32 %v2115, %v2299
      %v2382 = vadd.f32 %v2116, %v2304
      %v2383 = vadd.f32 %v2117, %v2307
      %v2384 = vadd.f32 %v2118, %v2312
      %v2385 = vadd.f32 %v2119, %v2315
      %v2386 = vadd.f32 %v2120, %v2320
      %v2387 = vadd.f32 %v2121, %v2323
      %v2388 = vadd.f32 %v2122, %v2328
      %v2389 = vadd.f32 %v2123, %v2331
      %v2390 = vadd.f32 %v2124, %v2336
      %v2391 = vadd.f32 %v2125, %v2339
      %v2392 = vadd.f32 %v2126, %v2344
      %v2393 = vadd.f32 %v2127, %v2347
      %v2394 = vadd.f32 %v2128, %v2352
      %v2395 = vadd.f32 %v2129, %v2355
      %v2396 = vadd.f32 %v2130, %v2360
      %v2397 = vadd.f32 %v2131, %v2363
      %v2398 = vpack.c.bf16 %v571, %v570
      %s2399 = scalar_lea.vmem %s2, 384
      %v2400 = vld [vmem:[%s2399] sm:$0xf]
      %v2401 = vld [vmem:[%s2399 + $0x4] sm:$0xf]
      %v2402 = vld [vmem:[%s2399 + $0x8] sm:$0xf]
      %v2403 = vld [vmem:[%s2399 + $0xc] sm:$0xf]
      %v2404 = vld [vmem:[%s2399 + $0x10] sm:$0xf]
      %v2405 = vld [vmem:[%s2399 + $0x14] sm:$0xf]
      %v2406 = vld [vmem:[%s2399 + $0x18] sm:$0xf]
      %v2407 = vld [vmem:[%s2399 + $0x1c] sm:$0xf]
      %v2408 = vld [vmem:[%s2399 + $0x20] sm:$0xf]
      %v2409 = vld [vmem:[%s2399 + $0x24] sm:$0xf]
      %v2410 = vld [vmem:[%s2399 + $0x28] sm:$0xf]
      %v2411 = vld [vmem:[%s2399 + $0x2c] sm:$0xf]
      %v2412 = vld [vmem:[%s2399 + $0x30] sm:$0xf]
      %v2413 = vld [vmem:[%s2399 + $0x34] sm:$0xf]
      %v2414 = vld [vmem:[%s2399 + $0x38] sm:$0xf]
      %v2415 = vld [vmem:[%s2399 + $0x3c] sm:$0xf]
      %v2432 = vunpack.c.l.b16 %v2400
      %v2433 = vunpack.c.l.b16 %v2401
      %v2434 = vunpack.c.l.b16 %v2402
      %v2435 = vunpack.c.l.b16 %v2403
      %v2436 = vunpack.c.l.b16 %v2404
      %v2437 = vunpack.c.l.b16 %v2405
      %v2438 = vunpack.c.l.b16 %v2406
      %v2439 = vunpack.c.l.b16 %v2407
      %v2440 = vunpack.c.l.b16 %v2408
      %v2441 = vunpack.c.l.b16 %v2409
      %v2442 = vunpack.c.l.b16 %v2410
      %v2443 = vunpack.c.l.b16 %v2411
      %v2444 = vunpack.c.l.b16 %v2412
      %v2445 = vunpack.c.l.b16 %v2413
      %v2446 = vunpack.c.l.b16 %v2414
      %v2447 = vunpack.c.l.b16 %v2415
      %v2448 = vpack.c.b16 %v2433, %v2432
      %v2449 = vpack.c.b16 %v2435, %v2434
      %v2450 = vpack.c.b16 %v2437, %v2436
      %v2451 = vpack.c.b16 %v2439, %v2438
      %v2452 = vpack.c.b16 %v2441, %v2440
      %v2453 = vpack.c.b16 %v2443, %v2442
      %v2454 = vpack.c.b16 %v2445, %v2444
      %v2455 = vpack.c.b16 %v2447, %v2446
      %2464 = vmatprep.subr.bf16.mxu0 0
      %2465 = vmatpush1.bf16.msra.mxu0 %v2455
      %2466 = vmatprep.subr.bf16.mxu0 0
      %2467 = vmatpush1.bf16.msra.mxu0 %v2454
      %2468 = vmatprep.subr.bf16.mxu0 0
      %2469 = vmatpush1.bf16.msra.mxu0 %v2453
      %2470 = vmatprep.subr.bf16.mxu0 0
      %2471 = vmatpush1.bf16.msra.mxu0 %v2452
      %2472 = vmatprep.subr.bf16.mxu0 0
      %2473 = vmatpush1.bf16.msra.mxu0 %v2451
      %2474 = vmatprep.subr.bf16.mxu0 0
      %2475 = vmatpush1.bf16.msra.mxu0 %v2450
      %2476 = vmatprep.subr.bf16.mxu0 0
      %2477 = vmatpush1.bf16.msra.mxu0 %v2449
      %2478 = vmatprep.subr.bf16.mxu0 0
      %2479 = vmatpush1.bf16.msra.mxu0 %v2448
      %2480 = vmatprep.subr.bf16.mxu0 0
      %2481 = vmatpush2.bf16.msra.mxu0 0
      %2482 = vmatprep.subr.bf16.mxu0 0
      %2483 = vmatpush2.bf16.msra.mxu0 0
      %2484 = vmatprep.subr.bf16.mxu0 0
      %2485 = vmatpush2.bf16.msra.mxu0 0
      %2486 = vmatprep.subr.bf16.mxu0 0
      %2487 = vmatpush2.bf16.msra.mxu0 0
      %2488 = vmatprep.subr.bf16.mxu0 0
      %2489 = vmatpush2.bf16.msra.mxu0 0
      %2490 = vmatprep.subr.bf16.mxu0 0
      %2491 = vmatpush2.bf16.msra.mxu0 0
      %2492 = vmatprep.subr.bf16.mxu0 0
      %2493 = vmatpush2.bf16.msra.mxu0 0
      %2494 = vmatprep.subr.bf16.mxu0 0
      %2495 = vmatpush2.bf16.msra.mxu0 0
      %2496 = vmatprep.mubr.bf16.mxu0 0
      %2497 = vmatmul.mubr.bf16.gmra.mxu0 %v575
      %v2498 = vpop.f32.mrf.mxu0
      %v2499 = vadd.f32 0.0, %v2498
      %v2500 = vpop.f32.mrf.mxu0
      %v2501 = vpop.f32.mrf.mxu0
      %v2502 = vadd.f32 0.0, %v2501
      %v2503 = vpop.f32.mrf.mxu0
      %2504 = vmatprep.mubr.bf16.mxu0 0
      %2505 = vmatmul.mubr.bf16.gmra.mxu0 %v576
      %v2506 = vpop.f32.mrf.mxu0
      %v2507 = vadd.f32 0.0, %v2506
      %v2508 = vpop.f32.mrf.mxu0
      %v2509 = vpop.f32.mrf.mxu0
      %v2510 = vadd.f32 0.0, %v2509
      %v2511 = vpop.f32.mrf.mxu0
      %2512 = vmatprep.mubr.bf16.mxu0 0
      %2513 = vmatmul.mubr.bf16.gmra.mxu0 %v577
      %v2514 = vpop.f32.mrf.mxu0
      %v2515 = vadd.f32 0.0, %v2514
      %v2516 = vpop.f32.mrf.mxu0
      %v2517 = vpop.f32.mrf.mxu0
      %v2518 = vadd.f32 0.0, %v2517
      %v2519 = vpop.f32.mrf.mxu0
      %2520 = vmatprep.mubr.bf16.mxu0 0
      %2521 = vmatmul.mubr.bf16.gmra.mxu0 %v578
      %v2522 = vpop.f32.mrf.mxu0
      %v2523 = vadd.f32 0.0, %v2522
      %v2524 = vpop.f32.mrf.mxu0
      %v2525 = vpop.f32.mrf.mxu0
      %v2526 = vadd.f32 0.0, %v2525
      %v2527 = vpop.f32.mrf.mxu0
      %2528 = vmatprep.mubr.bf16.mxu0 0
      %2529 = vmatmul.mubr.bf16.gmra.mxu0 %v579
      %v2530 = vpop.f32.mrf.mxu0
      %v2531 = vadd.f32 0.0, %v2530
      %v2532 = vpop.f32.mrf.mxu0
      %v2533 = vpop.f32.mrf.mxu0
      %v2534 = vadd.f32 0.0, %v2533
      %v2535 = vpop.f32.mrf.mxu0
      %2536 = vmatprep.mubr.bf16.mxu0 0
      %2537 = vmatmul.mubr.bf16.gmra.mxu0 %v580
      %v2538 = vpop.f32.mrf.mxu0
      %v2539 = vadd.f32 0.0, %v2538
      %v2540 = vpop.f32.mrf.mxu0
      %v2541 = vpop.f32.mrf.mxu0
      %v2542 = vadd.f32 0.0, %v2541
      %v2543 = vpop.f32.mrf.mxu0
      %2544 = vmatprep.mubr.bf16.mxu0 0
      %2545 = vmatmul.mubr.bf16.gmra.mxu0 %v581
      %v2546 = vpop.f32.mrf.mxu0
      %v2547 = vadd.f32 0.0, %v2546
      %v2548 = vpop.f32.mrf.mxu0
      %v2549 = vpop.f32.mrf.mxu0
      %v2550 = vadd.f32 0.0, %v2549
      %v2551 = vpop.f32.mrf.mxu0
      %2552 = vmatprep.mubr.bf16.mxu0 0
      %2553 = vmatmul.mubr.bf16.gmra.mxu0 %v582
      %v2554 = vpop.f32.mrf.mxu0
      %v2555 = vadd.f32 0.0, %v2554
      %v2556 = vpop.f32.mrf.mxu0
      %v2557 = vpop.f32.mrf.mxu0
      %v2558 = vadd.f32 0.0, %v2557
      %v2559 = vpop.f32.mrf.mxu0
      %2560 = vmatprep.mubr.bf16.mxu0 0
      %2561 = vmatmul.mubr.bf16.gmra.mxu0 %v583
      %v2562 = vpop.f32.mrf.mxu0
      %v2563 = vadd.f32 0.0, %v2562
      %v2564 = vpop.f32.mrf.mxu0
      %v2565 = vpop.f32.mrf.mxu0
      %v2566 = vadd.f32 0.0, %v2565
      %v2567 = vpop.f32.mrf.mxu0
      %2568 = vmatprep.mubr.bf16.mxu0 0
      %2569 = vmatmul.mubr.bf16.gmra.mxu0 %v584
      %v2570 = vpop.f32.mrf.mxu0
      %v2571 = vadd.f32 0.0, %v2570
      %v2572 = vpop.f32.mrf.mxu0
      %v2573 = vpop.f32.mrf.mxu0
      %v2574 = vadd.f32 0.0, %v2573
      %v2575 = vpop.f32.mrf.mxu0
      %2576 = vmatprep.mubr.bf16.mxu0 0
      %2577 = vmatmul.mubr.bf16.gmra.mxu0 %v585
      %v2578 = vpop.f32.mrf.mxu0
      %v2579 = vadd.f32 0.0, %v2578
      %v2580 = vpop.f32.mrf.mxu0
      %v2581 = vpop.f32.mrf.mxu0
      %v2582 = vadd.f32 0.0, %v2581
      %v2583 = vpop.f32.mrf.mxu0
      %2584 = vmatprep.mubr.bf16.mxu0 0
      %2585 = vmatmul.mubr.bf16.gmra.mxu0 %v586
      %v2586 = vpop.f32.mrf.mxu0
      %v2587 = vadd.f32 0.0, %v2586
      %v2588 = vpop.f32.mrf.mxu0
      %v2589 = vpop.f32.mrf.mxu0
      %v2590 = vadd.f32 0.0, %v2589
      %v2591 = vpop.f32.mrf.mxu0
      %2592 = vmatprep.mubr.bf16.mxu0 0
      %2593 = vmatmul.mubr.bf16.gmra.mxu0 %v587
      %v2594 = vpop.f32.mrf.mxu0
      %v2595 = vadd.f32 0.0, %v2594
      %v2596 = vpop.f32.mrf.mxu0
      %v2597 = vpop.f32.mrf.mxu0
      %v2598 = vadd.f32 0.0, %v2597
      %v2599 = vpop.f32.mrf.mxu0
      %2600 = vmatprep.mubr.bf16.mxu0 0
      %2601 = vmatmul.mubr.bf16.gmra.mxu0 %v588
      %v2602 = vpop.f32.mrf.mxu0
      %v2603 = vadd.f32 0.0, %v2602
      %v2604 = vpop.f32.mrf.mxu0
      %v2605 = vpop.f32.mrf.mxu0
      %v2606 = vadd.f32 0.0, %v2605
      %v2607 = vpop.f32.mrf.mxu0
      %2608 = vmatprep.mubr.bf16.mxu0 0
      %2609 = vmatmul.mubr.bf16.gmra.mxu0 %v1604
      %v2610 = vpop.f32.mrf.mxu0
      %v2611 = vadd.f32 0.0, %v2610
      %v2612 = vpop.f32.mrf.mxu0
      %v2613 = vpop.f32.mrf.mxu0
      %v2614 = vadd.f32 0.0, %v2613
      %v2615 = vpop.f32.mrf.mxu0
      %2616 = vmatprep.mubr.bf16.mxu0 0
      %2617 = vmatmul.mubr.bf16.gmra.mxu0 %v2398
      %v2618 = vpop.f32.mrf.mxu0
      %v2619 = vadd.f32 0.0, %v2618
      %v2620 = vpop.f32.mrf.mxu0
      %v2621 = vpop.f32.mrf.mxu0
      %v2622 = vadd.f32 0.0, %v2621
      %v2623 = vpop.f32.mrf.mxu0
      %2624 = vdwg.mxu0
      %v2625 = vadd.f32 %v2366, %v2499
      %v2626 = vadd.f32 %v2367, %v2502
      %v2627 = vadd.f32 %v2368, %v2507
      %v2628 = vadd.f32 %v2369, %v2510
      %v2629 = vadd.f32 %v2370, %v2515
      %v2630 = vadd.f32 %v2371, %v2518
      %v2631 = vadd.f32 %v2372, %v2523
      %v2632 = vadd.f32 %v2373, %v2526
      %v2633 = vadd.f32 %v2374, %v2531
      %v2634 = vadd.f32 %v2375, %v2534
      %v2635 = vadd.f32 %v2376, %v2539
      %v2636 = vadd.f32 %v2377, %v2542
      %v2637 = vadd.f32 %v2378, %v2547
      %v2638 = vadd.f32 %v2379, %v2550
      %v2639 = vadd.f32 %v2380, %v2555
      %v2640 = vadd.f32 %v2381, %v2558
      %v2641 = vadd.f32 %v2382, %v2563
      %v2642 = vadd.f32 %v2383, %v2566
      %v2643 = vadd.f32 %v2384, %v2571
      %v2644 = vadd.f32 %v2385, %v2574
      %v2645 = vadd.f32 %v2386, %v2579
      %v2646 = vadd.f32 %v2387, %v2582
      %v2647 = vadd.f32 %v2388, %v2587
      %v2648 = vadd.f32 %v2389, %v2590
      %v2649 = vadd.f32 %v2390, %v2595
      %v2650 = vadd.f32 %v2391, %v2598
      %v2651 = vadd.f32 %v2392, %v2603
      %v2652 = vadd.f32 %v2393, %v2606
      %v2653 = vadd.f32 %v2394, %v2611
      %v2654 = vadd.f32 %v2395, %v2614
      %v2655 = vadd.f32 %v2396, %v2619
      %v2656 = vadd.f32 %v2397, %v2622
      %v2660 = vrot.slane %v570, 1
      %v2661 = vrot.slane %v571, 1
      %v2662 = vsel %vm653, %v2660, %v2661
      %v2663 = vrot.slane %v572, 1
      %v2664 = vsel %vm653, %v2661, %v2663
      %v2667 = vpack.c.bf16 %v2664, %v2662
      %s2668 = scalar_lea.vmem %s2, 448
      %v2669 = vld [vmem:[%s2668] sm:$0xf]
      %v2670 = vld [vmem:[%s2668 + $0x4] sm:$0xf]
      %v2671 = vld [vmem:[%s2668 + $0x8] sm:$0xf]
      %v2672 = vld [vmem:[%s2668 + $0xc] sm:$0xf]
      %v2673 = vld [vmem:[%s2668 + $0x10] sm:$0xf]
      %v2674 = vld [vmem:[%s2668 + $0x14] sm:$0xf]
      %v2675 = vld [vmem:[%s2668 + $0x18] sm:$0xf]
      %v2676 = vld [vmem:[%s2668 + $0x1c] sm:$0xf]
      %v2677 = vld [vmem:[%s2668 + $0x20] sm:$0xf]
      %v2678 = vld [vmem:[%s2668 + $0x24] sm:$0xf]
      %v2679 = vld [vmem:[%s2668 + $0x28] sm:$0xf]
      %v2680 = vld [vmem:[%s2668 + $0x2c] sm:$0xf]
      %v2681 = vld [vmem:[%s2668 + $0x30] sm:$0xf]
      %v2682 = vld [vmem:[%s2668 + $0x34] sm:$0xf]
      %v2683 = vld [vmem:[%s2668 + $0x38] sm:$0xf]
      %v2684 = vld [vmem:[%s2668 + $0x3c] sm:$0xf]
      %v2701 = vunpack.c.l.b16 %v2669
      %v2702 = vunpack.c.l.b16 %v2670
      %v2703 = vunpack.c.l.b16 %v2671
      %v2704 = vunpack.c.l.b16 %v2672
      %v2705 = vunpack.c.l.b16 %v2673
      %v2706 = vunpack.c.l.b16 %v2674
      %v2707 = vunpack.c.l.b16 %v2675
      %v2708 = vunpack.c.l.b16 %v2676
      %v2709 = vunpack.c.l.b16 %v2677
      %v2710 = vunpack.c.l.b16 %v2678
      %v2711 = vunpack.c.l.b16 %v2679
      %v2712 = vunpack.c.l.b16 %v2680
      %v2713 = vunpack.c.l.b16 %v2681
      %v2714 = vunpack.c.l.b16 %v2682
      %v2715 = vunpack.c.l.b16 %v2683
      %v2716 = vunpack.c.l.b16 %v2684
      %v2717 = vpack.c.b16 %v2702, %v2701
      %v2718 = vpack.c.b16 %v2704, %v2703
      %v2719 = vpack.c.b16 %v2706, %v2705
      %v2720 = vpack.c.b16 %v2708, %v2707
      %v2721 = vpack.c.b16 %v2710, %v2709
      %v2722 = vpack.c.b16 %v2712, %v2711
      %v2723 = vpack.c.b16 %v2714, %v2713
      %v2724 = vpack.c.b16 %v2716, %v2715
      %2733 = vmatprep.subr.bf16.mxu0 0
      %2734 = vmatpush1.bf16.msra.mxu0 %v2724
      %2735 = vmatprep.subr.bf16.mxu0 0
      %2736 = vmatpush1.bf16.msra.mxu0 %v2723
      %2737 = vmatprep.subr.bf16.mxu0 0
      %2738 = vmatpush1.bf16.msra.mxu0 %v2722
      %2739 = vmatprep.subr.bf16.mxu0 0
      %2740 = vmatpush1.bf16.msra.mxu0 %v2721
      %2741 = vmatprep.subr.bf16.mxu0 0
      %2742 = vmatpush1.bf16.msra.mxu0 %v2720
      %2743 = vmatprep.subr.bf16.mxu0 0
      %2744 = vmatpush1.bf16.msra.mxu0 %v2719
      %2745 = vmatprep.subr.bf16.mxu0 0
      %2746 = vmatpush1.bf16.msra.mxu0 %v2718
      %2747 = vmatprep.subr.bf16.mxu0 0
      %2748 = vmatpush1.bf16.msra.mxu0 %v2717
      %2749 = vmatprep.subr.bf16.mxu0 0
      %2750 = vmatpush2.bf16.msra.mxu0 0
      %2751 = vmatprep.subr.bf16.mxu0 0
      %2752 = vmatpush2.bf16.msra.mxu0 0
      %2753 = vmatprep.subr.bf16.mxu0 0
      %2754 = vmatpush2.bf16.msra.mxu0 0
      %2755 = vmatprep.subr.bf16.mxu0 0
      %2756 = vmatpush2.bf16.msra.mxu0 0
      %2757 = vmatprep.subr.bf16.mxu0 0
      %2758 = vmatpush2.bf16.msra.mxu0 0
      %2759 = vmatprep.subr.bf16.mxu0 0
      %2760 = vmatpush2.bf16.msra.mxu0 0
      %2761 = vmatprep.subr.bf16.mxu0 0
      %2762 = vmatpush2.bf16.msra.mxu0 0
      %2763 = vmatprep.subr.bf16.mxu0 0
      %2764 = vmatpush2.bf16.msra.mxu0 0
      %2765 = vmatprep.mubr.bf16.mxu0 0
      %2766 = vmatmul.mubr.bf16.gmra.mxu0 %v768
      %v2767 = vpop.f32.mrf.mxu0
      %v2768 = vadd.f32 0.0, %v2767
      %v2769 = vpop.f32.mrf.mxu0
      %v2770 = vpop.f32.mrf.mxu0
      %v2771 = vadd.f32 0.0, %v2770
      %v2772 = vpop.f32.mrf.mxu0
      %2773 = vmatprep.mubr.bf16.mxu0 0
      %2774 = vmatmul.mubr.bf16.gmra.mxu0 %v769
      %v2775 = vpop.f32.mrf.mxu0
      %v2776 = vadd.f32 0.0, %v2775
      %v2777 = vpop.f32.mrf.mxu0
      %v2778 = vpop.f32.mrf.mxu0
      %v2779 = vadd.f32 0.0, %v2778
      %v2780 = vpop.f32.mrf.mxu0
      %2781 = vmatprep.mubr.bf16.mxu0 0
      %2782 = vmatmul.mubr.bf16.gmra.mxu0 %v770
      %v2783 = vpop.f32.mrf.mxu0
      %v2784 = vadd.f32 0.0, %v2783
      %v2785 = vpop.f32.mrf.mxu0
      %v2786 = vpop.f32.mrf.mxu0
      %v2787 = vadd.f32 0.0, %v2786
      %v2788 = vpop.f32.mrf.mxu0
      %2789 = vmatprep.mubr.bf16.mxu0 0
      %2790 = vmatmul.mubr.bf16.gmra.mxu0 %v771
      %v2791 = vpop.f32.mrf.mxu0
      %v2792 = vadd.f32 0.0, %v2791
      %v2793 = vpop.f32.mrf.mxu0
      %v2794 = vpop.f32.mrf.mxu0
      %v2795 = vadd.f32 0.0, %v2794
      %v2796 = vpop.f32.mrf.mxu0
      %2797 = vmatprep.mubr.bf16.mxu0 0
      %2798 = vmatmul.mubr.bf16.gmra.mxu0 %v772
      %v2799 = vpop.f32.mrf.mxu0
      %v2800 = vadd.f32 0.0, %v2799
      %v2801 = vpop.f32.mrf.mxu0
      %v2802 = vpop.f32.mrf.mxu0
      %v2803 = vadd.f32 0.0, %v2802
      %v2804 = vpop.f32.mrf.mxu0
      %2805 = vmatprep.mubr.bf16.mxu0 0
      %2806 = vmatmul.mubr.bf16.gmra.mxu0 %v773
      %v2807 = vpop.f32.mrf.mxu0
      %v2808 = vadd.f32 0.0, %v2807
      %v2809 = vpop.f32.mrf.mxu0
      %v2810 = vpop.f32.mrf.mxu0
      %v2811 = vadd.f32 0.0, %v2810
      %v2812 = vpop.f32.mrf.mxu0
      %2813 = vmatprep.mubr.bf16.mxu0 0
      %2814 = vmatmul.mubr.bf16.gmra.mxu0 %v774
      %v2815 = vpop.f32.mrf.mxu0
      %v2816 = vadd.f32 0.0, %v2815
      %v2817 = vpop.f32.mrf.mxu0
      %v2818 = vpop.f32.mrf.mxu0
      %v2819 = vadd.f32 0.0, %v2818
      %v2820 = vpop.f32.mrf.mxu0
      %2821 = vmatprep.mubr.bf16.mxu0 0
      %2822 = vmatmul.mubr.bf16.gmra.mxu0 %v775
      %v2823 = vpop.f32.mrf.mxu0
      %v2824 = vadd.f32 0.0, %v2823
      %v2825 = vpop.f32.mrf.mxu0
      %v2826 = vpop.f32.mrf.mxu0
      %v2827 = vadd.f32 0.0, %v2826
      %v2828 = vpop.f32.mrf.mxu0
      %2829 = vmatprep.mubr.bf16.mxu0 0
      %2830 = vmatmul.mubr.bf16.gmra.mxu0 %v776
      %v2831 = vpop.f32.mrf.mxu0
      %v2832 = vadd.f32 0.0, %v2831
      %v2833 = vpop.f32.mrf.mxu0
      %v2834 = vpop.f32.mrf.mxu0
      %v2835 = vadd.f32 0.0, %v2834
      %v2836 = vpop.f32.mrf.mxu0
      %2837 = vmatprep.mubr.bf16.mxu0 0
      %2838 = vmatmul.mubr.bf16.gmra.mxu0 %v777
      %v2839 = vpop.f32.mrf.mxu0
      %v2840 = vadd.f32 0.0, %v2839
      %v2841 = vpop.f32.mrf.mxu0
      %v2842 = vpop.f32.mrf.mxu0
      %v2843 = vadd.f32 0.0, %v2842
      %v2844 = vpop.f32.mrf.mxu0
      %2845 = vmatprep.mubr.bf16.mxu0 0
      %2846 = vmatmul.mubr.bf16.gmra.mxu0 %v778
      %v2847 = vpop.f32.mrf.mxu0
      %v2848 = vadd.f32 0.0, %v2847
      %v2849 = vpop.f32.mrf.mxu0
      %v2850 = vpop.f32.mrf.mxu0
      %v2851 = vadd.f32 0.0, %v2850
      %v2852 = vpop.f32.mrf.mxu0
      %2853 = vmatprep.mubr.bf16.mxu0 0
      %2854 = vmatmul.mubr.bf16.gmra.mxu0 %v779
      %v2855 = vpop.f32.mrf.mxu0
      %v2856 = vadd.f32 0.0, %v2855
      %v2857 = vpop.f32.mrf.mxu0
      %v2858 = vpop.f32.mrf.mxu0
      %v2859 = vadd.f32 0.0, %v2858
      %v2860 = vpop.f32.mrf.mxu0
      %2861 = vmatprep.mubr.bf16.mxu0 0
      %2862 = vmatmul.mubr.bf16.gmra.mxu0 %v780
      %v2863 = vpop.f32.mrf.mxu0
      %v2864 = vadd.f32 0.0, %v2863
      %v2865 = vpop.f32.mrf.mxu0
      %v2866 = vpop.f32.mrf.mxu0
      %v2867 = vadd.f32 0.0, %v2866
      %v2868 = vpop.f32.mrf.mxu0
      %2869 = vmatprep.mubr.bf16.mxu0 0
      %2870 = vmatmul.mubr.bf16.gmra.mxu0 %v781
      %v2871 = vpop.f32.mrf.mxu0
      %v2872 = vadd.f32 0.0, %v2871
      %v2873 = vpop.f32.mrf.mxu0
      %v2874 = vpop.f32.mrf.mxu0
      %v2875 = vadd.f32 0.0, %v2874
      %v2876 = vpop.f32.mrf.mxu0
      %2877 = vmatprep.mubr.bf16.mxu0 0
      %2878 = vmatmul.mubr.bf16.gmra.mxu0 %v1873
      %v2879 = vpop.f32.mrf.mxu0
      %v2880 = vadd.f32 0.0, %v2879
      %v2881 = vpop.f32.mrf.mxu0
      %v2882 = vpop.f32.mrf.mxu0
      %v2883 = vadd.f32 0.0, %v2882
      %v2884 = vpop.f32.mrf.mxu0
      %2885 = vmatprep.mubr.bf16.mxu0 0
      %2886 = vmatmul.mubr.bf16.gmra.mxu0 %v2667
      %v2887 = vpop.f32.mrf.mxu0
      %v2888 = vadd.f32 0.0, %v2887
      %v2889 = vpop.f32.mrf.mxu0
      %v2890 = vpop.f32.mrf.mxu0
      %v2891 = vadd.f32 0.0, %v2890
      %v2892 = vpop.f32.mrf.mxu0
      %2893 = vdwg.mxu0
      %v2894 = vadd.f32 %v2625, %v2768
      %v2895 = vadd.f32 %v2626, %v2771
      %v2896 = vadd.f32 %v2627, %v2776
      %v2897 = vadd.f32 %v2628, %v2779
      %v2898 = vadd.f32 %v2629, %v2784
      %v2899 = vadd.f32 %v2630, %v2787
      %v2900 = vadd.f32 %v2631, %v2792
      %v2901 = vadd.f32 %v2632, %v2795
      %v2902 = vadd.f32 %v2633, %v2800
      %v2903 = vadd.f32 %v2634, %v2803
      %v2904 = vadd.f32 %v2635, %v2808
      %v2905 = vadd.f32 %v2636, %v2811
      %v2906 = vadd.f32 %v2637, %v2816
      %v2907 = vadd.f32 %v2638, %v2819
      %v2908 = vadd.f32 %v2639, %v2824
      %v2909 = vadd.f32 %v2640, %v2827
      %v2910 = vadd.f32 %v2641, %v2832
      %v2911 = vadd.f32 %v2642, %v2835
      %v2912 = vadd.f32 %v2643, %v2840
      %v2913 = vadd.f32 %v2644, %v2843
      %v2914 = vadd.f32 %v2645, %v2848
      %v2915 = vadd.f32 %v2646, %v2851
      %v2916 = vadd.f32 %v2647, %v2856
      %v2917 = vadd.f32 %v2648, %v2859
      %v2918 = vadd.f32 %v2649, %v2864
      %v2919 = vadd.f32 %v2650, %v2867
      %v2920 = vadd.f32 %v2651, %v2872
      %v2921 = vadd.f32 %v2652, %v2875
      %v2922 = vadd.f32 %v2653, %v2880
      %v2923 = vadd.f32 %v2654, %v2883
      %v2924 = vadd.f32 %v2655, %v2888
      %v2925 = vadd.f32 %v2656, %v2891
      %v2926 = vrot.slane %v570, 2
      %v2927 = vrot.slane %v571, 2
      %v2928 = vsel %vm1217, %v2926, %v2927
      %v2929 = vrot.slane %v572, 2
      %v2930 = vsel %vm1217, %v2927, %v2929
      %v2933 = vpack.c.bf16 %v2930, %v2928
      %s2934 = scalar_lea.vmem %s2, 512
      %v2935 = vld [vmem:[%s2934] sm:$0xf]
      %v2936 = vld [vmem:[%s2934 + $0x4] sm:$0xf]
      %v2937 = vld [vmem:[%s2934 + $0x8] sm:$0xf]
      %v2938 = vld [vmem:[%s2934 + $0xc] sm:$0xf]
      %v2939 = vld [vmem:[%s2934 + $0x10] sm:$0xf]
      %v2940 = vld [vmem:[%s2934 + $0x14] sm:$0xf]
      %v2941 = vld [vmem:[%s2934 + $0x18] sm:$0xf]
      %v2942 = vld [vmem:[%s2934 + $0x1c] sm:$0xf]
      %v2943 = vld [vmem:[%s2934 + $0x20] sm:$0xf]
      %v2944 = vld [vmem:[%s2934 + $0x24] sm:$0xf]
      %v2945 = vld [vmem:[%s2934 + $0x28] sm:$0xf]
      %v2946 = vld [vmem:[%s2934 + $0x2c] sm:$0xf]
      %v2947 = vld [vmem:[%s2934 + $0x30] sm:$0xf]
      %v2948 = vld [vmem:[%s2934 + $0x34] sm:$0xf]
      %v2949 = vld [vmem:[%s2934 + $0x38] sm:$0xf]
      %v2950 = vld [vmem:[%s2934 + $0x3c] sm:$0xf]
      %v2967 = vunpack.c.l.b16 %v2935
      %v2968 = vunpack.c.l.b16 %v2936
      %v2969 = vunpack.c.l.b16 %v2937
      %v2970 = vunpack.c.l.b16 %v2938
      %v2971 = vunpack.c.l.b16 %v2939
      %v2972 = vunpack.c.l.b16 %v2940
      %v2973 = vunpack.c.l.b16 %v2941
      %v2974 = vunpack.c.l.b16 %v2942
      %v2975 = vunpack.c.l.b16 %v2943
      %v2976 = vunpack.c.l.b16 %v2944
      %v2977 = vunpack.c.l.b16 %v2945
      %v2978 = vunpack.c.l.b16 %v2946
      %v2979 = vunpack.c.l.b16 %v2947
      %v2980 = vunpack.c.l.b16 %v2948
      %v2981 = vunpack.c.l.b16 %v2949
      %v2982 = vunpack.c.l.b16 %v2950
      %v2983 = vpack.c.b16 %v2968, %v2967
      %v2984 = vpack.c.b16 %v2970, %v2969
      %v2985 = vpack.c.b16 %v2972, %v2971
      %v2986 = vpack.c.b16 %v2974, %v2973
      %v2987 = vpack.c.b16 %v2976, %v2975
      %v2988 = vpack.c.b16 %v2978, %v2977
      %v2989 = vpack.c.b16 %v2980, %v2979
      %v2990 = vpack.c.b16 %v2982, %v2981
      %2999 = vmatprep.subr.bf16.mxu0 0
      %3000 = vmatpush1.bf16.msra.mxu0 %v2990
      %3001 = vmatprep.subr.bf16.mxu0 0
      %3002 = vmatpush1.bf16.msra.mxu0 %v2989
      %3003 = vmatprep.subr.bf16.mxu0 0
      %3004 = vmatpush1.bf16.msra.mxu0 %v2988
      %3005 = vmatprep.subr.bf16.mxu0 0
      %3006 = vmatpush1.bf16.msra.mxu0 %v2987
      %3007 = vmatprep.subr.bf16.mxu0 0
      %3008 = vmatpush1.bf16.msra.mxu0 %v2986
      %3009 = vmatprep.subr.bf16.mxu0 0
      %3010 = vmatpush1.bf16.msra.mxu0 %v2985
      %3011 = vmatprep.subr.bf16.mxu0 0
      %3012 = vmatpush1.bf16.msra.mxu0 %v2984
      %3013 = vmatprep.subr.bf16.mxu0 0
      %3014 = vmatpush1.bf16.msra.mxu0 %v2983
      %3015 = vmatprep.subr.bf16.mxu0 0
      %3016 = vmatpush2.bf16.msra.mxu0 0
      %3017 = vmatprep.subr.bf16.mxu0 0
      %3018 = vmatpush2.bf16.msra.mxu0 0
      %3019 = vmatprep.subr.bf16.mxu0 0
      %3020 = vmatpush2.bf16.msra.mxu0 0
      %3021 = vmatprep.subr.bf16.mxu0 0
      %3022 = vmatpush2.bf16.msra.mxu0 0
      %3023 = vmatprep.subr.bf16.mxu0 0
      %3024 = vmatpush2.bf16.msra.mxu0 0
      %3025 = vmatprep.subr.bf16.mxu0 0
      %3026 = vmatpush2.bf16.msra.mxu0 0
      %3027 = vmatprep.subr.bf16.mxu0 0
      %3028 = vmatpush2.bf16.msra.mxu0 0
      %3029 = vmatprep.subr.bf16.mxu0 0
      %3030 = vmatpush2.bf16.msra.mxu0 0
      %3031 = vmatprep.mubr.bf16.mxu0 0
      %3032 = vmatmul.mubr.bf16.gmra.mxu0 %v1332
      %v3033 = vpop.f32.mrf.mxu0
      %v3034 = vadd.f32 0.0, %v3033
      %v3035 = vpop.f32.mrf.mxu0
      %v3036 = vpop.f32.mrf.mxu0
      %v3037 = vadd.f32 0.0, %v3036
      %v3038 = vpop.f32.mrf.mxu0
      %3039 = vmatprep.mubr.bf16.mxu0 0
      %3040 = vmatmul.mubr.bf16.gmra.mxu0 %v1333
      %v3041 = vpop.f32.mrf.mxu0
      %v3042 = vadd.f32 0.0, %v3041
      %v3043 = vpop.f32.mrf.mxu0
      %v3044 = vpop.f32.mrf.mxu0
      %v3045 = vadd.f32 0.0, %v3044
      %v3046 = vpop.f32.mrf.mxu0
      %3047 = vmatprep.mubr.bf16.mxu0 0
      %3048 = vmatmul.mubr.bf16.gmra.mxu0 %v1334
      %v3049 = vpop.f32.mrf.mxu0
      %v3050 = vadd.f32 0.0, %v3049
      %v3051 = vpop.f32.mrf.mxu0
      %v3052 = vpop.f32.mrf.mxu0
      %v3053 = vadd.f32 0.0, %v3052
      %v3054 = vpop.f32.mrf.mxu0
      %3055 = vmatprep.mubr.bf16.mxu0 0
      %3056 = vmatmul.mubr.bf16.gmra.mxu0 %v1335
      %v3057 = vpop.f32.mrf.mxu0
      %v3058 = vadd.f32 0.0, %v3057
      %v3059 = vpop.f32.mrf.mxu0
      %v3060 = vpop.f32.mrf.mxu0
      %v3061 = vadd.f32 0.0, %v3060
      %v3062 = vpop.f32.mrf.mxu0
      %3063 = vmatprep.mubr.bf16.mxu0 0
      %3064 = vmatmul.mubr.bf16.gmra.mxu0 %v1336
      %v3065 = vpop.f32.mrf.mxu0
      %v3066 = vadd.f32 0.0, %v3065
      %v3067 = vpop.f32.mrf.mxu0
      %v3068 = vpop.f32.mrf.mxu0
      %v3069 = vadd.f32 0.0, %v3068
      %v3070 = vpop.f32.mrf.mxu0
      %3071 = vmatprep.mubr.bf16.mxu0 0
      %3072 = vmatmul.mubr.bf16.gmra.mxu0 %v1337
      %v3073 = vpop.f32.mrf.mxu0
      %v3074 = vadd.f32 0.0, %v3073
      %v3075 = vpop.f32.mrf.mxu0
      %v3076 = vpop.f32.mrf.mxu0
      %v3077 = vadd.f32 0.0, %v3076
      %v3078 = vpop.f32.mrf.mxu0
      %3079 = vmatprep.mubr.bf16.mxu0 0
      %3080 = vmatmul.mubr.bf16.gmra.mxu0 %v1338
      %v3081 = vpop.f32.mrf.mxu0
      %v3082 = vadd.f32 0.0, %v3081
      %v3083 = vpop.f32.mrf.mxu0
      %v3084 = vpop.f32.mrf.mxu0
      %v3085 = vadd.f32 0.0, %v3084
      %v3086 = vpop.f32.mrf.mxu0
      %3087 = vmatprep.mubr.bf16.mxu0 0
      %3088 = vmatmul.mubr.bf16.gmra.mxu0 %v1339
      %v3089 = vpop.f32.mrf.mxu0
      %v3090 = vadd.f32 0.0, %v3089
      %v3091 = vpop.f32.mrf.mxu0
      %v3092 = vpop.f32.mrf.mxu0
      %v3093 = vadd.f32 0.0, %v3092
      %v3094 = vpop.f32.mrf.mxu0
      %3095 = vmatprep.mubr.bf16.mxu0 0
      %3096 = vmatmul.mubr.bf16.gmra.mxu0 %v1340
      %v3097 = vpop.f32.mrf.mxu0
      %v3098 = vadd.f32 0.0, %v3097
      %v3099 = vpop.f32.mrf.mxu0
      %v3100 = vpop.f32.mrf.mxu0
      %v3101 = vadd.f32 0.0, %v3100
      %v3102 = vpop.f32.mrf.mxu0
      %3103 = vmatprep.mubr.bf16.mxu0 0
      %3104 = vmatmul.mubr.bf16.gmra.mxu0 %v1341
      %v3105 = vpop.f32.mrf.mxu0
      %v3106 = vadd.f32 0.0, %v3105
      %v3107 = vpop.f32.mrf.mxu0
      %v3108 = vpop.f32.mrf.mxu0
      %v3109 = vadd.f32 0.0, %v3108
      %v3110 = vpop.f32.mrf.mxu0
      %3111 = vmatprep.mubr.bf16.mxu0 0
      %3112 = vmatmul.mubr.bf16.gmra.mxu0 %v1342
      %v3113 = vpop.f32.mrf.mxu0
      %v3114 = vadd.f32 0.0, %v3113
      %v3115 = vpop.f32.mrf.mxu0
      %v3116 = vpop.f32.mrf.mxu0
      %v3117 = vadd.f32 0.0, %v3116
      %v3118 = vpop.f32.mrf.mxu0
      %3119 = vmatprep.mubr.bf16.mxu0 0
      %3120 = vmatmul.mubr.bf16.gmra.mxu0 %v1343
      %v3121 = vpop.f32.mrf.mxu0
      %v3122 = vadd.f32 0.0, %v3121
      %v3123 = vpop.f32.mrf.mxu0
      %v3124 = vpop.f32.mrf.mxu0
      %v3125 = vadd.f32 0.0, %v3124
      %v3126 = vpop.f32.mrf.mxu0
      %3127 = vmatprep.mubr.bf16.mxu0 0
      %3128 = vmatmul.mubr.bf16.gmra.mxu0 %v1344
      %v3129 = vpop.f32.mrf.mxu0
      %v3130 = vadd.f32 0.0, %v3129
      %v3131 = vpop.f32.mrf.mxu0
      %v3132 = vpop.f32.mrf.mxu0
      %v3133 = vadd.f32 0.0, %v3132
      %v3134 = vpop.f32.mrf.mxu0
      %3135 = vmatprep.mubr.bf16.mxu0 0
      %3136 = vmatmul.mubr.bf16.gmra.mxu0 %v1345
      %v3137 = vpop.f32.mrf.mxu0
      %v3138 = vadd.f32 0.0, %v3137
      %v3139 = vpop.f32.mrf.mxu0
      %v3140 = vpop.f32.mrf.mxu0
      %v3141 = vadd.f32 0.0, %v3140
      %v3142 = vpop.f32.mrf.mxu0
      %3143 = vmatprep.mubr.bf16.mxu0 0
      %3144 = vmatmul.mubr.bf16.gmra.mxu0 %v2139
      %v3145 = vpop.f32.mrf.mxu0
      %v3146 = vadd.f32 0.0, %v3145
      %v3147 = vpop.f32.mrf.mxu0
      %v3148 = vpop.f32.mrf.mxu0
      %v3149 = vadd.f32 0.0, %v3148
      %v3150 = vpop.f32.mrf.mxu0
      %3151 = vmatprep.mubr.bf16.mxu0 0
      %3152 = vmatmul.mubr.bf16.gmra.mxu0 %v2933
      %v3153 = vpop.f32.mrf.mxu0
      %v3154 = vadd.f32 0.0, %v3153
      %v3155 = vpop.f32.mrf.mxu0
      %v3156 = vpop.f32.mrf.mxu0
      %v3157 = vadd.f32 0.0, %v3156
      %v3158 = vpop.f32.mrf.mxu0
      %3159 = vdwg.mxu0
      %v3160 = vadd.f32 %v2894, %v3034
      %v3161 = vadd.f32 %v2895, %v3037
      %v3162 = vadd.f32 %v2896, %v3042
      %v3163 = vadd.f32 %v2897, %v3045
      %v3164 = vadd.f32 %v2898, %v3050
      %v3165 = vadd.f32 %v2899, %v3053
      %v3166 = vadd.f32 %v2900, %v3058
      %v3167 = vadd.f32 %v2901, %v3061
      %v3168 = vadd.f32 %v2902, %v3066
      %v3169 = vadd.f32 %v2903, %v3069
      %v3170 = vadd.f32 %v2904, %v3074
      %v3171 = vadd.f32 %v2905, %v3077
      %v3172 = vadd.f32 %v2906, %v3082
      %v3173 = vadd.f32 %v2907, %v3085
      %v3174 = vadd.f32 %v2908, %v3090
      %v3175 = vadd.f32 %v2909, %v3093
      %v3176 = vadd.f32 %v2910, %v3098
      %v3177 = vadd.f32 %v2911, %v3101
      %v3178 = vadd.f32 %v2912, %v3106
      %v3179 = vadd.f32 %v2913, %v3109
      %v3180 = vadd.f32 %v2914, %v3114
      %v3181 = vadd.f32 %v2915, %v3117
      %v3182 = vadd.f32 %v2916, %v3122
      %v3183 = vadd.f32 %v2917, %v3125
      %v3184 = vadd.f32 %v2918, %v3130
      %v3185 = vadd.f32 %v2919, %v3133
      %v3186 = vadd.f32 %v2920, %v3138
      %v3187 = vadd.f32 %v2921, %v3141
      %v3188 = vadd.f32 %v2922, %v3146
      %v3189 = vadd.f32 %v2923, %v3149
      %v3190 = vadd.f32 %v2924, %v3154
      %v3191 = vadd.f32 %v2925, %v3157
      %v3192 = vld [vmem:[%s3] sm:$0x1]
      %v3194 = vlaneseq
      %v3195 = vshrl.u32 %v3194, 7
      %v3196 = vsub.s32 0, %v3195
      %v3197 = vrot.slane %v3192, %v3196
      %v3199 = vmul.f32 %v3160, %v3197
      %v3200 = vmul.f32 %v3161, %v3197
      %v3201 = vmul.f32 %v3162, %v3197
      %v3202 = vmul.f32 %v3163, %v3197
      %v3203 = vmul.f32 %v3164, %v3197
      %v3204 = vmul.f32 %v3165, %v3197
      %v3205 = vmul.f32 %v3166, %v3197
      %v3206 = vmul.f32 %v3167, %v3197
      %v3207 = vmul.f32 %v3168, %v3197
      %v3208 = vmul.f32 %v3169, %v3197
      %v3209 = vmul.f32 %v3170, %v3197
      %v3210 = vmul.f32 %v3171, %v3197
      %v3211 = vmul.f32 %v3172, %v3197
      %v3212 = vmul.f32 %v3173, %v3197
      %v3213 = vmul.f32 %v3174, %v3197
      %v3214 = vmul.f32 %v3175, %v3197
      %v3215 = vmul.f32 %v3176, %v3197
      %v3216 = vmul.f32 %v3177, %v3197
      %v3217 = vmul.f32 %v3178, %v3197
      %v3218 = vmul.f32 %v3179, %v3197
      %v3219 = vmul.f32 %v3180, %v3197
      %v3220 = vmul.f32 %v3181, %v3197
      %v3221 = vmul.f32 %v3182, %v3197
      %v3222 = vmul.f32 %v3183, %v3197
      %v3223 = vmul.f32 %v3184, %v3197
      %v3224 = vmul.f32 %v3185, %v3197
      %v3225 = vmul.f32 %v3186, %v3197
      %v3226 = vmul.f32 %v3187, %v3197
      %v3227 = vmul.f32 %v3188, %v3197
      %v3228 = vmul.f32 %v3189, %v3197
      %v3229 = vmul.f32 %v3190, %v3197
      %v3230 = vmul.f32 %v3191, %v3197
      %v3231 = vld [vmem:[%s4] sm:$0x1]
      %v3233 = vlaneseq
      %v3234 = vshrl.u32 %v3233, 7
      %v3235 = vsub.s32 0, %v3234
      %v3236 = vrot.slane %v3231, %v3235
      %v3238 = vadd.f32 %v3199, %v3236
      %v3239 = vadd.f32 %v3200, %v3236
      %v3240 = vadd.f32 %v3201, %v3236
      %v3241 = vadd.f32 %v3202, %v3236
      %v3242 = vadd.f32 %v3203, %v3236
      %v3243 = vadd.f32 %v3204, %v3236
      %v3244 = vadd.f32 %v3205, %v3236
      %v3245 = vadd.f32 %v3206, %v3236
      %v3246 = vadd.f32 %v3207, %v3236
      %v3247 = vadd.f32 %v3208, %v3236
      %v3248 = vadd.f32 %v3209, %v3236
      %v3249 = vadd.f32 %v3210, %v3236
      %v3250 = vadd.f32 %v3211, %v3236
      %v3251 = vadd.f32 %v3212, %v3236
      %v3252 = vadd.f32 %v3213, %v3236
      %v3253 = vadd.f32 %v3214, %v3236
      %v3254 = vadd.f32 %v3215, %v3236
      %v3255 = vadd.f32 %v3216, %v3236
      %v3256 = vadd.f32 %v3217, %v3236
      %v3257 = vadd.f32 %v3218, %v3236
      %v3258 = vadd.f32 %v3219, %v3236
      %v3259 = vadd.f32 %v3220, %v3236
      %v3260 = vadd.f32 %v3221, %v3236
      %v3261 = vadd.f32 %v3222, %v3236
      %v3262 = vadd.f32 %v3223, %v3236
      %v3263 = vadd.f32 %v3224, %v3236
      %v3264 = vadd.f32 %v3225, %v3236
      %v3265 = vadd.f32 %v3226, %v3236
      %v3266 = vadd.f32 %v3227, %v3236
      %v3267 = vadd.f32 %v3228, %v3236
      %v3268 = vadd.f32 %v3229, %v3236
      %v3269 = vadd.f32 %v3230, %v3236
      %v3270 = vmax.f32 %v3238, 0.0
      %v3271 = vmax.f32 %v3239, 0.0
      %v3272 = vmax.f32 %v3240, 0.0
      %v3273 = vmax.f32 %v3241, 0.0
      %v3274 = vmax.f32 %v3242, 0.0
      %v3275 = vmax.f32 %v3243, 0.0
      %v3276 = vmax.f32 %v3244, 0.0
      %v3277 = vmax.f32 %v3245, 0.0
      %v3278 = vmax.f32 %v3246, 0.0
      %v3279 = vmax.f32 %v3247, 0.0
      %v3280 = vmax.f32 %v3248, 0.0
      %v3281 = vmax.f32 %v3249, 0.0
      %v3282 = vmax.f32 %v3250, 0.0
      %v3283 = vmax.f32 %v3251, 0.0
      %v3284 = vmax.f32 %v3252, 0.0
      %v3285 = vmax.f32 %v3253, 0.0
      %v3286 = vmax.f32 %v3254, 0.0
      %v3287 = vmax.f32 %v3255, 0.0
      %v3288 = vmax.f32 %v3256, 0.0
      %v3289 = vmax.f32 %v3257, 0.0
      %v3290 = vmax.f32 %v3258, 0.0
      %v3291 = vmax.f32 %v3259, 0.0
      %v3292 = vmax.f32 %v3260, 0.0
      %v3293 = vmax.f32 %v3261, 0.0
      %v3294 = vmax.f32 %v3262, 0.0
      %v3295 = vmax.f32 %v3263, 0.0
      %v3296 = vmax.f32 %v3264, 0.0
      %v3297 = vmax.f32 %v3265, 0.0
      %v3298 = vmax.f32 %v3266, 0.0
      %v3299 = vmax.f32 %v3267, 0.0
      %v3300 = vmax.f32 %v3268, 0.0
      %v3301 = vmax.f32 %v3269, 0.0
      %3302 = vst [vmem:[%s288] sm:$0xff] %v3270
      %3303 = vst [vmem:[%s288 + $0x8] sm:$0xff] %v3271
      %3304 = vst [vmem:[%s288 + $0x10] sm:$0xff] %v3272
      %3305 = vst [vmem:[%s288 + $0x18] sm:$0xff] %v3273
      %3306 = vst [vmem:[%s288 + $0x20] sm:$0xff] %v3274
      %3307 = vst [vmem:[%s288 + $0x28] sm:$0xff] %v3275
      %3308 = vst [vmem:[%s288 + $0x30] sm:$0xff] %v3276
      %3309 = vst [vmem:[%s288 + $0x38] sm:$0xff] %v3277
      %3310 = vst [vmem:[%s288 + $0x40] sm:$0xff] %v3278
      %3311 = vst [vmem:[%s288 + $0x48] sm:$0xff] %v3279
      %3312 = vst [vmem:[%s288 + $0x50] sm:$0xff] %v3280
      %3313 = vst [vmem:[%s288 + $0x58] sm:$0xff] %v3281
      %3314 = vst [vmem:[%s288 + $0x60] sm:$0xff] %v3282
      %3315 = vst [vmem:[%s288 + $0x68] sm:$0xff] %v3283
      %3316 = vst [vmem:[%s288 + $0x70] sm:$0xff] %v3284
      %3317 = vst [vmem:[%s288 + $0x78] sm:$0xff] %v3285
      %3318 = vst [vmem:[%s288 + $0x80] sm:$0xff] %v3286
      %3319 = vst [vmem:[%s288 + $0x88] sm:$0xff] %v3287
      %3320 = vst [vmem:[%s288 + $0x90] sm:$0xff] %v3288
      %3321 = vst [vmem:[%s288 + $0x98] sm:$0xff] %v3289
      %3322 = vst [vmem:[%s288 + $0xa0] sm:$0xff] %v3290
      %3323 = vst [vmem:[%s288 + $0xa8] sm:$0xff] %v3291
      %3324 = vst [vmem:[%s288 + $0xb0] sm:$0xff] %v3292
      %3325 = vst [vmem:[%s288 + $0xb8] sm:$0xff] %v3293
      %3326 = vst [vmem:[%s288 + $0xc0] sm:$0xff] %v3294
      %3327 = vst [vmem:[%s288 + $0xc8] sm:$0xff] %v3295
      %3328 = vst [vmem:[%s288 + $0xd0] sm:$0xff] %v3296
      %3329 = vst [vmem:[%s288 + $0xd8] sm:$0xff] %v3297
      %3330 = vst [vmem:[%s288 + $0xe0] sm:$0xff] %v3298
      %3331 = vst [vmem:[%s288 + $0xe8] sm:$0xff] %v3299
      %3332 = vst [vmem:[%s288 + $0xf0] sm:$0xff] %v3300
      %3333 = vst [vmem:[%s288 + $0xf8] sm:$0xff] %v3301
      %v3334 = vmax.f32 %v3270, %v3274
      %v3335 = vmax.f32 %v3271, %v3275
      %v3336 = vmax.f32 %v3272, %v3276
      %v3337 = vmax.f32 %v3273, %v3277
      %v3338 = vmax.f32 %v3334, %v3278
      %v3339 = vmax.f32 %v3335, %v3279
      %v3340 = vmax.f32 %v3336, %v3280
      %v3341 = vmax.f32 %v3337, %v3281
      %v3342 = vmax.f32 %v3338, %v3282
      %v3343 = vmax.f32 %v3339, %v3283
      %v3344 = vmax.f32 %v3340, %v3284
      %v3345 = vmax.f32 %v3341, %v3285
      %v3346 = vmax.f32 %v3342, %v3286
      %v3347 = vmax.f32 %v3343, %v3287
      %v3348 = vmax.f32 %v3344, %v3288
      %v3349 = vmax.f32 %v3345, %v3289
      %v3350 = vmax.f32 %v3346, %v3290
      %v3351 = vmax.f32 %v3347, %v3291
      %v3352 = vmax.f32 %v3348, %v3292
      %v3353 = vmax.f32 %v3349, %v3293
      %v3354 = vmax.f32 %v3350, %v3294
      %v3355 = vmax.f32 %v3351, %v3295
      %v3356 = vmax.f32 %v3352, %v3296
      %v3357 = vmax.f32 %v3353, %v3297
      %v3358 = vmax.f32 %v3354, %v3298
      %v3359 = vmax.f32 %v3355, %v3299
      %v3360 = vmax.f32 %v3356, %v3300
      %v3361 = vmax.f32 %v3357, %v3301
      %v3362 = vmax.f32 %v3358, %v3359
      %v3363 = vmax.f32 %v3360, %v3361
      %v3364 = vmax.f32 %v3362, %v3363
      %v3365 = vrot.slane %v3364, 4
      %v3366 = vmax.f32 %v3364, %v3365
      %v3367 = vrot.slane %v3366, 2
      %v3368 = vmax.f32 %v3366, %v3367
      %v3369 = vrot.slane %v3368, 1
      %v3370 = vmax.f32 %v3368, %v3369
      %3371 = vst [vmem:[%s296] sm:$0xff] %v3370
      %s3372 = smul.u32 16, %s24
      %p3373 = scmp.lt.s32.totalorder %s23, 1
      %s3374 = scalar_select %p3373, %s23, 1
      %p3375 = scmp.lt.s32.totalorder %s3372, 15
      %s3376 = scalar_select %p3375, %s3372, 15
      %s3377 = smul.addr %s3376, 2
      %s3378 = smul.addr %s3374, 32
      %s3379 = sadd.s32 %s3377, %s3378
      %s3380 = smul.addr %s3379, 8
      %s3381 = scalar_lea.vmem %s5, %s3380
      %p3382 = scmp.lt.s32.totalorder %s23, 1
      %s3383 = scalar_select %p3382, %s23, 1
      %p3384 = scmp.lt.s32.totalorder %s24, 0
      %s3385 = scalar_select %p3384, %s24, 0
      %s3386 = sadd.s32 %s3385, %s3383
      %s3387 = smul.addr %s3386, 8
      %s3388 = scalar_lea.vmem %s6, %s3387
      // Predicated region
      $region41: #{q_conv_seq_branch.4} parent=39 // pred_check
        %p3389 = pneg %p161
      $region42: #{q_conv_seq_branch.4} parent=39 // pred_check_branch
        %3391 = sbr.rel (%p3389) target = $region44
      $region43: #{q_conv_seq_branch.4} parent=39 // pred_region
        %s3392 = smul.u32 16, %s24
      $region44: #{q_conv_seq_branch.4} parent=39 // pred_fallthru
        _
      // Predicated region
      $region45: #{q_conv_seq_branch.4} parent=39 // pred_check
        %p3393 = pneg %p189
      $region46: #{q_conv_seq_branch.4} parent=39 // pred_check_branch
        %3395 = sbr.rel (%p3393) target = $region48
      $region47: #{q_conv_seq_branch.4} parent=39 // pred_region
        _
      $region48: #{q_conv_seq_branch.4} parent=39 // pred_fallthru
        _
    $region40: #{q_conv_seq_branch.4} parent=5 // pred_fallthru
      _
    %p3396 = scmp.le.s32.totalorder 2, %s14
    // Predicated region
    $region49: #{q_conv_seq_branch.4} parent=5 // pred_check
      %p3397 = pneg %p3396
    $region50: #{q_conv_seq_branch.4} parent=5 // pred_check_branch
      %3399 = sbr.rel (%p3397) target = $region52
    $region51: #{q_conv_seq_branch.4} parent=5 // pred_region
      %s3400 = ssub.s32 %s14, 2
      // Predicated region
      $region53: #{q_conv_seq_branch.4} parent=51 // pred_check
        %p3401 = pneg %p167
      $region54: #{q_conv_seq_branch.4} parent=51 // pred_check_branch
        %3403 = sbr.rel (%p3401) target = $region56
      $region55: #{q_conv_seq_branch.4} parent=51 // pred_region
        %s3404 = smul.u32 16, %s26
        %p3405 = scmp.lt.s32.totalorder %s25, 1
        %s3406 = scalar_select %p3405, %s25, 1
        %p3407 = scmp.lt.s32.totalorder %s3404, 15
        %s3408 = scalar_select %p3407, %s3404, 15
        %s3409 = smul.addr %s3408, 2
        %s3410 = smul.addr %s3406, 32
        %s3411 = sadd.s32 %s3409, %s3410
        %s3412 = smul.addr %s3411, 8
        %s3413 = scalar_lea.vmem %s5, %s3412
      $region56: #{q_conv_seq_branch.4} parent=51 // pred_fallthru
        _
      // Predicated region
      $region57: #{q_conv_seq_branch.4} parent=51 // pred_check
        %p3414 = pneg %p195
      $region58: #{q_conv_seq_branch.4} parent=51 // pred_check_branch
        %3416 = sbr.rel (%p3414) target = $region60
      $region59: #{q_conv_seq_branch.4} parent=51 // pred_region
        %p3417 = scmp.lt.s32.totalorder %s25, 1
        %s3418 = scalar_select %p3417, %s25, 1
        %p3419 = scmp.lt.s32.totalorder %s26, 0
        %s3420 = scalar_select %p3419, %s26, 0
        %s3421 = sadd.s32 %s3420, %s3418
        %s3422 = smul.addr %s3421, 8
        %s3423 = scalar_lea.vmem %s6, %s3422
      $region60: #{q_conv_seq_branch.4} parent=51 // pred_fallthru
        _
    $region52: #{q_conv_seq_branch.4} parent=5 // pred_fallthru
      _
  $region6: #{q_conv_seq_branch.4} parent=0 // loop_footer
    %s18 = sadd.s32 1, %s14
  $region7: #{q_conv_seq_branch.4} parent=0 // loop_footer_branch
    %13 = sbr.rel target = $region3
  $region8: #{q_conv_seq_branch.4} parent=0 // loop_exit
    _

</llo_original>
